<compile_context>
chip_gen: v6e
topology: v6e:2x2x1
jax: 0.10.0
libtpu: 0.0.40
codegen_flags: <defaults>
</compile_context>

<pallas_src>
import functools

import jax
import jax.numpy as jnp
from jax import lax
from jax.experimental import pallas as pl
from jax.experimental.pallas import tpu as pltpu

_NEG_BIG = -1e30  # additive mask / pad value (exp underflows to exactly 0, no NaN/Inf)


# ----------------------------------------------------------------------------- math helpers
def _layernorm(x, g, b, eps=1e-5):
    mu = jnp.mean(x, axis=-1, keepdims=True)
    var = jnp.mean(jnp.square(x - mu), axis=-1, keepdims=True)
    return (x - mu) * lax.rsqrt(var + eps) * g + b


def _softmax_rows_approx(x):
    # attention-internal softmax: approximate reciprocal (EUP vrcp) is fine here
    x = x - jnp.max(x, axis=-1, keepdims=True)
    e = jnp.exp(x)
    return e * pl.reciprocal(jnp.sum(e, axis=-1, keepdims=True), approx=True)


def _gelu_tanh(x):
    # tanh-approx GELU -> EUP tanh (single transcendental) instead of a VALU erf polynomial
    c = 0.7978845608028654  # sqrt(2/pi)
    return 0.5 * x * (1.0 + jnp.tanh(c * (x + 0.044715 * x * x * x)))


def rotary_cos_sin(n, d_head):
    inv_freq = 1.0 / (10000.0 ** (jnp.arange(0, d_head, 2, dtype=jnp.float32) / d_head))
    t = jnp.arange(n, dtype=jnp.float32)
    freqs = jnp.einsum("i,j->ij", t, inv_freq)
    emb = jnp.concatenate([freqs, freqs], axis=-1)  # (n, d_head)
    return jnp.cos(emb), jnp.sin(emb)


# ----------------------------------------------------------------------------- fused kernel
def _make_kernel(num_layers, heads, dim, bn, scale):
    def kernel(x_ref, cos_ref, sin_ref, rot_ref, hmr_ref, bias_ref,
               emb_w_ref, emb_b_ref,
               ln1_g_ref, ln1_b_ref, wqkv_ref, wo_ref, bo_ref,
               ln2_g_ref, ln2_b_ref, w1_ref, b1_ref, w2_ref, b2_ref,
               lnf_g_ref, lnf_b_ref, wl_ref, bl_ref,
               logits_ref, probs_ref):
        # ---- token embedding: Linear(1, dim) as a VPU broadcast MAD ----
        h = x_ref[...].astype(jnp.float32) * emb_w_ref[...] + emb_b_ref[...]   # (bn, dim)
        cosf = cos_ref[...]                                                     # (bn, dim)
        sinf = sin_ref[...]
        hmr = hmr_ref[...]                                                      # (H*bn, dim)
        bias = bias_ref[...]                                                    # (H*bn, bn)

        for li in range(num_layers):
            # ---- PreNorm + multi-head attention + residual ----
            y = _layernorm(h, ln1_g_ref[li], ln1_b_ref[li])                     # (bn, dim)
            qkv = jnp.dot(y, wqkv_ref[li], preferred_element_type=jnp.float32)  # (bn, 2*dim)
            q = qkv[:, :dim] * scale
            kv = qkv[:, dim:]
            if li == 0:  # rotary on layer 0 only; rotate_half via block-diagonal matmul
                rot = rot_ref[...]
                q = q * cosf + jnp.dot(q, rot, preferred_element_type=jnp.float32) * sinf
                kv = kv * cosf + jnp.dot(kv, rot, preferred_element_type=jnp.float32) * sinf

            # head-stacked 2-D attention: rows grouped by head, columns masked per head
            qh = jnp.concatenate([q] * heads, axis=0) * hmr                     # (H*bn, dim)
            s = lax.dot_general(qh, kv, (((1,), (1,)), ((), ())),
                                preferred_element_type=jnp.float32) + bias      # (H*bn, bn)
            p = _softmax_rows_approx(s)
            o2 = jnp.dot(p, kv, preferred_element_type=jnp.float32)             # (H*bn, dim)
            # recombine heads: sublane-aligned slices + disjoint 0/1 column masks
            o = o2[0:bn, :] * hmr[0:bn, :]
            for hh in range(1, heads):
                sl = slice(hh * bn, (hh + 1) * bn)
                o = o + o2[sl, :] * hmr[sl, :]
            h = jnp.dot(o, wo_ref[li], preferred_element_type=jnp.float32) + bo_ref[li] + h

            # ---- PreNorm + FeedForward + residual ----
            y = _layernorm(h, ln2_g_ref[li], ln2_b_ref[li])
            f = jnp.dot(y, w1_ref[li], preferred_element_type=jnp.float32) + b1_ref[li]
            f = _gelu_tanh(f)
            h = jnp.dot(f, w2_ref[li], preferred_element_type=jnp.float32) + b2_ref[li] + h

        # ---- to_logits (LayerNorm + Linear, padded to 128 lanes) and final softmax ----
        y = _layernorm(h, lnf_g_ref[...], lnf_b_ref[...])
        logits = jnp.dot(y, wl_ref[...], preferred_element_type=jnp.float32) + bl_ref[...]
        logits_ref[...] = logits.astype(logits_ref.dtype)
        # exact divide for the RETURNED probabilities (padded columns are exactly 0)
        e = jnp.exp(logits - jnp.max(logits, axis=-1, keepdims=True))
        probs_ref[...] = (e / jnp.sum(e, axis=-1, keepdims=True)).astype(probs_ref.dtype)

    return kernel


def _const_spec(shape):
    nd = len(shape)
    return pl.BlockSpec(shape, lambda i, _nd=nd: (0,) * _nd)


# ----------------------------------------------------------------------------- wrapper
def simple_transformer_forward(x, params, *, heads, batch_block=None):
    """x: (batch, seq, 1) -> (logits, probs), each (batch, seq, num_tokens)."""
    b, n, _ = x.shape
    dim = params["emb_w"].shape[-1]
    d_head = dim // heads
    scale = d_head ** -0.5
    num_tokens = params["wl"].shape[-1]
    num_layers = params["wqkv"].shape[0]
    ff_dim = params["w1"].shape[-1]

    bb = b if batch_block is None else batch_block   # batch rows folded per grid step
    assert b % bb == 0
    bn = bb * n
    nblk = b // bb

    # ---- constant tables (shape-only, tiny) ----
    cos, sin = rotary_cos_sin(n, d_head)
    cos_f = jnp.tile(cos, (bb, heads))               # (bn, dim), per-head / per-batch tiled
    sin_f = jnp.tile(sin, (bb, heads))

    half = d_head // 2                               # rotate_half as block-diag matrix
    r = jnp.zeros((d_head, d_head), jnp.float32)
    r = r.at[half:, :half].set(-jnp.eye(half, dtype=jnp.float32))
    r = r.at[:half, half:].set(jnp.eye(half, dtype=jnp.float32))
    rot = jnp.kron(jnp.eye(heads, dtype=jnp.float32), r)            # (dim, dim)

    col_head = jnp.arange(dim) // d_head                             # per-head column masks
    hm = (col_head[None, :] == jnp.arange(heads)[:, None]).astype(jnp.float32)   # (H, dim)
    hmr = jnp.repeat(hm, bn, axis=0)                                  # (H*bn, dim)

    row_b = jnp.arange(bn) // n                                       # cross-batch attn bias
    same = row_b[:, None] == row_b[None, :]
    bias_blk = jnp.where(same, 0.0, _NEG_BIG).astype(jnp.float32)     # (bn, bn)
    attn_bias = jnp.tile(bias_blk, (heads, 1))                        # (H*bn, bn)

    # ---- lane-dense logits: pad num_tokens up to a multiple of 128 ----
    nt_pad = ((num_tokens + 127) // 128) * 128
    pad = nt_pad - num_tokens
    wl, bl = params["wl"], params["bl"]
    if pad:
        wl = jnp.concatenate([wl, jnp.zeros((dim, pad), wl.dtype)], axis=1)
        bl = jnp.concatenate([bl, jnp.full((1, pad), _NEG_BIG, bl.dtype)], axis=1)

    x2 = x.reshape(b * n, 1)

    in_specs = [
        pl.BlockSpec((bn, 1), lambda i: (i, 0)),       # x (folded batch block)
        _const_spec((bn, dim)),                        # cos_f
        _const_spec((bn, dim)),                        # sin_f
        _const_spec((dim, dim)),                       # rotate_half matrix
        _const_spec((heads * bn, dim)),                # per-head column masks
        _const_spec((heads * bn, bn)),                 # cross-batch attention bias
        _const_spec((1, dim)), _const_spec((1, dim)),  # emb_w, emb_b
        _const_spec((num_layers, 1, dim)), _const_spec((num_layers, 1, dim)),     # ln1
        _const_spec((num_layers, dim, 2 * dim)),                                  # wqkv
        _const_spec((num_layers, dim, dim)), _const_spec((num_layers, 1, dim)),   # wo, bo
        _const_spec((num_layers, 1, dim)), _const_spec((num_layers, 1, dim)),     # ln2
        _const_spec((num_layers, dim, ff_dim)), _const_spec((num_layers, 1, ff_dim)),  # w1,b1
        _const_spec((num_layers, ff_dim, dim)), _const_spec((num_layers, 1, dim)),     # w2,b2
        _const_spec((1, dim)), _const_spec((1, dim)),  # lnf_g, lnf_b
        _const_spec((dim, nt_pad)), _const_spec((1, nt_pad)),                     # wl, bl
    ]
    out_specs = (
        pl.BlockSpec((bn, nt_pad), lambda i: (i, 0)),
        pl.BlockSpec((bn, nt_pad), lambda i: (i, 0)),
    )
    out_shape = (
        jax.ShapeDtypeStruct((b * n, nt_pad), x.dtype),
        jax.ShapeDtypeStruct((b * n, nt_pad), x.dtype),
    )

    kernel = _make_kernel(num_layers, heads, dim, bn, scale)
    logits_pad, probs_pad = pl.pallas_call(
        kernel,
        out_shape=out_shape,
        grid=(nblk,),
        in_specs=in_specs,
        out_specs=out_specs,
        compiler_params=pltpu.CompilerParams(dimension_semantics=("parallel",)),
    )(x2, cos_f, sin_f, rot, hmr, attn_bias,
      params["emb_w"], params["emb_b"],
      params["ln1_g"], params["ln1_b"], params["wqkv"], params["wo"], params["bo"],
      params["ln2_g"], params["ln2_b"], params["w1"], params["b1"], params["w2"], params["b2"],
      params["lnf_g"], params["lnf_b"], wl, bl)

    logits = logits_pad[:, :num_tokens].reshape(b, n, num_tokens)
    probs = probs_pad[:, :num_tokens].reshape(b, n, num_tokens)
    return logits, probs


# ----------------------------------------------------------------------------- params
def init_params(key, *, num_tokens, dim, num_layers, heads, ff_mult=4):
    def lin(k, fan_in, fan_out):
        kw, kb = jax.random.split(k)
        w = jax.random.normal(kw, (fan_in, fan_out), jnp.float32) * 0.02
        b = jax.random.normal(kb, (fan_out,), jnp.float32) * 0.02
        return w, b

    keys = jax.random.split(key, 2 + num_layers)
    emb_w, emb_b = lin(keys[0], 1, dim)

    wqkv, wo, bo, w1, b1, w2, b2 = [], [], [], [], [], [], []
    for i in range(num_layers):
        lk = jax.random.split(keys[1 + i], 5)
        wq, _ = lin(lk[0], dim, dim)          # to_q (no bias)
        wkv_i, _ = lin(lk[1], dim, dim)       # to_kv (no bias)
        wo_i, bo_i = lin(lk[2], dim, dim)     # to_out_0
        w1_i, b1_i = lin(lk[3], dim, dim * ff_mult)
        w2_i, b2_i = lin(lk[4], dim * ff_mult, dim)
        wqkv.append(jnp.concatenate([wq, wkv_i], axis=1))
        wo.append(wo_i)
        bo.append(bo_i.reshape(1, dim))
        w1.append(w1_i)
        b1.append(b1_i.reshape(1, dim * ff_mult))
        w2.append(w2_i)
        b2.append(b2_i.reshape(1, dim))
    wl, bl = lin(keys[1 + num_layers], dim, num_tokens)

    return dict(
        emb_w=emb_w.reshape(1, dim), emb_b=emb_b.reshape(1, dim),
        ln1_g=jnp.ones((num_layers, 1, dim), jnp.float32),
        ln1_b=jnp.zeros((num_layers, 1, dim), jnp.float32),
        wqkv=jnp.stack(wqkv), wo=jnp.stack(wo), bo=jnp.stack(bo),
        ln2_g=jnp.ones((num_layers, 1, dim), jnp.float32),
        ln2_b=jnp.zeros((num_layers, 1, dim), jnp.float32),
        w1=jnp.stack(w1), b1=jnp.stack(b1), w2=jnp.stack(w2), b2=jnp.stack(b2),
        lnf_g=jnp.ones((1, dim), jnp.float32), lnf_b=jnp.zeros((1, dim), jnp.float32),
        wl=wl, bl=bl.reshape(1, num_tokens),
    )


# ----------------------------------------------------------------------------- pure-JAX reference
def reference_forward(x, params, *, heads):
    b, n, _ = x.shape
    dim = params["emb_w"].shape[-1]
    d_head = dim // heads
    scale = d_head ** -0.5
    cos, sin = rotary_cos_sin(n, d_head)

    def layernorm(v, g, bb):
        mu = v.mean(-1, keepdims=True)
        var = ((v - mu) ** 2).mean(-1, keepdims=True)
        return (v - mu) / jnp.sqrt(var + 1e-5) * g + bb

    h = x.reshape(b * n, 1) @ params["emb_w"] + params["emb_b"]
    for li in range(params["wqkv"].shape[0]):
        y = layernorm(h, params["ln1_g"][li], params["ln1_b"][li])
        qkv = y @ params["wqkv"][li]
        q, kv = qkv[:, :dim], qkv[:, dim:]
        q4 = q.reshape(b, n, heads, d_head).transpose(0, 2, 1, 3)
        kv4 = kv.reshape(b, n, heads, d_head).transpose(0, 2, 1, 3)
        if li == 0:
            def rot(t):
                x1, x2 = t[..., : d_head // 2], t[..., d_head // 2:]
                return t * cos + jnp.concatenate([-x2, x1], axis=-1) * sin
            q4, kv4 = rot(q4), rot(kv4)
        att = jnp.einsum("bhid,bhjd->bhij", q4 * scale, kv4)
        p = jax.nn.softmax(att, axis=-1)
        o = jnp.einsum("bhij,bhjd->bhid", p, kv4)
        o = o.transpose(0, 2, 1, 3).reshape(b * n, dim)
        h = o @ params["wo"][li] + params["bo"][li] + h
        y = layernorm(h, params["ln2_g"][li], params["ln2_b"][li])
        f = jax.nn.gelu(y @ params["w1"][li] + params["b1"][li], approximate=False)
        h = f @ params["w2"][li] + params["b2"][li] + h
    y = layernorm(h, params["lnf_g"], params["lnf_b"])
    logits = y @ params["wl"] + params["bl"]
    probs = jax.nn.softmax(logits, axis=-1)
    nt = logits.shape[-1]
    return logits.reshape(b, n, nt), probs.reshape(b, n, nt)


# ----------------------------------------------------------------------------- main
if __name__ == "__main__":
    BATCH, SEQ, DIM, HEADS, LAYERS, NUM_TOKENS = 2, 8, 32, 8, 2, 16

    key = jax.random.PRNGKey(0)
    kx, kp = jax.random.split(key)
    x = jax.random.normal(kx, (BATCH, SEQ, 1), jnp.float32)
    params = init_params(kp, num_tokens=NUM_TOKENS, dim=DIM,
                         num_layers=LAYERS, heads=HEADS)

    fwd = jax.jit(functools.partial(simple_transformer_forward, heads=HEADS))
    logits, probs = fwd(x, params)
    jax.block_until_ready((logits, probs))

    assert logits.shape == (BATCH, SEQ, NUM_TOKENS)
    assert probs.shape == (BATCH, SEQ, NUM_TOKENS)
    assert bool(jnp.all(jnp.isfinite(logits))) and bool(jnp.all(jnp.isfinite(probs)))
    # returned softmax uses an exact divide -> rows sum to 1 within f32 rounding
    assert bool(jnp.max(jnp.abs(probs.sum(-1) - 1.0)) < 1e-5)

    # Correctness vs. a pure-JAX reference (remaining deviations: approx reciprocal in the
    # attention softmax, tanh-approx GELU).
    ref_logits, ref_probs = reference_forward(x, params, heads=HEADS)
    rel_l = float(jnp.max(jnp.abs(logits - ref_logits)) / (jnp.max(jnp.abs(ref_logits)) + 1e-8))
    rel_p = float(jnp.max(jnp.abs(probs - ref_probs)) / (jnp.max(jnp.abs(ref_probs)) + 1e-8))
    assert rel_l < 2e-2 and rel_p < 2e-2, (rel_l, rel_p)

    print("KERNEL_OK")
</pallas_src>

<mosaic_0001>
module attributes {stable_mosaic.version = 11 : i64} {
  func.func @kernel(%arg0: i32, %arg1: memref<16x1xf32, #tpu.memory_space<vmem>>, %arg2: memref<16x32xf32, #tpu.memory_space<vmem>>, %arg3: memref<16x32xf32, #tpu.memory_space<vmem>>, %arg4: memref<32x32xf32, #tpu.memory_space<vmem>>, %arg5: memref<128x32xf32, #tpu.memory_space<vmem>>, %arg6: memref<128x16xf32, #tpu.memory_space<vmem>>, %arg7: memref<1x32xf32, #tpu.memory_space<vmem>>, %arg8: memref<1x32xf32, #tpu.memory_space<vmem>>, %arg9: memref<2x1x32xf32, #tpu.memory_space<vmem>>, %arg10: memref<2x1x32xf32, #tpu.memory_space<vmem>>, %arg11: memref<2x32x64xf32, #tpu.memory_space<vmem>>, %arg12: memref<2x32x32xf32, #tpu.memory_space<vmem>>, %arg13: memref<2x1x32xf32, #tpu.memory_space<vmem>>, %arg14: memref<2x1x32xf32, #tpu.memory_space<vmem>>, %arg15: memref<2x1x32xf32, #tpu.memory_space<vmem>>, %arg16: memref<2x32x128xf32, #tpu.memory_space<vmem>>, %arg17: memref<2x1x128xf32, #tpu.memory_space<vmem>>, %arg18: memref<2x128x32xf32, #tpu.memory_space<vmem>>, %arg19: memref<2x1x32xf32, #tpu.memory_space<vmem>>, %arg20: memref<1x32xf32, #tpu.memory_space<vmem>>, %arg21: memref<1x32xf32, #tpu.memory_space<vmem>>, %arg22: memref<32x128xf32, #tpu.memory_space<vmem>>, %arg23: memref<1x128xf32, #tpu.memory_space<vmem>>, %arg24: memref<16x128xf32, #tpu.memory_space<vmem>>, %arg25: memref<16x128xf32, #tpu.memory_space<vmem>>) attributes {dimension_semantics = [#tpu.dimension_semantics<parallel>], iteration_bounds = array<i64: 1>, scalar_prefetch = 0 : i64, scratch_operands = 0 : i64, tpu.core_type = #tpu.core_type<tc>, window_params = [{transform_indices = @transform_0, window_bounds = array<i64: 16, 1>}, {pipeline_mode = #tpu.pipeline_mode<synchronous>, transform_indices = @transform_1, window_bounds = array<i64: 16, 32>}, {pipeline_mode = #tpu.pipeline_mode<synchronous>, transform_indices = @transform_2, window_bounds = array<i64: 16, 32>}, {pipeline_mode = #tpu.pipeline_mode<synchronous>, transform_indices = @transform_3, window_bounds = array<i64: 32, 32>}, {pipeline_mode = #tpu.pipeline_mode<synchronous>, transform_indices = @transform_4, window_bounds = array<i64: 128, 32>}, {pipeline_mode = #tpu.pipeline_mode<synchronous>, transform_indices = @transform_5, window_bounds = array<i64: 128, 16>}, {pipeline_mode = #tpu.pipeline_mode<synchronous>, transform_indices = @transform_6, window_bounds = array<i64: 1, 32>}, {pipeline_mode = #tpu.pipeline_mode<synchronous>, transform_indices = @transform_7, window_bounds = array<i64: 1, 32>}, {pipeline_mode = #tpu.pipeline_mode<synchronous>, transform_indices = @transform_8, window_bounds = array<i64: 2, 1, 32>}, {pipeline_mode = #tpu.pipeline_mode<synchronous>, transform_indices = @transform_9, window_bounds = array<i64: 2, 1, 32>}, {pipeline_mode = #tpu.pipeline_mode<synchronous>, transform_indices = @transform_10, window_bounds = array<i64: 2, 32, 64>}, {pipeline_mode = #tpu.pipeline_mode<synchronous>, transform_indices = @transform_11, window_bounds = array<i64: 2, 32, 32>}, {pipeline_mode = #tpu.pipeline_mode<synchronous>, transform_indices = @transform_12, window_bounds = array<i64: 2, 1, 32>}, {pipeline_mode = #tpu.pipeline_mode<synchronous>, transform_indices = @transform_13, window_bounds = array<i64: 2, 1, 32>}, {pipeline_mode = #tpu.pipeline_mode<synchronous>, transform_indices = @transform_14, window_bounds = array<i64: 2, 1, 32>}, {pipeline_mode = #tpu.pipeline_mode<synchronous>, transform_indices = @transform_15, window_bounds = array<i64: 2, 32, 128>}, {pipeline_mode = #tpu.pipeline_mode<synchronous>, transform_indices = @transform_16, window_bounds = array<i64: 2, 1, 128>}, {pipeline_mode = #tpu.pipeline_mode<synchronous>, transform_indices = @transform_17, window_bounds = array<i64: 2, 128, 32>}, {pipeline_mode = #tpu.pipeline_mode<synchronous>, transform_indices = @transform_18, window_bounds = array<i64: 2, 1, 32>}, {pipeline_mode = #tpu.pipeline_mode<synchronous>, transform_indices = @transform_19, window_bounds = array<i64: 1, 32>}, {pipeline_mode = #tpu.pipeline_mode<synchronous>, transform_indices = @transform_20, window_bounds = array<i64: 1, 32>}, {pipeline_mode = #tpu.pipeline_mode<synchronous>, transform_indices = @transform_21, window_bounds = array<i64: 32, 128>}, {pipeline_mode = #tpu.pipeline_mode<synchronous>, transform_indices = @transform_22, window_bounds = array<i64: 1, 128>}, {transform_indices = @transform_23, window_bounds = array<i64: 16, 128>}, {transform_indices = @transform_24, window_bounds = array<i64: 16, 128>}]} {
    %c0 = arith.constant 0 : index
    %c0_0 = arith.constant 0 : index
    %0 = vector.load %arg1[%c0, %c0_0] : memref<16x1xf32, #tpu.memory_space<vmem>>, vector<16x1xf32>
    %c0_1 = arith.constant 0 : index
    %c0_2 = arith.constant 0 : index
    %1 = vector.load %arg7[%c0_1, %c0_2] : memref<1x32xf32, #tpu.memory_space<vmem>>, vector<1x32xf32>
    %2 = vector.broadcast %0 : vector<16x1xf32> to vector<16x32xf32>
    %3 = vector.broadcast %1 : vector<1x32xf32> to vector<16x32xf32>
    %4 = arith.mulf %2, %3 : vector<16x32xf32>
    %c0_3 = arith.constant 0 : index
    %c0_4 = arith.constant 0 : index
    %5 = vector.load %arg8[%c0_3, %c0_4] : memref<1x32xf32, #tpu.memory_space<vmem>>, vector<1x32xf32>
    %6 = vector.broadcast %5 : vector<1x32xf32> to vector<16x32xf32>
    %7 = arith.addf %4, %6 : vector<16x32xf32>
    %c0_5 = arith.constant 0 : index
    %c0_6 = arith.constant 0 : index
    %8 = vector.load %arg2[%c0_5, %c0_6] : memref<16x32xf32, #tpu.memory_space<vmem>>, vector<16x32xf32>
    %c0_7 = arith.constant 0 : index
    %c0_8 = arith.constant 0 : index
    %9 = vector.load %arg3[%c0_7, %c0_8] : memref<16x32xf32, #tpu.memory_space<vmem>>, vector<16x32xf32>
    %c0_9 = arith.constant 0 : index
    %c0_10 = arith.constant 0 : index
    %10 = vector.load %arg5[%c0_9, %c0_10] : memref<128x32xf32, #tpu.memory_space<vmem>>, vector<128x32xf32>
    %c0_11 = arith.constant 0 : index
    %c0_12 = arith.constant 0 : index
    %11 = vector.load %arg6[%c0_11, %c0_12] : memref<128x16xf32, #tpu.memory_space<vmem>>, vector<128x16xf32>
    %c0_13 = arith.constant 0 : index
    %c0_14 = arith.constant 0 : index
    %c0_15 = arith.constant 0 : index
    %12 = vector.load %arg9[%c0_13, %c0_14, %c0_15] : memref<2x1x32xf32, #tpu.memory_space<vmem>>, vector<1x1x32xf32>
    %13 = vector.shape_cast %12 : vector<1x1x32xf32> to vector<1x32xf32>
    %c0_16 = arith.constant 0 : index
    %c0_17 = arith.constant 0 : index
    %c0_18 = arith.constant 0 : index
    %14 = vector.load %arg10[%c0_16, %c0_17, %c0_18] : memref<2x1x32xf32, #tpu.memory_space<vmem>>, vector<1x1x32xf32>
    %15 = vector.shape_cast %14 : vector<1x1x32xf32> to vector<1x32xf32>
    %cst = arith.constant dense<0.000000e+00> : vector<16xf32>
    %16 = vector.multi_reduction <add>, %7, %cst [1] : vector<16x32xf32> to vector<16xf32>
    %17 = vector.shape_cast %16 : vector<16xf32> to vector<16x1xf32>
    %cst_19 = arith.constant 3.200000e+01 : f32
    %18 = vector.broadcast %cst_19 : f32 to vector<16x1xf32>
    %19 = arith.divf %17, %18 : vector<16x1xf32>
    %20 = vector.broadcast %19 : vector<16x1xf32> to vector<16x32xf32>
    %21 = arith.subf %7, %20 : vector<16x32xf32>
    %22 = arith.mulf %21, %21 : vector<16x32xf32>
    %cst_20 = arith.constant dense<0.000000e+00> : vector<16xf32>
    %23 = vector.multi_reduction <add>, %22, %cst_20 [1] : vector<16x32xf32> to vector<16xf32>
    %24 = vector.shape_cast %23 : vector<16xf32> to vector<16x1xf32>
    %cst_21 = arith.constant 3.200000e+01 : f32
    %25 = vector.broadcast %cst_21 : f32 to vector<16x1xf32>
    %26 = arith.divf %24, %25 : vector<16x1xf32>
    %27 = vector.broadcast %19 : vector<16x1xf32> to vector<16x32xf32>
    %28 = arith.subf %7, %27 : vector<16x32xf32>
    %cst_22 = arith.constant 9.99999974E-6 : f32
    %29 = vector.broadcast %cst_22 : f32 to vector<16x1xf32>
    %30 = arith.addf %26, %29 : vector<16x1xf32>
    %31 = math.rsqrt %30 : vector<16x1xf32>
    %32 = vector.broadcast %31 : vector<16x1xf32> to vector<16x32xf32>
    %33 = arith.mulf %28, %32 : vector<16x32xf32>
    %34 = vector.broadcast %13 : vector<1x32xf32> to vector<16x32xf32>
    %35 = arith.mulf %33, %34 : vector<16x32xf32>
    %36 = vector.broadcast %15 : vector<1x32xf32> to vector<16x32xf32>
    %37 = arith.addf %35, %36 : vector<16x32xf32>
    %c0_23 = arith.constant 0 : index
    %c0_24 = arith.constant 0 : index
    %c0_25 = arith.constant 0 : index
    %38 = vector.load %arg11[%c0_23, %c0_24, %c0_25] : memref<2x32x64xf32, #tpu.memory_space<vmem>>, vector<1x32x64xf32>
    %39 = vector.shape_cast %38 : vector<1x32x64xf32> to vector<32x64xf32>
    %cst_26 = arith.constant dense<0.000000e+00> : vector<16x64xf32>
    %40 = tpu.matmul %37, %39, %cst_26 {dimension_numbers = #tpu.dot_dimension_numbers<[1], [0], [0], [1], [0, 0, 1, 1], [], []>} : vector<16x32xf32>, vector<32x64xf32>, vector<16x64xf32> -> vector<16x64xf32>
    %41 = vector.extract_strided_slice %40 {offsets = [0, 0], sizes = [16, 32], strides = [1, 1]} : vector<16x64xf32> to vector<16x32xf32>
    %cst_27 = arith.constant 5.000000e-01 : f32
    %42 = vector.broadcast %cst_27 : f32 to vector<16x32xf32>
    %43 = arith.mulf %41, %42 : vector<16x32xf32>
    %44 = vector.extract_strided_slice %40 {offsets = [0, 32], sizes = [16, 32], strides = [1, 1]} : vector<16x64xf32> to vector<16x32xf32>
    %c0_28 = arith.constant 0 : index
    %c0_29 = arith.constant 0 : index
    %45 = vector.load %arg4[%c0_28, %c0_29] : memref<32x32xf32, #tpu.memory_space<vmem>>, vector<32x32xf32>
    %46 = arith.mulf %43, %8 : vector<16x32xf32>
    %cst_30 = arith.constant dense<0.000000e+00> : vector<16x32xf32>
    %47 = tpu.matmul %43, %45, %cst_30 {dimension_numbers = #tpu.dot_dimension_numbers<[1], [0], [0], [1], [0, 0, 1, 1], [], []>} : vector<16x32xf32>, vector<32x32xf32>, vector<16x32xf32> -> vector<16x32xf32>
    %48 = arith.mulf %47, %9 : vector<16x32xf32>
    %49 = arith.addf %46, %48 : vector<16x32xf32>
    %50 = arith.mulf %44, %8 : vector<16x32xf32>
    %cst_31 = arith.constant dense<0.000000e+00> : vector<16x32xf32>
    %51 = tpu.matmul %44, %45, %cst_31 {dimension_numbers = #tpu.dot_dimension_numbers<[1], [0], [0], [1], [0, 0, 1, 1], [], []>} : vector<16x32xf32>, vector<32x32xf32>, vector<16x32xf32> -> vector<16x32xf32>
    %52 = arith.mulf %51, %9 : vector<16x32xf32>
    %53 = arith.addf %50, %52 : vector<16x32xf32>
    %54 = tpu.concatenate %49, %49, %49, %49, %49, %49, %49, %49 in 0 : vector<16x32xf32>, vector<16x32xf32>, vector<16x32xf32>, vector<16x32xf32>, vector<16x32xf32>, vector<16x32xf32>, vector<16x32xf32>, vector<16x32xf32> -> vector<128x32xf32>
    %55 = arith.mulf %54, %10 : vector<128x32xf32>
    %cst_32 = arith.constant dense<0.000000e+00> : vector<128x16xf32>
    %56 = tpu.matmul %55, %53, %cst_32 {dimension_numbers = #tpu.dot_dimension_numbers<[1], [1], [0], [0], [0, 0, 1, 0], [], []>} : vector<128x32xf32>, vector<16x32xf32>, vector<128x16xf32> -> vector<128x16xf32>
    %57 = arith.addf %56, %11 : vector<128x16xf32>
    %cst_33 = arith.constant dense<0xFF800000> : vector<128xf32>
    %58 = vector.multi_reduction <maximumf>, %57, %cst_33 [1] : vector<128x16xf32> to vector<128xf32>
    %59 = vector.shape_cast %58 : vector<128xf32> to vector<128x1xf32>
    %60 = vector.broadcast %59 : vector<128x1xf32> to vector<128x16xf32>
    %61 = arith.subf %57, %60 : vector<128x16xf32>
    %62 = math.exp %61 : vector<128x16xf32>
    %cst_34 = arith.constant dense<0.000000e+00> : vector<128xf32>
    %63 = vector.multi_reduction <add>, %62, %cst_34 [1] : vector<128x16xf32> to vector<128xf32>
    %64 = vector.shape_cast %63 : vector<128xf32> to vector<128x1xf32>
    %65 = tpu.reciprocal %64 {approx = true} : vector<128x1xf32> -> vector<128x1xf32>
    %66 = vector.broadcast %65 : vector<128x1xf32> to vector<128x16xf32>
    %67 = arith.mulf %62, %66 : vector<128x16xf32>
    %cst_35 = arith.constant dense<0.000000e+00> : vector<128x32xf32>
    %68 = tpu.matmul %67, %53, %cst_35 {dimension_numbers = #tpu.dot_dimension_numbers<[1], [0], [0], [1], [0, 0, 1, 1], [], []>} : vector<128x16xf32>, vector<16x32xf32>, vector<128x32xf32> -> vector<128x32xf32>
    %69 = vector.extract_strided_slice %68 {offsets = [0, 0], sizes = [16, 32], strides = [1, 1]} : vector<128x32xf32> to vector<16x32xf32>
    %70 = vector.extract_strided_slice %10 {offsets = [0, 0], sizes = [16, 32], strides = [1, 1]} : vector<128x32xf32> to vector<16x32xf32>
    %71 = arith.mulf %69, %70 : vector<16x32xf32>
    %72 = vector.extract_strided_slice %68 {offsets = [16, 0], sizes = [16, 32], strides = [1, 1]} : vector<128x32xf32> to vector<16x32xf32>
    %73 = vector.extract_strided_slice %10 {offsets = [16, 0], sizes = [16, 32], strides = [1, 1]} : vector<128x32xf32> to vector<16x32xf32>
    %74 = arith.mulf %72, %73 : vector<16x32xf32>
    %75 = arith.addf %71, %74 : vector<16x32xf32>
    %76 = vector.extract_strided_slice %68 {offsets = [32, 0], sizes = [16, 32], strides = [1, 1]} : vector<128x32xf32> to vector<16x32xf32>
    %77 = vector.extract_strided_slice %10 {offsets = [32, 0], sizes = [16, 32], strides = [1, 1]} : vector<128x32xf32> to vector<16x32xf32>
    %78 = arith.mulf %76, %77 : vector<16x32xf32>
    %79 = arith.addf %75, %78 : vector<16x32xf32>
    %80 = vector.extract_strided_slice %68 {offsets = [48, 0], sizes = [16, 32], strides = [1, 1]} : vector<128x32xf32> to vector<16x32xf32>
    %81 = vector.extract_strided_slice %10 {offsets = [48, 0], sizes = [16, 32], strides = [1, 1]} : vector<128x32xf32> to vector<16x32xf32>
    %82 = arith.mulf %80, %81 : vector<16x32xf32>
    %83 = arith.addf %79, %82 : vector<16x32xf32>
    %84 = vector.extract_strided_slice %68 {offsets = [64, 0], sizes = [16, 32], strides = [1, 1]} : vector<128x32xf32> to vector<16x32xf32>
    %85 = vector.extract_strided_slice %10 {offsets = [64, 0], sizes = [16, 32], strides = [1, 1]} : vector<128x32xf32> to vector<16x32xf32>
    %86 = arith.mulf %84, %85 : vector<16x32xf32>
    %87 = arith.addf %83, %86 : vector<16x32xf32>
    %88 = vector.extract_strided_slice %68 {offsets = [80, 0], sizes = [16, 32], strides = [1, 1]} : vector<128x32xf32> to vector<16x32xf32>
    %89 = vector.extract_strided_slice %10 {offsets = [80, 0], sizes = [16, 32], strides = [1, 1]} : vector<128x32xf32> to vector<16x32xf32>
    %90 = arith.mulf %88, %89 : vector<16x32xf32>
    %91 = arith.addf %87, %90 : vector<16x32xf32>
    %92 = vector.extract_strided_slice %68 {offsets = [96, 0], sizes = [16, 32], strides = [1, 1]} : vector<128x32xf32> to vector<16x32xf32>
    %93 = vector.extract_strided_slice %10 {offsets = [96, 0], sizes = [16, 32], strides = [1, 1]} : vector<128x32xf32> to vector<16x32xf32>
    %94 = arith.mulf %92, %93 : vector<16x32xf32>
    %95 = arith.addf %91, %94 : vector<16x32xf32>
    %96 = vector.extract_strided_slice %68 {offsets = [112, 0], sizes = [16, 32], strides = [1, 1]} : vector<128x32xf32> to vector<16x32xf32>
    %97 = vector.extract_strided_slice %10 {offsets = [112, 0], sizes = [16, 32], strides = [1, 1]} : vector<128x32xf32> to vector<16x32xf32>
    %98 = arith.mulf %96, %97 : vector<16x32xf32>
    %99 = arith.addf %95, %98 : vector<16x32xf32>
    %c0_36 = arith.constant 0 : index
    %c0_37 = arith.constant 0 : index
    %c0_38 = arith.constant 0 : index
    %100 = vector.load %arg12[%c0_36, %c0_37, %c0_38] : memref<2x32x32xf32, #tpu.memory_space<vmem>>, vector<1x32x32xf32>
    %101 = vector.shape_cast %100 : vector<1x32x32xf32> to vector<32x32xf32>
    %cst_39 = arith.constant dense<0.000000e+00> : vector<16x32xf32>
    %102 = tpu.matmul %99, %101, %cst_39 {dimension_numbers = #tpu.dot_dimension_numbers<[1], [0], [0], [1], [0, 0, 1, 1], [], []>} : vector<16x32xf32>, vector<32x32xf32>, vector<16x32xf32> -> vector<16x32xf32>
    %c0_40 = arith.constant 0 : index
    %c0_41 = arith.constant 0 : index
    %c0_42 = arith.constant 0 : index
    %103 = vector.load %arg13[%c0_40, %c0_41, %c0_42] : memref<2x1x32xf32, #tpu.memory_space<vmem>>, vector<1x1x32xf32>
    %104 = vector.shape_cast %103 : vector<1x1x32xf32> to vector<1x32xf32>
    %105 = vector.broadcast %104 : vector<1x32xf32> to vector<16x32xf32>
    %106 = arith.addf %102, %105 : vector<16x32xf32>
    %107 = arith.addf %106, %7 : vector<16x32xf32>
    %c0_43 = arith.constant 0 : index
    %c0_44 = arith.constant 0 : index
    %c0_45 = arith.constant 0 : index
    %108 = vector.load %arg14[%c0_43, %c0_44, %c0_45] : memref<2x1x32xf32, #tpu.memory_space<vmem>>, vector<1x1x32xf32>
    %109 = vector.shape_cast %108 : vector<1x1x32xf32> to vector<1x32xf32>
    %c0_46 = arith.constant 0 : index
    %c0_47 = arith.constant 0 : index
    %c0_48 = arith.constant 0 : index
    %110 = vector.load %arg15[%c0_46, %c0_47, %c0_48] : memref<2x1x32xf32, #tpu.memory_space<vmem>>, vector<1x1x32xf32>
    %111 = vector.shape_cast %110 : vector<1x1x32xf32> to vector<1x32xf32>
    %cst_49 = arith.constant dense<0.000000e+00> : vector<16xf32>
    %112 = vector.multi_reduction <add>, %107, %cst_49 [1] : vector<16x32xf32> to vector<16xf32>
    %113 = vector.shape_cast %112 : vector<16xf32> to vector<16x1xf32>
    %cst_50 = arith.constant 3.200000e+01 : f32
    %114 = vector.broadcast %cst_50 : f32 to vector<16x1xf32>
    %115 = arith.divf %113, %114 : vector<16x1xf32>
    %116 = vector.broadcast %115 : vector<16x1xf32> to vector<16x32xf32>
    %117 = arith.subf %107, %116 : vector<16x32xf32>
    %118 = arith.mulf %117, %117 : vector<16x32xf32>
    %cst_51 = arith.constant dense<0.000000e+00> : vector<16xf32>
    %119 = vector.multi_reduction <add>, %118, %cst_51 [1] : vector<16x32xf32> to vector<16xf32>
    %120 = vector.shape_cast %119 : vector<16xf32> to vector<16x1xf32>
    %cst_52 = arith.constant 3.200000e+01 : f32
    %121 = vector.broadcast %cst_52 : f32 to vector<16x1xf32>
    %122 = arith.divf %120, %121 : vector<16x1xf32>
    %123 = vector.broadcast %115 : vector<16x1xf32> to vector<16x32xf32>
    %124 = arith.subf %107, %123 : vector<16x32xf32>
    %cst_53 = arith.constant 9.99999974E-6 : f32
    %125 = vector.broadcast %cst_53 : f32 to vector<16x1xf32>
    %126 = arith.addf %122, %125 : vector<16x1xf32>
    %127 = math.rsqrt %126 : vector<16x1xf32>
    %128 = vector.broadcast %127 : vector<16x1xf32> to vector<16x32xf32>
    %129 = arith.mulf %124, %128 : vector<16x32xf32>
    %130 = vector.broadcast %109 : vector<1x32xf32> to vector<16x32xf32>
    %131 = arith.mulf %129, %130 : vector<16x32xf32>
    %132 = vector.broadcast %111 : vector<1x32xf32> to vector<16x32xf32>
    %133 = arith.addf %131, %132 : vector<16x32xf32>
    %c0_54 = arith.constant 0 : index
    %c0_55 = arith.constant 0 : index
    %c0_56 = arith.constant 0 : index
    %134 = vector.load %arg16[%c0_54, %c0_55, %c0_56] : memref<2x32x128xf32, #tpu.memory_space<vmem>>, vector<1x32x128xf32>
    %135 = vector.shape_cast %134 : vector<1x32x128xf32> to vector<32x128xf32>
    %cst_57 = arith.constant dense<0.000000e+00> : vector<16x128xf32>
    %136 = tpu.matmul %133, %135, %cst_57 {dimension_numbers = #tpu.dot_dimension_numbers<[1], [0], [0], [1], [0, 0, 1, 1], [], []>} : vector<16x32xf32>, vector<32x128xf32>, vector<16x128xf32> -> vector<16x128xf32>
    %c0_58 = arith.constant 0 : index
    %c0_59 = arith.constant 0 : index
    %c0_60 = arith.constant 0 : index
    %137 = vector.load %arg17[%c0_58, %c0_59, %c0_60] : memref<2x1x128xf32, #tpu.memory_space<vmem>>, vector<1x1x128xf32>
    %138 = vector.shape_cast %137 : vector<1x1x128xf32> to vector<1x128xf32>
    %139 = vector.broadcast %138 : vector<1x128xf32> to vector<16x128xf32>
    %140 = arith.addf %136, %139 : vector<16x128xf32>
    %cst_61 = arith.constant 5.000000e-01 : f32
    %141 = vector.broadcast %cst_61 : f32 to vector<16x128xf32>
    %142 = arith.mulf %141, %140 : vector<16x128xf32>
    %cst_62 = arith.constant 4.471500e-02 : f32
    %143 = vector.broadcast %cst_62 : f32 to vector<16x128xf32>
    %144 = arith.mulf %143, %140 : vector<16x128xf32>
    %145 = arith.mulf %144, %140 : vector<16x128xf32>
    %146 = arith.mulf %145, %140 : vector<16x128xf32>
    %147 = arith.addf %140, %146 : vector<16x128xf32>
    %cst_63 = arith.constant 0.797884583 : f32
    %148 = vector.broadcast %cst_63 : f32 to vector<16x128xf32>
    %149 = arith.mulf %148, %147 : vector<16x128xf32>
    %150 = math.tanh %149 : vector<16x128xf32>
    %cst_64 = arith.constant 1.000000e+00 : f32
    %151 = vector.broadcast %cst_64 : f32 to vector<16x128xf32>
    %152 = arith.addf %151, %150 : vector<16x128xf32>
    %153 = arith.mulf %142, %152 : vector<16x128xf32>
    %c0_65 = arith.constant 0 : index
    %c0_66 = arith.constant 0 : index
    %c0_67 = arith.constant 0 : index
    %154 = vector.load %arg18[%c0_65, %c0_66, %c0_67] : memref<2x128x32xf32, #tpu.memory_space<vmem>>, vector<1x128x32xf32>
    %155 = vector.shape_cast %154 : vector<1x128x32xf32> to vector<128x32xf32>
    %cst_68 = arith.constant dense<0.000000e+00> : vector<16x32xf32>
    %156 = tpu.matmul %153, %155, %cst_68 {dimension_numbers = #tpu.dot_dimension_numbers<[1], [0], [0], [1], [0, 0, 1, 1], [], []>} : vector<16x128xf32>, vector<128x32xf32>, vector<16x32xf32> -> vector<16x32xf32>
    %c0_69 = arith.constant 0 : index
    %c0_70 = arith.constant 0 : index
    %c0_71 = arith.constant 0 : index
    %157 = vector.load %arg19[%c0_69, %c0_70, %c0_71] : memref<2x1x32xf32, #tpu.memory_space<vmem>>, vector<1x1x32xf32>
    %158 = vector.shape_cast %157 : vector<1x1x32xf32> to vector<1x32xf32>
    %159 = vector.broadcast %158 : vector<1x32xf32> to vector<16x32xf32>
    %160 = arith.addf %156, %159 : vector<16x32xf32>
    %161 = arith.addf %160, %107 : vector<16x32xf32>
    %c1 = arith.constant 1 : index
    %c0_72 = arith.constant 0 : index
    %c0_73 = arith.constant 0 : index
    %162 = vector.load %arg9[%c1, %c0_72, %c0_73] : memref<2x1x32xf32, #tpu.memory_space<vmem>>, vector<1x1x32xf32>
    %163 = vector.shape_cast %162 : vector<1x1x32xf32> to vector<1x32xf32>
    %c1_74 = arith.constant 1 : index
    %c0_75 = arith.constant 0 : index
    %c0_76 = arith.constant 0 : index
    %164 = vector.load %arg10[%c1_74, %c0_75, %c0_76] : memref<2x1x32xf32, #tpu.memory_space<vmem>>, vector<1x1x32xf32>
    %165 = vector.shape_cast %164 : vector<1x1x32xf32> to vector<1x32xf32>
    %cst_77 = arith.constant dense<0.000000e+00> : vector<16xf32>
    %166 = vector.multi_reduction <add>, %161, %cst_77 [1] : vector<16x32xf32> to vector<16xf32>
    %167 = vector.shape_cast %166 : vector<16xf32> to vector<16x1xf32>
    %cst_78 = arith.constant 3.200000e+01 : f32
    %168 = vector.broadcast %cst_78 : f32 to vector<16x1xf32>
    %169 = arith.divf %167, %168 : vector<16x1xf32>
    %170 = vector.broadcast %169 : vector<16x1xf32> to vector<16x32xf32>
    %171 = arith.subf %161, %170 : vector<16x32xf32>
    %172 = arith.mulf %171, %171 : vector<16x32xf32>
    %cst_79 = arith.constant dense<0.000000e+00> : vector<16xf32>
    %173 = vector.multi_reduction <add>, %172, %cst_79 [1] : vector<16x32xf32> to vector<16xf32>
    %174 = vector.shape_cast %173 : vector<16xf32> to vector<16x1xf32>
    %cst_80 = arith.constant 3.200000e+01 : f32
    %175 = vector.broadcast %cst_80 : f32 to vector<16x1xf32>
    %176 = arith.divf %174, %175 : vector<16x1xf32>
    %177 = vector.broadcast %169 : vector<16x1xf32> to vector<16x32xf32>
    %178 = arith.subf %161, %177 : vector<16x32xf32>
    %cst_81 = arith.constant 9.99999974E-6 : f32
    %179 = vector.broadcast %cst_81 : f32 to vector<16x1xf32>
    %180 = arith.addf %176, %179 : vector<16x1xf32>
    %181 = math.rsqrt %180 : vector<16x1xf32>
    %182 = vector.broadcast %181 : vector<16x1xf32> to vector<16x32xf32>
    %183 = arith.mulf %178, %182 : vector<16x32xf32>
    %184 = vector.broadcast %163 : vector<1x32xf32> to vector<16x32xf32>
    %185 = arith.mulf %183, %184 : vector<16x32xf32>
    %186 = vector.broadcast %165 : vector<1x32xf32> to vector<16x32xf32>
    %187 = arith.addf %185, %186 : vector<16x32xf32>
    %c1_82 = arith.constant 1 : index
    %c0_83 = arith.constant 0 : index
    %c0_84 = arith.constant 0 : index
    %188 = vector.load %arg11[%c1_82, %c0_83, %c0_84] : memref<2x32x64xf32, #tpu.memory_space<vmem>>, vector<1x32x64xf32>
    %189 = vector.shape_cast %188 : vector<1x32x64xf32> to vector<32x64xf32>
    %cst_85 = arith.constant dense<0.000000e+00> : vector<16x64xf32>
    %190 = tpu.matmul %187, %189, %cst_85 {dimension_numbers = #tpu.dot_dimension_numbers<[1], [0], [0], [1], [0, 0, 1, 1], [], []>} : vector<16x32xf32>, vector<32x64xf32>, vector<16x64xf32> -> vector<16x64xf32>
    %191 = vector.extract_strided_slice %190 {offsets = [0, 0], sizes = [16, 32], strides = [1, 1]} : vector<16x64xf32> to vector<16x32xf32>
    %cst_86 = arith.constant 5.000000e-01 : f32
    %192 = vector.broadcast %cst_86 : f32 to vector<16x32xf32>
    %193 = arith.mulf %191, %192 : vector<16x32xf32>
    %194 = vector.extract_strided_slice %190 {offsets = [0, 32], sizes = [16, 32], strides = [1, 1]} : vector<16x64xf32> to vector<16x32xf32>
    %195 = tpu.concatenate %193, %193, %193, %193, %193, %193, %193, %193 in 0 : vector<16x32xf32>, vector<16x32xf32>, vector<16x32xf32>, vector<16x32xf32>, vector<16x32xf32>, vector<16x32xf32>, vector<16x32xf32>, vector<16x32xf32> -> vector<128x32xf32>
    %196 = arith.mulf %195, %10 : vector<128x32xf32>
    %cst_87 = arith.constant dense<0.000000e+00> : vector<128x16xf32>
    %197 = tpu.matmul %196, %194, %cst_87 {dimension_numbers = #tpu.dot_dimension_numbers<[1], [1], [0], [0], [0, 0, 1, 0], [], []>} : vector<128x32xf32>, vector<16x32xf32>, vector<128x16xf32> -> vector<128x16xf32>
    %198 = arith.addf %197, %11 : vector<128x16xf32>
    %cst_88 = arith.constant dense<0xFF800000> : vector<128xf32>
    %199 = vector.multi_reduction <maximumf>, %198, %cst_88 [1] : vector<128x16xf32> to vector<128xf32>
    %200 = vector.shape_cast %199 : vector<128xf32> to vector<128x1xf32>
    %201 = vector.broadcast %200 : vector<128x1xf32> to vector<128x16xf32>
    %202 = arith.subf %198, %201 : vector<128x16xf32>
    %203 = math.exp %202 : vector<128x16xf32>
    %cst_89 = arith.constant dense<0.000000e+00> : vector<128xf32>
    %204 = vector.multi_reduction <add>, %203, %cst_89 [1] : vector<128x16xf32> to vector<128xf32>
    %205 = vector.shape_cast %204 : vector<128xf32> to vector<128x1xf32>
    %206 = tpu.reciprocal %205 {approx = true} : vector<128x1xf32> -> vector<128x1xf32>
    %207 = vector.broadcast %206 : vector<128x1xf32> to vector<128x16xf32>
    %208 = arith.mulf %203, %207 : vector<128x16xf32>
    %cst_90 = arith.constant dense<0.000000e+00> : vector<128x32xf32>
    %209 = tpu.matmul %208, %194, %cst_90 {dimension_numbers = #tpu.dot_dimension_numbers<[1], [0], [0], [1], [0, 0, 1, 1], [], []>} : vector<128x16xf32>, vector<16x32xf32>, vector<128x32xf32> -> vector<128x32xf32>
    %210 = vector.extract_strided_slice %209 {offsets = [0, 0], sizes = [16, 32], strides = [1, 1]} : vector<128x32xf32> to vector<16x32xf32>
    %211 = vector.extract_strided_slice %10 {offsets = [0, 0], sizes = [16, 32], strides = [1, 1]} : vector<128x32xf32> to vector<16x32xf32>
    %212 = arith.mulf %210, %211 : vector<16x32xf32>
    %213 = vector.extract_strided_slice %209 {offsets = [16, 0], sizes = [16, 32], strides = [1, 1]} : vector<128x32xf32> to vector<16x32xf32>
    %214 = vector.extract_strided_slice %10 {offsets = [16, 0], sizes = [16, 32], strides = [1, 1]} : vector<128x32xf32> to vector<16x32xf32>
    %215 = arith.mulf %213, %214 : vector<16x32xf32>
    %216 = arith.addf %212, %215 : vector<16x32xf32>
    %217 = vector.extract_strided_slice %209 {offsets = [32, 0], sizes = [16, 32], strides = [1, 1]} : vector<128x32xf32> to vector<16x32xf32>
    %218 = vector.extract_strided_slice %10 {offsets = [32, 0], sizes = [16, 32], strides = [1, 1]} : vector<128x32xf32> to vector<16x32xf32>
    %219 = arith.mulf %217, %218 : vector<16x32xf32>
    %220 = arith.addf %216, %219 : vector<16x32xf32>
    %221 = vector.extract_strided_slice %209 {offsets = [48, 0], sizes = [16, 32], strides = [1, 1]} : vector<128x32xf32> to vector<16x32xf32>
    %222 = vector.extract_strided_slice %10 {offsets = [48, 0], sizes = [16, 32], strides = [1, 1]} : vector<128x32xf32> to vector<16x32xf32>
    %223 = arith.mulf %221, %222 : vector<16x32xf32>
    %224 = arith.addf %220, %223 : vector<16x32xf32>
    %225 = vector.extract_strided_slice %209 {offsets = [64, 0], sizes = [16, 32], strides = [1, 1]} : vector<128x32xf32> to vector<16x32xf32>
    %226 = vector.extract_strided_slice %10 {offsets = [64, 0], sizes = [16, 32], strides = [1, 1]} : vector<128x32xf32> to vector<16x32xf32>
    %227 = arith.mulf %225, %226 : vector<16x32xf32>
    %228 = arith.addf %224, %227 : vector<16x32xf32>
    %229 = vector.extract_strided_slice %209 {offsets = [80, 0], sizes = [16, 32], strides = [1, 1]} : vector<128x32xf32> to vector<16x32xf32>
    %230 = vector.extract_strided_slice %10 {offsets = [80, 0], sizes = [16, 32], strides = [1, 1]} : vector<128x32xf32> to vector<16x32xf32>
    %231 = arith.mulf %229, %230 : vector<16x32xf32>
    %232 = arith.addf %228, %231 : vector<16x32xf32>
    %233 = vector.extract_strided_slice %209 {offsets = [96, 0], sizes = [16, 32], strides = [1, 1]} : vector<128x32xf32> to vector<16x32xf32>
    %234 = vector.extract_strided_slice %10 {offsets = [96, 0], sizes = [16, 32], strides = [1, 1]} : vector<128x32xf32> to vector<16x32xf32>
    %235 = arith.mulf %233, %234 : vector<16x32xf32>
    %236 = arith.addf %232, %235 : vector<16x32xf32>
    %237 = vector.extract_strided_slice %209 {offsets = [112, 0], sizes = [16, 32], strides = [1, 1]} : vector<128x32xf32> to vector<16x32xf32>
    %238 = vector.extract_strided_slice %10 {offsets = [112, 0], sizes = [16, 32], strides = [1, 1]} : vector<128x32xf32> to vector<16x32xf32>
    %239 = arith.mulf %237, %238 : vector<16x32xf32>
    %240 = arith.addf %236, %239 : vector<16x32xf32>
    %c1_91 = arith.constant 1 : index
    %c0_92 = arith.constant 0 : index
    %c0_93 = arith.constant 0 : index
    %241 = vector.load %arg12[%c1_91, %c0_92, %c0_93] : memref<2x32x32xf32, #tpu.memory_space<vmem>>, vector<1x32x32xf32>
    %242 = vector.shape_cast %241 : vector<1x32x32xf32> to vector<32x32xf32>
    %cst_94 = arith.constant dense<0.000000e+00> : vector<16x32xf32>
    %243 = tpu.matmul %240, %242, %cst_94 {dimension_numbers = #tpu.dot_dimension_numbers<[1], [0], [0], [1], [0, 0, 1, 1], [], []>} : vector<16x32xf32>, vector<32x32xf32>, vector<16x32xf32> -> vector<16x32xf32>
    %c1_95 = arith.constant 1 : index
    %c0_96 = arith.constant 0 : index
    %c0_97 = arith.constant 0 : index
    %244 = vector.load %arg13[%c1_95, %c0_96, %c0_97] : memref<2x1x32xf32, #tpu.memory_space<vmem>>, vector<1x1x32xf32>
    %245 = vector.shape_cast %244 : vector<1x1x32xf32> to vector<1x32xf32>
    %246 = vector.broadcast %245 : vector<1x32xf32> to vector<16x32xf32>
    %247 = arith.addf %243, %246 : vector<16x32xf32>
    %248 = arith.addf %247, %161 : vector<16x32xf32>
    %c1_98 = arith.constant 1 : index
    %c0_99 = arith.constant 0 : index
    %c0_100 = arith.constant 0 : index
    %249 = vector.load %arg14[%c1_98, %c0_99, %c0_100] : memref<2x1x32xf32, #tpu.memory_space<vmem>>, vector<1x1x32xf32>
    %250 = vector.shape_cast %249 : vector<1x1x32xf32> to vector<1x32xf32>
    %c1_101 = arith.constant 1 : index
    %c0_102 = arith.constant 0 : index
    %c0_103 = arith.constant 0 : index
    %251 = vector.load %arg15[%c1_101, %c0_102, %c0_103] : memref<2x1x32xf32, #tpu.memory_space<vmem>>, vector<1x1x32xf32>
    %252 = vector.shape_cast %251 : vector<1x1x32xf32> to vector<1x32xf32>
    %cst_104 = arith.constant dense<0.000000e+00> : vector<16xf32>
    %253 = vector.multi_reduction <add>, %248, %cst_104 [1] : vector<16x32xf32> to vector<16xf32>
    %254 = vector.shape_cast %253 : vector<16xf32> to vector<16x1xf32>
    %cst_105 = arith.constant 3.200000e+01 : f32
    %255 = vector.broadcast %cst_105 : f32 to vector<16x1xf32>
    %256 = arith.divf %254, %255 : vector<16x1xf32>
    %257 = vector.broadcast %256 : vector<16x1xf32> to vector<16x32xf32>
    %258 = arith.subf %248, %257 : vector<16x32xf32>
    %259 = arith.mulf %258, %258 : vector<16x32xf32>
    %cst_106 = arith.constant dense<0.000000e+00> : vector<16xf32>
    %260 = vector.multi_reduction <add>, %259, %cst_106 [1] : vector<16x32xf32> to vector<16xf32>
    %261 = vector.shape_cast %260 : vector<16xf32> to vector<16x1xf32>
    %cst_107 = arith.constant 3.200000e+01 : f32
    %262 = vector.broadcast %cst_107 : f32 to vector<16x1xf32>
    %263 = arith.divf %261, %262 : vector<16x1xf32>
    %264 = vector.broadcast %256 : vector<16x1xf32> to vector<16x32xf32>
    %265 = arith.subf %248, %264 : vector<16x32xf32>
    %cst_108 = arith.constant 9.99999974E-6 : f32
    %266 = vector.broadcast %cst_108 : f32 to vector<16x1xf32>
    %267 = arith.addf %263, %266 : vector<16x1xf32>
    %268 = math.rsqrt %267 : vector<16x1xf32>
    %269 = vector.broadcast %268 : vector<16x1xf32> to vector<16x32xf32>
    %270 = arith.mulf %265, %269 : vector<16x32xf32>
    %271 = vector.broadcast %250 : vector<1x32xf32> to vector<16x32xf32>
    %272 = arith.mulf %270, %271 : vector<16x32xf32>
    %273 = vector.broadcast %252 : vector<1x32xf32> to vector<16x32xf32>
    %274 = arith.addf %272, %273 : vector<16x32xf32>
    %c1_109 = arith.constant 1 : index
    %c0_110 = arith.constant 0 : index
    %c0_111 = arith.constant 0 : index
    %275 = vector.load %arg16[%c1_109, %c0_110, %c0_111] : memref<2x32x128xf32, #tpu.memory_space<vmem>>, vector<1x32x128xf32>
    %276 = vector.shape_cast %275 : vector<1x32x128xf32> to vector<32x128xf32>
    %cst_112 = arith.constant dense<0.000000e+00> : vector<16x128xf32>
    %277 = tpu.matmul %274, %276, %cst_112 {dimension_numbers = #tpu.dot_dimension_numbers<[1], [0], [0], [1], [0, 0, 1, 1], [], []>} : vector<16x32xf32>, vector<32x128xf32>, vector<16x128xf32> -> vector<16x128xf32>
    %c1_113 = arith.constant 1 : index
    %c0_114 = arith.constant 0 : index
    %c0_115 = arith.constant 0 : index
    %278 = vector.load %arg17[%c1_113, %c0_114, %c0_115] : memref<2x1x128xf32, #tpu.memory_space<vmem>>, vector<1x1x128xf32>
    %279 = vector.shape_cast %278 : vector<1x1x128xf32> to vector<1x128xf32>
    %280 = vector.broadcast %279 : vector<1x128xf32> to vector<16x128xf32>
    %281 = arith.addf %277, %280 : vector<16x128xf32>
    %cst_116 = arith.constant 5.000000e-01 : f32
    %282 = vector.broadcast %cst_116 : f32 to vector<16x128xf32>
    %283 = arith.mulf %282, %281 : vector<16x128xf32>
    %cst_117 = arith.constant 4.471500e-02 : f32
    %284 = vector.broadcast %cst_117 : f32 to vector<16x128xf32>
    %285 = arith.mulf %284, %281 : vector<16x128xf32>
    %286 = arith.mulf %285, %281 : vector<16x128xf32>
    %287 = arith.mulf %286, %281 : vector<16x128xf32>
    %288 = arith.addf %281, %287 : vector<16x128xf32>
    %cst_118 = arith.constant 0.797884583 : f32
    %289 = vector.broadcast %cst_118 : f32 to vector<16x128xf32>
    %290 = arith.mulf %289, %288 : vector<16x128xf32>
    %291 = math.tanh %290 : vector<16x128xf32>
    %cst_119 = arith.constant 1.000000e+00 : f32
    %292 = vector.broadcast %cst_119 : f32 to vector<16x128xf32>
    %293 = arith.addf %292, %291 : vector<16x128xf32>
    %294 = arith.mulf %283, %293 : vector<16x128xf32>
    %c1_120 = arith.constant 1 : index
    %c0_121 = arith.constant 0 : index
    %c0_122 = arith.constant 0 : index
    %295 = vector.load %arg18[%c1_120, %c0_121, %c0_122] : memref<2x128x32xf32, #tpu.memory_space<vmem>>, vector<1x128x32xf32>
    %296 = vector.shape_cast %295 : vector<1x128x32xf32> to vector<128x32xf32>
    %cst_123 = arith.constant dense<0.000000e+00> : vector<16x32xf32>
    %297 = tpu.matmul %294, %296, %cst_123 {dimension_numbers = #tpu.dot_dimension_numbers<[1], [0], [0], [1], [0, 0, 1, 1], [], []>} : vector<16x128xf32>, vector<128x32xf32>, vector<16x32xf32> -> vector<16x32xf32>
    %c1_124 = arith.constant 1 : index
    %c0_125 = arith.constant 0 : index
    %c0_126 = arith.constant 0 : index
    %298 = vector.load %arg19[%c1_124, %c0_125, %c0_126] : memref<2x1x32xf32, #tpu.memory_space<vmem>>, vector<1x1x32xf32>
    %299 = vector.shape_cast %298 : vector<1x1x32xf32> to vector<1x32xf32>
    %300 = vector.broadcast %299 : vector<1x32xf32> to vector<16x32xf32>
    %301 = arith.addf %297, %300 : vector<16x32xf32>
    %302 = arith.addf %301, %248 : vector<16x32xf32>
    %c0_127 = arith.constant 0 : index
    %c0_128 = arith.constant 0 : index
    %303 = vector.load %arg20[%c0_127, %c0_128] : memref<1x32xf32, #tpu.memory_space<vmem>>, vector<1x32xf32>
    %c0_129 = arith.constant 0 : index
    %c0_130 = arith.constant 0 : index
    %304 = vector.load %arg21[%c0_129, %c0_130] : memref<1x32xf32, #tpu.memory_space<vmem>>, vector<1x32xf32>
    %cst_131 = arith.constant dense<0.000000e+00> : vector<16xf32>
    %305 = vector.multi_reduction <add>, %302, %cst_131 [1] : vector<16x32xf32> to vector<16xf32>
    %306 = vector.shape_cast %305 : vector<16xf32> to vector<16x1xf32>
    %cst_132 = arith.constant 3.200000e+01 : f32
    %307 = vector.broadcast %cst_132 : f32 to vector<16x1xf32>
    %308 = arith.divf %306, %307 : vector<16x1xf32>
    %309 = vector.broadcast %308 : vector<16x1xf32> to vector<16x32xf32>
    %310 = arith.subf %302, %309 : vector<16x32xf32>
    %311 = arith.mulf %310, %310 : vector<16x32xf32>
    %cst_133 = arith.constant dense<0.000000e+00> : vector<16xf32>
    %312 = vector.multi_reduction <add>, %311, %cst_133 [1] : vector<16x32xf32> to vector<16xf32>
    %313 = vector.shape_cast %312 : vector<16xf32> to vector<16x1xf32>
    %cst_134 = arith.constant 3.200000e+01 : f32
    %314 = vector.broadcast %cst_134 : f32 to vector<16x1xf32>
    %315 = arith.divf %313, %314 : vector<16x1xf32>
    %316 = vector.broadcast %308 : vector<16x1xf32> to vector<16x32xf32>
    %317 = arith.subf %302, %316 : vector<16x32xf32>
    %cst_135 = arith.constant 9.99999974E-6 : f32
    %318 = vector.broadcast %cst_135 : f32 to vector<16x1xf32>
    %319 = arith.addf %315, %318 : vector<16x1xf32>
    %320 = math.rsqrt %319 : vector<16x1xf32>
    %321 = vector.broadcast %320 : vector<16x1xf32> to vector<16x32xf32>
    %322 = arith.mulf %317, %321 : vector<16x32xf32>
    %323 = vector.broadcast %303 : vector<1x32xf32> to vector<16x32xf32>
    %324 = arith.mulf %322, %323 : vector<16x32xf32>
    %325 = vector.broadcast %304 : vector<1x32xf32> to vector<16x32xf32>
    %326 = arith.addf %324, %325 : vector<16x32xf32>
    %c0_136 = arith.constant 0 : index
    %c0_137 = arith.constant 0 : index
    %327 = vector.load %arg22[%c0_136, %c0_137] : memref<32x128xf32, #tpu.memory_space<vmem>>, vector<32x128xf32>
    %cst_138 = arith.constant dense<0.000000e+00> : vector<16x128xf32>
    %328 = tpu.matmul %326, %327, %cst_138 {dimension_numbers = #tpu.dot_dimension_numbers<[1], [0], [0], [1], [0, 0, 1, 1], [], []>} : vector<16x32xf32>, vector<32x128xf32>, vector<16x128xf32> -> vector<16x128xf32>
    %c0_139 = arith.constant 0 : index
    %c0_140 = arith.constant 0 : index
    %329 = vector.load %arg23[%c0_139, %c0_140] : memref<1x128xf32, #tpu.memory_space<vmem>>, vector<1x128xf32>
    %330 = vector.broadcast %329 : vector<1x128xf32> to vector<16x128xf32>
    %331 = arith.addf %328, %330 : vector<16x128xf32>
    %c0_141 = arith.constant 0 : index
    %c0_142 = arith.constant 0 : index
    %332 = vector.load %arg24[%c0_141, %c0_142] : memref<16x128xf32, #tpu.memory_space<vmem>>, vector<16x128xf32>
    tpu.vector_store %arg24[%c0_141, %c0_142], %331 {strides = array<i32>} : memref<16x128xf32, #tpu.memory_space<vmem>>, vector<16x128xf32>,
    %cst_143 = arith.constant dense<0xFF800000> : vector<16xf32>
    %333 = vector.multi_reduction <maximumf>, %331, %cst_143 [1] : vector<16x128xf32> to vector<16xf32>
    %334 = vector.shape_cast %333 : vector<16xf32> to vector<16x1xf32>
    %335 = vector.broadcast %334 : vector<16x1xf32> to vector<16x128xf32>
    %336 = arith.subf %331, %335 : vector<16x128xf32>
    %337 = math.exp %336 : vector<16x128xf32>
    %cst_144 = arith.constant dense<0.000000e+00> : vector<16xf32>
    %338 = vector.multi_reduction <add>, %337, %cst_144 [1] : vector<16x128xf32> to vector<16xf32>
    %339 = vector.shape_cast %338 : vector<16xf32> to vector<16x1xf32>
    %340 = vector.broadcast %339 : vector<16x1xf32> to vector<16x128xf32>
    %341 = arith.divf %337, %340 : vector<16x128xf32>
    %c0_145 = arith.constant 0 : index
    %c0_146 = arith.constant 0 : index
    %342 = vector.load %arg25[%c0_145, %c0_146] : memref<16x128xf32, #tpu.memory_space<vmem>>, vector<16x128xf32>
    tpu.vector_store %arg25[%c0_145, %c0_146], %341 {strides = array<i32>} : memref<16x128xf32, #tpu.memory_space<vmem>>, vector<16x128xf32>,
    return
  }
  func.func @transform_0(%arg0: i32) -> (i32, i32) {
    %c0_i32 = arith.constant 0 : i32
    %c0_i32_0 = arith.constant 0 : i32
    return %arg0, %c0_i32 : i32, i32
  }
  func.func @transform_1(%arg0: i32) -> (i32, i32) {
    %c0_i32 = arith.constant 0 : i32
    %c0_i32_0 = arith.constant 0 : i32
    %c0_i32_1 = arith.constant 0 : i32
    return %c0_i32, %c0_i32_0 : i32, i32
  }
  func.func @transform_2(%arg0: i32) -> (i32, i32) {
    %c0_i32 = arith.constant 0 : i32
    %c0_i32_0 = arith.constant 0 : i32
    %c0_i32_1 = arith.constant 0 : i32
    return %c0_i32, %c0_i32_0 : i32, i32
  }
  func.func @transform_3(%arg0: i32) -> (i32, i32) {
    %c0_i32 = arith.constant 0 : i32
    %c0_i32_0 = arith.constant 0 : i32
    %c0_i32_1 = arith.constant 0 : i32
    return %c0_i32, %c0_i32_0 : i32, i32
  }
  func.func @transform_4(%arg0: i32) -> (i32, i32) {
    %c0_i32 = arith.constant 0 : i32
    %c0_i32_0 = arith.constant 0 : i32
    %c0_i32_1 = arith.constant 0 : i32
    return %c0_i32, %c0_i32_0 : i32, i32
  }
  func.func @transform_5(%arg0: i32) -> (i32, i32) {
    %c0_i32 = arith.constant 0 : i32
    %c0_i32_0 = arith.constant 0 : i32
    %c0_i32_1 = arith.constant 0 : i32
    return %c0_i32, %c0_i32_0 : i32, i32
  }
  func.func @transform_6(%arg0: i32) -> (i32, i32) {
    %c0_i32 = arith.constant 0 : i32
    %c0_i32_0 = arith.constant 0 : i32
    %c0_i32_1 = arith.constant 0 : i32
    return %c0_i32, %c0_i32_0 : i32, i32
  }
  func.func @transform_7(%arg0: i32) -> (i32, i32) {
    %c0_i32 = arith.constant 0 : i32
    %c0_i32_0 = arith.constant 0 : i32
    %c0_i32_1 = arith.constant 0 : i32
    return %c0_i32, %c0_i32_0 : i32, i32
  }
  func.func @transform_8(%arg0: i32) -> (i32, i32, i32) {
    %c0_i32 = arith.constant 0 : i32
    %c0_i32_0 = arith.constant 0 : i32
    %c0_i32_1 = arith.constant 0 : i32
    %c0_i32_2 = arith.constant 0 : i32
    return %c0_i32, %c0_i32_0, %c0_i32_1 : i32, i32, i32
  }
  func.func @transform_9(%arg0: i32) -> (i32, i32, i32) {
    %c0_i32 = arith.constant 0 : i32
    %c0_i32_0 = arith.constant 0 : i32
    %c0_i32_1 = arith.constant 0 : i32
    %c0_i32_2 = arith.constant 0 : i32
    return %c0_i32, %c0_i32_0, %c0_i32_1 : i32, i32, i32
  }
  func.func @transform_10(%arg0: i32) -> (i32, i32, i32) {
    %c0_i32 = arith.constant 0 : i32
    %c0_i32_0 = arith.constant 0 : i32
    %c0_i32_1 = arith.constant 0 : i32
    %c0_i32_2 = arith.constant 0 : i32
    return %c0_i32, %c0_i32_0, %c0_i32_1 : i32, i32, i32
  }
  func.func @transform_11(%arg0: i32) -> (i32, i32, i32) {
    %c0_i32 = arith.constant 0 : i32
    %c0_i32_0 = arith.constant 0 : i32
    %c0_i32_1 = arith.constant 0 : i32
    %c0_i32_2 = arith.constant 0 : i32
    return %c0_i32, %c0_i32_0, %c0_i32_1 : i32, i32, i32
  }
  func.func @transform_12(%arg0: i32) -> (i32, i32, i32) {
    %c0_i32 = arith.constant 0 : i32
    %c0_i32_0 = arith.constant 0 : i32
    %c0_i32_1 = arith.constant 0 : i32
    %c0_i32_2 = arith.constant 0 : i32
    return %c0_i32, %c0_i32_0, %c0_i32_1 : i32, i32, i32
  }
  func.func @transform_13(%arg0: i32) -> (i32, i32, i32) {
    %c0_i32 = arith.constant 0 : i32
    %c0_i32_0 = arith.constant 0 : i32
    %c0_i32_1 = arith.constant 0 : i32
    %c0_i32_2 = arith.constant 0 : i32
    return %c0_i32, %c0_i32_0, %c0_i32_1 : i32, i32, i32
  }
  func.func @transform_14(%arg0: i32) -> (i32, i32, i32) {
    %c0_i32 = arith.constant 0 : i32
    %c0_i32_0 = arith.constant 0 : i32
    %c0_i32_1 = arith.constant 0 : i32
    %c0_i32_2 = arith.constant 0 : i32
    return %c0_i32, %c0_i32_0, %c0_i32_1 : i32, i32, i32
  }
  func.func @transform_15(%arg0: i32) -> (i32, i32, i32) {
    %c0_i32 = arith.constant 0 : i32
    %c0_i32_0 = arith.constant 0 : i32
    %c0_i32_1 = arith.constant 0 : i32
    %c0_i32_2 = arith.constant 0 : i32
    return %c0_i32, %c0_i32_0, %c0_i32_1 : i32, i32, i32
  }
  func.func @transform_16(%arg0: i32) -> (i32, i32, i32) {
    %c0_i32 = arith.constant 0 : i32
    %c0_i32_0 = arith.constant 0 : i32
    %c0_i32_1 = arith.constant 0 : i32
    %c0_i32_2 = arith.constant 0 : i32
    return %c0_i32, %c0_i32_0, %c0_i32_1 : i32, i32, i32
  }
  func.func @transform_17(%arg0: i32) -> (i32, i32, i32) {
    %c0_i32 = arith.constant 0 : i32
    %c0_i32_0 = arith.constant 0 : i32
    %c0_i32_1 = arith.constant 0 : i32
    %c0_i32_2 = arith.constant 0 : i32
    return %c0_i32, %c0_i32_0, %c0_i32_1 : i32, i32, i32
  }
  func.func @transform_18(%arg0: i32) -> (i32, i32, i32) {
    %c0_i32 = arith.constant 0 : i32
    %c0_i32_0 = arith.constant 0 : i32
    %c0_i32_1 = arith.constant 0 : i32
    %c0_i32_2 = arith.constant 0 : i32
    return %c0_i32, %c0_i32_0, %c0_i32_1 : i32, i32, i32
  }
  func.func @transform_19(%arg0: i32) -> (i32, i32) {
    %c0_i32 = arith.constant 0 : i32
    %c0_i32_0 = arith.constant 0 : i32
    %c0_i32_1 = arith.constant 0 : i32
    return %c0_i32, %c0_i32_0 : i32, i32
  }
  func.func @transform_20(%arg0: i32) -> (i32, i32) {
    %c0_i32 = arith.constant 0 : i32
    %c0_i32_0 = arith.constant 0 : i32
    %c0_i32_1 = arith.constant 0 : i32
    return %c0_i32, %c0_i32_0 : i32, i32
  }
  func.func @transform_21(%arg0: i32) -> (i32, i32) {
    %c0_i32 = arith.constant 0 : i32
    %c0_i32_0 = arith.constant 0 : i32
    %c0_i32_1 = arith.constant 0 : i32
    return %c0_i32, %c0_i32_0 : i32, i32
  }
  func.func @transform_22(%arg0: i32) -> (i32, i32) {
    %c0_i32 = arith.constant 0 : i32
    %c0_i32_0 = arith.constant 0 : i32
    %c0_i32_1 = arith.constant 0 : i32
    return %c0_i32, %c0_i32_0 : i32, i32
  }
  func.func @transform_23(%arg0: i32) -> (i32, i32) {
    %c0_i32 = arith.constant 0 : i32
    %c0_i32_0 = arith.constant 0 : i32
    return %arg0, %c0_i32 : i32, i32
  }
  func.func @transform_24(%arg0: i32) -> (i32, i32) {
    %c0_i32 = arith.constant 0 : i32
    %c0_i32_0 = arith.constant 0 : i32
    return %arg0, %c0_i32 : i32, i32
  }
}

</mosaic_0001>

<llo_original>
// kernel: tile.23
$region0: #{tile.23}
  #allocation0 [shape = 's32[1]{0}', space=sflag, size = 0x4, scoped, tag = 'scoped memory for tile.23']
  %s0 = inlined_call_operand.vmem [shape: f32[8,4], index: 0, kind: input, shape index: {}]
  %s1 = inlined_call_operand.vmem [shape: f32[2,8,8,4], index: 1, kind: output, shape index: {}]
  // Predicated region
  $region2: #{tile.23} parent=0 // pred_check
    _
  $region3: #{tile.23} parent=0 // pred_check_branch
    %3 = sbr.rel (0) target = $region5
  $region4: #{tile.23} parent=0 // pred_region
    _
  $region5: #{tile.23} parent=0 // pred_fallthru
    _
  %v4 = vld [vmem:[%s0] ss:$0 sm:$0xff]
  %5 = vst [vmem:[%s1] sm:$0x3] %v4
  %s6 = scalar_lea.vmem %s1, 8
  %7 = vst [vmem:[%s6] sm:$0x3] %v4
  %s8 = scalar_lea.vmem %s1, 16
  %9 = vst [vmem:[%s8] sm:$0x3] %v4
  %s10 = scalar_lea.vmem %s1, 24
  %11 = vst [vmem:[%s10] sm:$0x3] %v4
  %s12 = scalar_lea.vmem %s1, 32
  %13 = vst [vmem:[%s12] sm:$0x3] %v4
  %s14 = scalar_lea.vmem %s1, 40
  %15 = vst [vmem:[%s14] sm:$0x3] %v4
  %s16 = scalar_lea.vmem %s1, 48
  %17 = vst [vmem:[%s16] sm:$0x3] %v4
  %s18 = scalar_lea.vmem %s1, 56
  %19 = vst [vmem:[%s18] sm:$0x3] %v4
  %s20 = scalar_lea.vmem %s0, 1
  %v21 = vld [vmem:[%s20] ss:$0 sm:$0xff]
  %s22 = scalar_lea.vmem %s1, 2
  %23 = vst [vmem:[%s22] sm:$0x3] %v21
  %s24 = scalar_lea.vmem %s1, 10
  %25 = vst [vmem:[%s24] sm:$0x3] %v21
  %s26 = scalar_lea.vmem %s1, 18
  %27 = vst [vmem:[%s26] sm:$0x3] %v21
  %s28 = scalar_lea.vmem %s1, 26
  %29 = vst [vmem:[%s28] sm:$0x3] %v21
  %s30 = scalar_lea.vmem %s1, 34
  %31 = vst [vmem:[%s30] sm:$0x3] %v21
  %s32 = scalar_lea.vmem %s1, 42
  %33 = vst [vmem:[%s32] sm:$0x3] %v21
  %s34 = scalar_lea.vmem %s1, 50
  %35 = vst [vmem:[%s34] sm:$0x3] %v21
  %s36 = scalar_lea.vmem %s1, 58
  %37 = vst [vmem:[%s36] sm:$0x3] %v21
  %s38 = scalar_lea.vmem %s0, 2
  %v39 = vld [vmem:[%s38] ss:$0 sm:$0xff]
  %s40 = scalar_lea.vmem %s1, 4
  %41 = vst [vmem:[%s40] sm:$0x3] %v39
  %s42 = scalar_lea.vmem %s1, 12
  %43 = vst [vmem:[%s42] sm:$0x3] %v39
  %s44 = scalar_lea.vmem %s1, 20
  %45 = vst [vmem:[%s44] sm:$0x3] %v39
  %s46 = scalar_lea.vmem %s1, 28
  %47 = vst [vmem:[%s46] sm:$0x3] %v39
  %s48 = scalar_lea.vmem %s1, 36
  %49 = vst [vmem:[%s48] sm:$0x3] %v39
  %s50 = scalar_lea.vmem %s1, 44
  %51 = vst [vmem:[%s50] sm:$0x3] %v39
  %s52 = scalar_lea.vmem %s1, 52
  %53 = vst [vmem:[%s52] sm:$0x3] %v39
  %s54 = scalar_lea.vmem %s1, 60
  %55 = vst [vmem:[%s54] sm:$0x3] %v39
  %s56 = scalar_lea.vmem %s0, 3
  %v57 = vld [vmem:[%s56] ss:$0 sm:$0xff]
  %s58 = scalar_lea.vmem %s1, 6
  %59 = vst [vmem:[%s58] sm:$0x3] %v57
  %s60 = scalar_lea.vmem %s1, 14
  %61 = vst [vmem:[%s60] sm:$0x3] %v57
  %s62 = scalar_lea.vmem %s1, 22
  %63 = vst [vmem:[%s62] sm:$0x3] %v57
  %s64 = scalar_lea.vmem %s1, 30
  %65 = vst [vmem:[%s64] sm:$0x3] %v57
  %s66 = scalar_lea.vmem %s1, 38
  %67 = vst [vmem:[%s66] sm:$0x3] %v57
  %s68 = scalar_lea.vmem %s1, 46
  %69 = vst [vmem:[%s68] sm:$0x3] %v57
  %s70 = scalar_lea.vmem %s1, 54
  %71 = vst [vmem:[%s70] sm:$0x3] %v57
  %s72 = scalar_lea.vmem %s1, 62
  %73 = vst [vmem:[%s72] sm:$0x3] %v57

// kernel: tile.24
$region0: #{tile.24}
  %s0 = inlined_call_operand.vmem [shape: f32[2,8,8,4], index: 0, kind: input, shape index: {}]
  %s1 = inlined_call_operand.vmem [shape: f32[16,32], index: 1, kind: output, shape index: {}]
  $region1: #{tile.24} parent=0
    #allocation0 [shape = 'u8[131072]{0}', space=vmem, size = 0x20000, scoped, tag = 'scoped mem for input reshape']
    %s3 = sshll.u32 1, 2
    %s4 = ssub.s32 %s3, 1
    %s5 = smul.addr 2, 31
    %s6 = scalar_lea.vmem %s0, %s5
    %v7 = vld [vmem:[%s6] sm:%s4]
    %s8 = scalar_lea.vmem [#allocation0], 248
    %9 = vst [vmem:[%s8] sm:%s4] %v7
    %s10 = smul.addr 2, 30
    %s11 = scalar_lea.vmem %s0, %s10
    %v12 = vld [vmem:[%s11] sm:%s4]
    %s13 = scalar_lea.vmem [#allocation0], 240
    %14 = vst [vmem:[%s13] sm:%s4] %v12
    %s15 = smul.addr 2, 29
    %s16 = scalar_lea.vmem %s0, %s15
    %v17 = vld [vmem:[%s16] sm:%s4]
    %s18 = scalar_lea.vmem [#allocation0], 232
    %19 = vst [vmem:[%s18] sm:%s4] %v17
    %s20 = smul.addr 2, 28
    %s21 = scalar_lea.vmem %s0, %s20
    %v22 = vld [vmem:[%s21] sm:%s4]
    %s23 = scalar_lea.vmem [#allocation0], 224
    %24 = vst [vmem:[%s23] sm:%s4] %v22
    %s25 = smul.addr 2, 27
    %s26 = scalar_lea.vmem %s0, %s25
    %v27 = vld [vmem:[%s26] sm:%s4]
    %s28 = scalar_lea.vmem [#allocation0], 216
    %29 = vst [vmem:[%s28] sm:%s4] %v27
    %s30 = smul.addr 2, 26
    %s31 = scalar_lea.vmem %s0, %s30
    %v32 = vld [vmem:[%s31] sm:%s4]
    %s33 = scalar_lea.vmem [#allocation0], 208
    %34 = vst [vmem:[%s33] sm:%s4] %v32
    %s35 = smul.addr 2, 25
    %s36 = scalar_lea.vmem %s0, %s35
    %v37 = vld [vmem:[%s36] sm:%s4]
    %s38 = scalar_lea.vmem [#allocation0], 200
    %39 = vst [vmem:[%s38] sm:%s4] %v37
    %s40 = smul.addr 2, 24
    %s41 = scalar_lea.vmem %s0, %s40
    %v42 = vld [vmem:[%s41] sm:%s4]
    %s43 = scalar_lea.vmem [#allocation0], 192
    %44 = vst [vmem:[%s43] sm:%s4] %v42
    %s45 = smul.addr 2, 23
    %s46 = scalar_lea.vmem %s0, %s45
    %v47 = vld [vmem:[%s46] sm:%s4]
    %s48 = scalar_lea.vmem [#allocation0], 184
    %49 = vst [vmem:[%s48] sm:%s4] %v47
    %s50 = smul.addr 2, 22
    %s51 = scalar_lea.vmem %s0, %s50
    %v52 = vld [vmem:[%s51] sm:%s4]
    %s53 = scalar_lea.vmem [#allocation0], 176
    %54 = vst [vmem:[%s53] sm:%s4] %v52
    %s55 = smul.addr 2, 21
    %s56 = scalar_lea.vmem %s0, %s55
    %v57 = vld [vmem:[%s56] sm:%s4]
    %s58 = scalar_lea.vmem [#allocation0], 168
    %59 = vst [vmem:[%s58] sm:%s4] %v57
    %s60 = smul.addr 2, 20
    %s61 = scalar_lea.vmem %s0, %s60
    %v62 = vld [vmem:[%s61] sm:%s4]
    %s63 = scalar_lea.vmem [#allocation0], 160
    %64 = vst [vmem:[%s63] sm:%s4] %v62
    %s65 = smul.addr 2, 19
    %s66 = scalar_lea.vmem %s0, %s65
    %v67 = vld [vmem:[%s66] sm:%s4]
    %s68 = scalar_lea.vmem [#allocation0], 152
    %69 = vst [vmem:[%s68] sm:%s4] %v67
    %s70 = smul.addr 2, 18
    %s71 = scalar_lea.vmem %s0, %s70
    %v72 = vld [vmem:[%s71] sm:%s4]
    %s73 = scalar_lea.vmem [#allocation0], 144
    %74 = vst [vmem:[%s73] sm:%s4] %v72
    %s75 = smul.addr 2, 17
    %s76 = scalar_lea.vmem %s0, %s75
    %v77 = vld [vmem:[%s76] sm:%s4]
    %s78 = scalar_lea.vmem [#allocation0], 136
    %79 = vst [vmem:[%s78] sm:%s4] %v77
    %s80 = smul.addr 2, 16
    %s81 = scalar_lea.vmem %s0, %s80
    %v82 = vld [vmem:[%s81] sm:%s4]
    %s83 = scalar_lea.vmem [#allocation0], 128
    %84 = vst [vmem:[%s83] sm:%s4] %v82
    %s85 = smul.addr 2, 15
    %s86 = scalar_lea.vmem %s0, %s85
    %v87 = vld [vmem:[%s86] sm:%s4]
    %s88 = scalar_lea.vmem [#allocation0], 120
    %89 = vst [vmem:[%s88] sm:%s4] %v87
    %s90 = smul.addr 2, 14
    %s91 = scalar_lea.vmem %s0, %s90
    %v92 = vld [vmem:[%s91] sm:%s4]
    %s93 = scalar_lea.vmem [#allocation0], 112
    %94 = vst [vmem:[%s93] sm:%s4] %v92
    %s95 = smul.addr 2, 13
    %s96 = scalar_lea.vmem %s0, %s95
    %v97 = vld [vmem:[%s96] sm:%s4]
    %s98 = scalar_lea.vmem [#allocation0], 104
    %99 = vst [vmem:[%s98] sm:%s4] %v97
    %s100 = smul.addr 2, 12
    %s101 = scalar_lea.vmem %s0, %s100
    %v102 = vld [vmem:[%s101] sm:%s4]
    %s103 = scalar_lea.vmem [#allocation0], 96
    %104 = vst [vmem:[%s103] sm:%s4] %v102
    %s105 = smul.addr 2, 11
    %s106 = scalar_lea.vmem %s0, %s105
    %v107 = vld [vmem:[%s106] sm:%s4]
    %s108 = scalar_lea.vmem [#allocation0], 88
    %109 = vst [vmem:[%s108] sm:%s4] %v107
    %s110 = smul.addr 2, 10
    %s111 = scalar_lea.vmem %s0, %s110
    %v112 = vld [vmem:[%s111] sm:%s4]
    %s113 = scalar_lea.vmem [#allocation0], 80
    %114 = vst [vmem:[%s113] sm:%s4] %v112
    %s115 = smul.addr 2, 9
    %s116 = scalar_lea.vmem %s0, %s115
    %v117 = vld [vmem:[%s116] sm:%s4]
    %s118 = scalar_lea.vmem [#allocation0], 72
    %119 = vst [vmem:[%s118] sm:%s4] %v117
    %s120 = smul.addr 2, 8
    %s121 = scalar_lea.vmem %s0, %s120
    %v122 = vld [vmem:[%s121] sm:%s4]
    %s123 = scalar_lea.vmem [#allocation0], 64
    %124 = vst [vmem:[%s123] sm:%s4] %v122
    %s125 = smul.addr 2, 7
    %s126 = scalar_lea.vmem %s0, %s125
    %v127 = vld [vmem:[%s126] sm:%s4]
    %s128 = scalar_lea.vmem [#allocation0], 56
    %129 = vst [vmem:[%s128] sm:%s4] %v127
    %s130 = smul.addr 2, 6
    %s131 = scalar_lea.vmem %s0, %s130
    %v132 = vld [vmem:[%s131] sm:%s4]
    %s133 = scalar_lea.vmem [#allocation0], 48
    %134 = vst [vmem:[%s133] sm:%s4] %v132
    %s135 = smul.addr 2, 5
    %s136 = scalar_lea.vmem %s0, %s135
    %v137 = vld [vmem:[%s136] sm:%s4]
    %s138 = scalar_lea.vmem [#allocation0], 40
    %139 = vst [vmem:[%s138] sm:%s4] %v137
    %s140 = smul.addr 2, 4
    %s141 = scalar_lea.vmem %s0, %s140
    %v142 = vld [vmem:[%s141] sm:%s4]
    %s143 = scalar_lea.vmem [#allocation0], 32
    %144 = vst [vmem:[%s143] sm:%s4] %v142
    %s145 = smul.addr 2, 3
    %s146 = scalar_lea.vmem %s0, %s145
    %v147 = vld [vmem:[%s146] sm:%s4]
    %s148 = scalar_lea.vmem [#allocation0], 24
    %149 = vst [vmem:[%s148] sm:%s4] %v147
    %s150 = smul.addr 2, 2
    %s151 = scalar_lea.vmem %s0, %s150
    %v152 = vld [vmem:[%s151] sm:%s4]
    %s153 = scalar_lea.vmem [#allocation0], 16
    %154 = vst [vmem:[%s153] sm:%s4] %v152
    %s155 = scalar_lea.vmem %s0, 2
    %v156 = vld [vmem:[%s155] sm:%s4]
    %s157 = scalar_lea.vmem [#allocation0], 8
    %158 = vst [vmem:[%s157] sm:%s4] %v156
    %v159 = vld [vmem:[%s0] sm:%s4]
    %160 = vst [vmem:[#allocation0] sm:%s4] %v159
    %v161 = vld [vmem:[#allocation0] ss:$8 sm:$0xf]
    %v162 = vld [vmem:[#allocation0] ss:$8 sm:$0xf0]
    %vm163 = vcmask 1047556
    %v164 = vsel %vm163, %v162, %v161
    %vm165 = vcmask 64512
    %166 = vst.msk [vmem:[%s1] sm:$0xff] %vm165, %v164
    %s167 = scalar_lea.vmem [#allocation0], 64
    %v168 = vld [vmem:[%s167] ss:$8 sm:$0xf]
    %s169 = scalar_lea.vmem [#allocation0], 64
    %v170 = vld [vmem:[%s169] ss:$8 sm:$0xf0]
    %vm171 = vcmask 1047556
    %v172 = vsel %vm171, %v170, %v168
    %vm173 = vcmask 64512
    %s174 = scalar_lea.vmem %s1, 8
    %175 = vst.msk [vmem:[%s174] sm:$0xff] %vm173, %v172
    %s176 = scalar_lea.vmem [#allocation0], 128
    %v177 = vld [vmem:[%s176] ss:$8 sm:$0xf]
    %s178 = scalar_lea.vmem [#allocation0], 128
    %v179 = vld [vmem:[%s178] ss:$8 sm:$0xf0]
    %vm180 = vcmask 1047556
    %v181 = vsel %vm180, %v179, %v177
    %vm182 = vcmask 64512
    %s183 = scalar_lea.vmem %s1, 16
    %184 = vst.msk [vmem:[%s183] sm:$0xff] %vm182, %v181
    %s185 = scalar_lea.vmem [#allocation0], 192
    %v186 = vld [vmem:[%s185] ss:$8 sm:$0xf]
    %s187 = scalar_lea.vmem [#allocation0], 192
    %v188 = vld [vmem:[%s187] ss:$8 sm:$0xf0]
    %vm189 = vcmask 1047556
    %v190 = vsel %vm189, %v188, %v186
    %vm191 = vcmask 64512
    %s192 = scalar_lea.vmem %s1, 24
    %193 = vst.msk [vmem:[%s192] sm:$0xff] %vm191, %v190
    %s194 = scalar_lea.vmem [#allocation0], 1
    %v195 = vld [vmem:[%s194] ss:$8 sm:$0xf]
    %s196 = scalar_lea.vmem [#allocation0], 1
    %v197 = vld [vmem:[%s196] ss:$8 sm:$0xf0]
    %vm198 = vcmask 1047556
    %v199 = vsel %vm198, %v197, %v195
    %200 = vrot.lane.b32.xlu0 %v199, 8
    %v201 = vpop.permute.xlu0 %200
    %vm202 = vcmask 130112
    %203 = vst.msk [vmem:[%s1] sm:$0xff] %vm202, %v201
    %s204 = scalar_lea.vmem [#allocation0], 65
    %v205 = vld [vmem:[%s204] ss:$8 sm:$0xf]
    %s206 = scalar_lea.vmem [#allocation0], 65
    %v207 = vld [vmem:[%s206] ss:$8 sm:$0xf0]
    %vm208 = vcmask 1047556
    %v209 = vsel %vm208, %v207, %v205
    %210 = vrot.lane.b32.xlu0 %v209, 8
    %v211 = vpop.permute.xlu0 %210
    %vm212 = vcmask 130112
    %s213 = scalar_lea.vmem %s1, 8
    %214 = vst.msk [vmem:[%s213] sm:$0xff] %vm212, %v211
    %s215 = scalar_lea.vmem [#allocation0], 129
    %v216 = vld [vmem:[%s215] ss:$8 sm:$0xf]
    %s217 = scalar_lea.vmem [#allocation0], 129
    %v218 = vld [vmem:[%s217] ss:$8 sm:$0xf0]
    %vm219 = vcmask 1047556
    %v220 = vsel %vm219, %v218, %v216
    %221 = vrot.lane.b32.xlu0 %v220, 8
    %v222 = vpop.permute.xlu0 %221
    %vm223 = vcmask 130112
    %s224 = scalar_lea.vmem %s1, 16
    %225 = vst.msk [vmem:[%s224] sm:$0xff] %vm223, %v222
    %s226 = scalar_lea.vmem [#allocation0], 193
    %v227 = vld [vmem:[%s226] ss:$8 sm:$0xf]
    %s228 = scalar_lea.vmem [#allocation0], 193
    %v229 = vld [vmem:[%s228] ss:$8 sm:$0xf0]
    %vm230 = vcmask 1047556
    %v231 = vsel %vm230, %v229, %v227
    %232 = vrot.lane.b32.xlu0 %v231, 8
    %v233 = vpop.permute.xlu0 %232
    %vm234 = vcmask 130112
    %s235 = scalar_lea.vmem %s1, 24
    %236 = vst.msk [vmem:[%s235] sm:$0xff] %vm234, %v233

// kernel: simple_transformer_forward.1
$region0: #{simple_transformer_forward.1}
  #allocation0 [shape = 'u32[]', space=smem, size = 0x4, offset = 0x4, fixed_abs, tag = 'smem constant byte address 0x4 - core index']
  #allocation1 [shape = 'u32[144,128]{1,0:T(1,128)}', space=vmem, size = 0x12000, scoped, tag = 'internal scratch']
  %s0 = inlined_call_operand.vmem [shape: f32[16,1], index: 0, kind: input, shape index: {}]
  %s1 = inlined_call_operand.vmem [shape: f32[16,32], index: 1, kind: input, shape index: {}]
  %s2 = inlined_call_operand.vmem [shape: f32[16,32], index: 2, kind: input, shape index: {}]
  %s3 = inlined_call_operand.vmem [shape: f32[32,32], index: 3, kind: input, shape index: {}]
  %s4 = inlined_call_operand.vmem [shape: f32[128,32], index: 4, kind: input, shape index: {}]
  %s5 = inlined_call_operand.vmem [shape: f32[128,16], index: 5, kind: input, shape index: {}]
  %s6 = inlined_call_operand.vmem [shape: f32[1,32], index: 6, kind: input, shape index: {}]
  %s7 = inlined_call_operand.vmem [shape: f32[1,32], index: 7, kind: input, shape index: {}]
  %s8 = inlined_call_operand.vmem [shape: f32[2,1,32], index: 8, kind: input, shape index: {}]
  %s9 = inlined_call_operand.vmem [shape: f32[2,1,32], index: 9, kind: input, shape index: {}]
  %s10 = inlined_call_operand.vmem [shape: f32[2,32,64], index: 10, kind: input, shape index: {}]
  %s11 = inlined_call_operand.vmem [shape: f32[2,32,32], index: 11, kind: input, shape index: {}]
  %s12 = inlined_call_operand.vmem [shape: f32[2,1,32], index: 12, kind: input, shape index: {}]
  %s13 = inlined_call_operand.vmem [shape: f32[2,1,32], index: 13, kind: input, shape index: {}]
  %s14 = inlined_call_operand.vmem [shape: f32[2,1,32], index: 14, kind: input, shape index: {}]
  %s15 = inlined_call_operand.vmem [shape: f32[2,32,128], index: 15, kind: input, shape index: {}]
  %s16 = inlined_call_operand.vmem [shape: f32[2,1,128], index: 16, kind: input, shape index: {}]
  %s17 = inlined_call_operand.vmem [shape: f32[2,128,32], index: 17, kind: input, shape index: {}]
  %s18 = inlined_call_operand.vmem [shape: f32[2,1,32], index: 18, kind: input, shape index: {}]
  %s19 = inlined_call_operand.vmem [shape: f32[1,32], index: 19, kind: input, shape index: {}]
  %s20 = inlined_call_operand.vmem [shape: f32[1,32], index: 20, kind: input, shape index: {}]
  %s21 = inlined_call_operand.vmem [shape: f32[32,128], index: 21, kind: input, shape index: {}]
  %s22 = inlined_call_operand.vmem [shape: f32[1,128], index: 22, kind: input, shape index: {}]
  %s23 = inlined_call_operand.vmem [shape: f32[16,128], index: 23, kind: output, shape index: {0}]
  %s24 = inlined_call_operand.vmem [shape: f32[16,128], index: 24, kind: output, shape index: {1}]
  %25 = xla_tuple %s23, %s24
  %s26 = sld [smem:[#allocation0]]
  $region110: #{simple_transformer_forward.1} parent=0
    _
  %s28 = ssub.s32 1, %s26
  %s29 = scalar_select 0, %s28, %s26
  // Predicated region
  $region2: #{simple_transformer_forward.1} parent=0 // pred_check
    _
  $region3: #{simple_transformer_forward.1} parent=0 // pred_check_branch
    %31 = sbr.rel (0) target = $region5
  $region4: #{simple_transformer_forward.1} parent=0 // pred_region
    _
  $region5: #{simple_transformer_forward.1} parent=0 // pred_fallthru
    _
  // Predicated region
  $region6: #{simple_transformer_forward.1} parent=0 // pred_check
    _
  $region7: #{simple_transformer_forward.1} parent=0 // pred_check_branch
    %33 = sbr.rel (0) target = $region9
  $region8: #{simple_transformer_forward.1} parent=0 // pred_region
    _
  $region9: #{simple_transformer_forward.1} parent=0 // pred_fallthru
    _
  // Predicated region
  $region10: #{simple_transformer_forward.1} parent=0 // pred_check
    _
  $region11: #{simple_transformer_forward.1} parent=0 // pred_check_branch
    %35 = sbr.rel (0) target = $region13
  $region12: #{simple_transformer_forward.1} parent=0 // pred_region
    _
  $region13: #{simple_transformer_forward.1} parent=0 // pred_fallthru
    _
  // Predicated region
  $region14: #{simple_transformer_forward.1} parent=0 // pred_check
    _
  $region15: #{simple_transformer_forward.1} parent=0 // pred_check_branch
    %37 = sbr.rel (0) target = $region17
  $region16: #{simple_transformer_forward.1} parent=0 // pred_region
    _
  $region17: #{simple_transformer_forward.1} parent=0 // pred_fallthru
    _
  // Predicated region
  $region18: #{simple_transformer_forward.1} parent=0 // pred_check
    _
  $region19: #{simple_transformer_forward.1} parent=0 // pred_check_branch
    %39 = sbr.rel (0) target = $region21
  $region20: #{simple_transformer_forward.1} parent=0 // pred_region
    _
  $region21: #{simple_transformer_forward.1} parent=0 // pred_fallthru
    _
  // Predicated region
  $region22: #{simple_transformer_forward.1} parent=0 // pred_check
    _
  $region23: #{simple_transformer_forward.1} parent=0 // pred_check_branch
    %41 = sbr.rel (0) target = $region25
  $region24: #{simple_transformer_forward.1} parent=0 // pred_region
    _
  $region25: #{simple_transformer_forward.1} parent=0 // pred_fallthru
    _
  // Predicated region
  $region26: #{simple_transformer_forward.1} parent=0 // pred_check
    _
  $region27: #{simple_transformer_forward.1} parent=0 // pred_check_branch
    %43 = sbr.rel (0) target = $region29
  $region28: #{simple_transformer_forward.1} parent=0 // pred_region
    _
  $region29: #{simple_transformer_forward.1} parent=0 // pred_fallthru
    _
  // Predicated region
  $region30: #{simple_transformer_forward.1} parent=0 // pred_check
    _
  $region31: #{simple_transformer_forward.1} parent=0 // pred_check_branch
    %45 = sbr.rel (0) target = $region33
  $region32: #{simple_transformer_forward.1} parent=0 // pred_region
    _
  $region33: #{simple_transformer_forward.1} parent=0 // pred_fallthru
    _
  // Predicated region
  $region34: #{simple_transformer_forward.1} parent=0 // pred_check
    _
  $region35: #{simple_transformer_forward.1} parent=0 // pred_check_branch
    %47 = sbr.rel (0) target = $region37
  $region36: #{simple_transformer_forward.1} parent=0 // pred_region
    _
  $region37: #{simple_transformer_forward.1} parent=0 // pred_fallthru
    _
  // Predicated region
  $region38: #{simple_transformer_forward.1} parent=0 // pred_check
    _
  $region39: #{simple_transformer_forward.1} parent=0 // pred_check_branch
    %49 = sbr.rel (0) target = $region41
  $region40: #{simple_transformer_forward.1} parent=0 // pred_region
    _
  $region41: #{simple_transformer_forward.1} parent=0 // pred_fallthru
    _
  // Predicated region
  $region42: #{simple_transformer_forward.1} parent=0 // pred_check
    _
  $region43: #{simple_transformer_forward.1} parent=0 // pred_check_branch
    %51 = sbr.rel (0) target = $region45
  $region44: #{simple_transformer_forward.1} parent=0 // pred_region
    _
  $region45: #{simple_transformer_forward.1} parent=0 // pred_fallthru
    _
  // Predicated region
  $region46: #{simple_transformer_forward.1} parent=0 // pred_check
    _
  $region47: #{simple_transformer_forward.1} parent=0 // pred_check_branch
    %53 = sbr.rel (0) target = $region49
  $region48: #{simple_transformer_forward.1} parent=0 // pred_region
    _
  $region49: #{simple_transformer_forward.1} parent=0 // pred_fallthru
    _
  // Predicated region
  $region50: #{simple_transformer_forward.1} parent=0 // pred_check
    _
  $region51: #{simple_transformer_forward.1} parent=0 // pred_check_branch
    %55 = sbr.rel (0) target = $region53
  $region52: #{simple_transformer_forward.1} parent=0 // pred_region
    _
  $region53: #{simple_transformer_forward.1} parent=0 // pred_fallthru
    _
  // Predicated region
  $region54: #{simple_transformer_forward.1} parent=0 // pred_check
    _
  $region55: #{simple_transformer_forward.1} parent=0 // pred_check_branch
    %57 = sbr.rel (0) target = $region57
  $region56: #{simple_transformer_forward.1} parent=0 // pred_region
    _
  $region57: #{simple_transformer_forward.1} parent=0 // pred_fallthru
    _
  // Predicated region
  $region58: #{simple_transformer_forward.1} parent=0 // pred_check
    _
  $region59: #{simple_transformer_forward.1} parent=0 // pred_check_branch
    %59 = sbr.rel (0) target = $region61
  $region60: #{simple_transformer_forward.1} parent=0 // pred_region
    _
  $region61: #{simple_transformer_forward.1} parent=0 // pred_fallthru
    _
  // Predicated region
  $region62: #{simple_transformer_forward.1} parent=0 // pred_check
    _
  $region63: #{simple_transformer_forward.1} parent=0 // pred_check_branch
    %61 = sbr.rel (0) target = $region65
  $region64: #{simple_transformer_forward.1} parent=0 // pred_region
    _
  $region65: #{simple_transformer_forward.1} parent=0 // pred_fallthru
    _
  // Predicated region
  $region66: #{simple_transformer_forward.1} parent=0 // pred_check
    _
  $region67: #{simple_transformer_forward.1} parent=0 // pred_check_branch
    %63 = sbr.rel (0) target = $region69
  $region68: #{simple_transformer_forward.1} parent=0 // pred_region
    _
  $region69: #{simple_transformer_forward.1} parent=0 // pred_fallthru
    _
  // Predicated region
  $region70: #{simple_transformer_forward.1} parent=0 // pred_check
    _
  $region71: #{simple_transformer_forward.1} parent=0 // pred_check_branch
    %65 = sbr.rel (0) target = $region73
  $region72: #{simple_transformer_forward.1} parent=0 // pred_region
    _
  $region73: #{simple_transformer_forward.1} parent=0 // pred_fallthru
    _
  // Predicated region
  $region74: #{simple_transformer_forward.1} parent=0 // pred_check
    _
  $region75: #{simple_transformer_forward.1} parent=0 // pred_check_branch
    %67 = sbr.rel (0) target = $region77
  $region76: #{simple_transformer_forward.1} parent=0 // pred_region
    _
  $region77: #{simple_transformer_forward.1} parent=0 // pred_fallthru
    _
  // Predicated region
  $region78: #{simple_transformer_forward.1} parent=0 // pred_check
    _
  $region79: #{simple_transformer_forward.1} parent=0 // pred_check_branch
    %69 = sbr.rel (0) target = $region81
  $region80: #{simple_transformer_forward.1} parent=0 // pred_region
    _
  $region81: #{simple_transformer_forward.1} parent=0 // pred_fallthru
    _
  // Predicated region
  $region82: #{simple_transformer_forward.1} parent=0 // pred_check
    _
  $region83: #{simple_transformer_forward.1} parent=0 // pred_check_branch
    %71 = sbr.rel (0) target = $region85
  $region84: #{simple_transformer_forward.1} parent=0 // pred_region
    _
  $region85: #{simple_transformer_forward.1} parent=0 // pred_fallthru
    _
  // Predicated region
  $region86: #{simple_transformer_forward.1} parent=0 // pred_check
    _
  $region87: #{simple_transformer_forward.1} parent=0 // pred_check_branch
    %73 = sbr.rel (0) target = $region89
  $region88: #{simple_transformer_forward.1} parent=0 // pred_region
    _
  $region89: #{simple_transformer_forward.1} parent=0 // pred_fallthru
    _
  // Predicated region
  $region90: #{simple_transformer_forward.1} parent=0 // pred_check
    _
  $region91: #{simple_transformer_forward.1} parent=0 // pred_check_branch
    %75 = sbr.rel (0) target = $region93
  $region92: #{simple_transformer_forward.1} parent=0 // pred_region
    _
  $region93: #{simple_transformer_forward.1} parent=0 // pred_fallthru
    _
  %v76 = vld [vmem:[%s0] sm:$0xff]
  %v77 = vld [vmem:[%s0 + $0x8] sm:$0xff]
  %v78 = vld [vmem:[%s6] sm:$0x1]
  %80 = vset.pattern.permute.xlu0 0
  %81 = vperm.xlu0 %80, %v76
  %v82 = vpop.permute.xlu0 %81
  %85 = vset.pattern.permute.xlu0 0
  %86 = vperm.xlu0 %85, %v77
  %v87 = vpop.permute.xlu0 %86
  %v90 = vlaneseq
  %v91 = vshrl.u32 %v90, 7
  %v92 = vsub.s32 0, %v91
  %v93 = vrot.slane %v78, %v92
  %v95 = vmul.f32 %v82, %v93
  %v96 = vmul.f32 %v87, %v93
  %v97 = vld [vmem:[%s7] sm:$0x1]
  %v99 = vlaneseq
  %v100 = vshrl.u32 %v99, 7
  %v101 = vsub.s32 0, %v100
  %v102 = vrot.slane %v97, %v101
  %v104 = vadd.f32 %v95, %v102
  %v105 = vadd.f32 %v96, %v102
  %v106 = vld [vmem:[%s1] sm:$0xff]
  %v107 = vld [vmem:[%s1 + $0x8] sm:$0xff]
  %v108 = vld [vmem:[%s2] sm:$0xff]
  %v109 = vld [vmem:[%s2 + $0x8] sm:$0xff]
  %v110 = vld [vmem:[%s4] sm:$0xff]
  %v111 = vld [vmem:[%s4 + $0x8] sm:$0xff]
  %v112 = vld [vmem:[%s4 + $0x10] sm:$0xff]
  %v113 = vld [vmem:[%s4 + $0x18] sm:$0xff]
  %v114 = vld [vmem:[%s4 + $0x20] sm:$0xff]
  %v115 = vld [vmem:[%s4 + $0x28] sm:$0xff]
  %v116 = vld [vmem:[%s4 + $0x30] sm:$0xff]
  %v117 = vld [vmem:[%s4 + $0x38] sm:$0xff]
  %v118 = vld [vmem:[%s4 + $0x40] sm:$0xff]
  %v119 = vld [vmem:[%s4 + $0x48] sm:$0xff]
  %v120 = vld [vmem:[%s4 + $0x50] sm:$0xff]
  %v121 = vld [vmem:[%s4 + $0x58] sm:$0xff]
  %v122 = vld [vmem:[%s4 + $0x60] sm:$0xff]
  %v123 = vld [vmem:[%s4 + $0x68] sm:$0xff]
  %v124 = vld [vmem:[%s4 + $0x70] sm:$0xff]
  %v125 = vld [vmem:[%s4 + $0x78] sm:$0xff]
  %v126 = vld [vmem:[%s5] sm:$0xff]
  %v127 = vld [vmem:[%s5 + $0x8] sm:$0xff]
  %v128 = vld [vmem:[%s5 + $0x10] sm:$0xff]
  %v129 = vld [vmem:[%s5 + $0x18] sm:$0xff]
  %v130 = vld [vmem:[%s5 + $0x20] sm:$0xff]
  %v131 = vld [vmem:[%s5 + $0x28] sm:$0xff]
  %v132 = vld [vmem:[%s5 + $0x30] sm:$0xff]
  %v133 = vld [vmem:[%s5 + $0x38] sm:$0xff]
  %v134 = vld [vmem:[%s5 + $0x40] sm:$0xff]
  %v135 = vld [vmem:[%s5 + $0x48] sm:$0xff]
  %v136 = vld [vmem:[%s5 + $0x50] sm:$0xff]
  %v137 = vld [vmem:[%s5 + $0x58] sm:$0xff]
  %v138 = vld [vmem:[%s5 + $0x60] sm:$0xff]
  %v139 = vld [vmem:[%s5 + $0x68] sm:$0xff]
  %v140 = vld [vmem:[%s5 + $0x70] sm:$0xff]
  %v141 = vld [vmem:[%s5 + $0x78] sm:$0xff]
  %v142 = vld [vmem:[%s8] sm:$0x1]
  %v143 = vld [vmem:[%s9] sm:$0x1]
  %vm144 = vcmask 261120
  %v145 = vsel %vm144, %v104, 0.0
  %146 = vadd.xlane.f32.xlu0 %v145
  %v147 = vpop.xlane.xlu0 %146
  %v148 = vsel %vm144, %v105, 0.0
  %149 = vadd.xlane.f32.xlu0 %v148
  %v150 = vpop.xlane.xlu0 %149
  %v151 = vrcp.pop 32.0
  %v152 = vmul.f32 %v147, %v151
  %v153 = vmul.f32 %v150, %v151
  %v154 = vsub.f32 %v104, %v152
  %v155 = vsub.f32 %v105, %v153
  %v156 = vmul.f32 %v154, %v154
  %v157 = vmul.f32 %v155, %v155
  %v158 = vsel %vm144, %v156, 0.0
  %159 = vadd.xlane.f32.xlu0 %v158
  %v160 = vpop.xlane.xlu0 %159
  %v161 = vsel %vm144, %v157, 0.0
  %162 = vadd.xlane.f32.xlu0 %v161
  %v163 = vpop.xlane.xlu0 %162
  %v164 = vmul.f32 %v160, %v151
  %v165 = vmul.f32 %v163, %v151
  %v166 = vadd.f32 %v164, 1e-05
  %v167 = vadd.f32 %v165, 1e-05
  %v168 = vrsqrt.pop %v166
  %v169 = vrsqrt.pop %v167
  %v170 = vmul.f32 %v154, %v168
  %v171 = vmul.f32 %v155, %v169
  %v173 = vlaneseq
  %v174 = vshrl.u32 %v173, 7
  %v175 = vsub.s32 0, %v174
  %v176 = vrot.slane %v142, %v175
  %v178 = vmul.f32 %v170, %v176
  %v179 = vmul.f32 %v171, %v176
  %v181 = vlaneseq
  %v182 = vshrl.u32 %v181, 7
  %v183 = vsub.s32 0, %v182
  %v184 = vrot.slane %v143, %v183
  %v186 = vadd.f32 %v178, %v184
  %v187 = vadd.f32 %v179, %v184
  %v188 = vld [vmem:[%s10] sm:$0xff]
  %v189 = vld [vmem:[%s10 + $0x8] sm:$0xff]
  %v190 = vld [vmem:[%s10 + $0x10] sm:$0xff]
  %v191 = vld [vmem:[%s10 + $0x18] sm:$0xff]
  %v193 = vsel %vm144, %v186, 0
  %v196 = vsel %vm144, %v187, 0
  %198 = vmatprep.subr.mxu0 0.0
  %199 = vmatpush1.msra.mxu0 0.0
  %200 = vmatprep.subr.mxu0 0.0
  %201 = vmatpush1.msra.mxu0 0.0
  %202 = vmatprep.subr.mxu0 0.0
  %203 = vmatpush1.msra.mxu0 0.0
  %204 = vmatprep.subr.mxu0 0.0
  %205 = vmatpush1.msra.mxu0 0.0
  %206 = vmatprep.subr.mxu0 0.0
  %207 = vmatpush1.msra.mxu0 0.0
  %208 = vmatprep.subr.mxu0 0.0
  %209 = vmatpush1.msra.mxu0 0.0
  %210 = vmatprep.subr.mxu0 0.0
  %211 = vmatpush1.msra.mxu0 0.0
  %212 = vmatprep.subr.mxu0 0.0
  %213 = vmatpush1.msra.mxu0 0.0
  %214 = vmatprep.subr.mxu0 0.0
  %215 = vmatpush1.msra.mxu0 0.0
  %216 = vmatprep.subr.mxu0 0.0
  %217 = vmatpush1.msra.mxu0 0.0
  %218 = vmatprep.subr.mxu0 0.0
  %219 = vmatpush1.msra.mxu0 0.0
  %220 = vmatprep.subr.mxu0 0.0
  %221 = vmatpush1.msra.mxu0 0.0
  %222 = vmatprep.subr.mxu0 0.0
  %223 = vmatpush1.msra.mxu0 %v191
  %224 = vmatprep.subr.mxu0 0.0
  %225 = vmatpush1.msra.mxu0 %v190
  %226 = vmatprep.subr.mxu0 0.0
  %227 = vmatpush1.msra.mxu0 %v189
  %228 = vmatprep.subr.mxu0 0.0
  %229 = vmatpush1.msra.mxu0 %v188
  %230 = vmatprep.subr.mxu0 0.0
  %231 = vmatpush2.msra.mxu0 0.0
  %232 = vmatprep.subr.mxu0 0.0
  %233 = vmatpush2.msra.mxu0 0.0
  %234 = vmatprep.subr.mxu0 0.0
  %235 = vmatpush2.msra.mxu0 0.0
  %236 = vmatprep.subr.mxu0 0.0
  %237 = vmatpush2.msra.mxu0 0.0
  %238 = vmatprep.subr.mxu0 0.0
  %239 = vmatpush2.msra.mxu0 0.0
  %240 = vmatprep.subr.mxu0 0.0
  %241 = vmatpush2.msra.mxu0 0.0
  %242 = vmatprep.subr.mxu0 0.0
  %243 = vmatpush2.msra.mxu0 0.0
  %244 = vmatprep.subr.mxu0 0.0
  %245 = vmatpush2.msra.mxu0 0.0
  %246 = vmatprep.subr.mxu0 0.0
  %247 = vmatpush2.msra.mxu0 0.0
  %248 = vmatprep.subr.mxu0 0.0
  %249 = vmatpush2.msra.mxu0 0.0
  %250 = vmatprep.subr.mxu0 0.0
  %251 = vmatpush2.msra.mxu0 0.0
  %252 = vmatprep.subr.mxu0 0.0
  %253 = vmatpush2.msra.mxu0 0.0
  %254 = vmatprep.subr.mxu0 0.0
  %255 = vmatpush2.msra.mxu0 0.0
  %256 = vmatprep.subr.mxu0 0.0
  %257 = vmatpush2.msra.mxu0 0.0
  %258 = vmatprep.subr.mxu0 0.0
  %259 = vmatpush2.msra.mxu0 0.0
  %260 = vmatprep.subr.mxu0 0.0
  %261 = vmatpush2.msra.mxu0 0.0
  %262 = vmatprep.mubr.f32.mxu0 0.0
  %263 = vmatmul.mubr.f32.gmra.mxu0 %v193
  %v264 = vpop.f32.mrf.mxu0
  %v265 = vadd.f32 0.0, %v264
  %v266 = vpop.f32.mrf.mxu0
  %267 = vmatprep.mubr.f32.mxu0 0.0
  %268 = vmatmul.mubr.f32.gmra.mxu0 %v196
  %v269 = vpop.f32.mrf.mxu0
  %v270 = vadd.f32 0.0, %v269
  %v271 = vpop.f32.mrf.mxu0
  %272 = vdwg.mxu0
  %v273 = vmul.f32 %v265, 0.5
  %v274 = vmul.f32 %v270, 0.5
  %v275 = vld [vmem:[%s3] sm:$0xff]
  %v276 = vld [vmem:[%s3 + $0x8] sm:$0xff]
  %v277 = vld [vmem:[%s3 + $0x10] sm:$0xff]
  %v278 = vld [vmem:[%s3 + $0x18] sm:$0xff]
  %v279 = vmul.f32 %v273, %v106
  %v280 = vmul.f32 %v274, %v107
  %v282 = vsel %vm144, %v273, 0
  %v285 = vsel %vm144, %v274, 0
  %287 = vmatprep.subr.mxu0 0.0
  %288 = vmatpush1.msra.mxu0 0.0
  %289 = vmatprep.subr.mxu0 0.0
  %290 = vmatpush1.msra.mxu0 0.0
  %291 = vmatprep.subr.mxu0 0.0
  %292 = vmatpush1.msra.mxu0 0.0
  %293 = vmatprep.subr.mxu0 0.0
  %294 = vmatpush1.msra.mxu0 0.0
  %295 = vmatprep.subr.mxu0 0.0
  %296 = vmatpush1.msra.mxu0 0.0
  %297 = vmatprep.subr.mxu0 0.0
  %298 = vmatpush1.msra.mxu0 0.0
  %299 = vmatprep.subr.mxu0 0.0
  %300 = vmatpush1.msra.mxu0 0.0
  %301 = vmatprep.subr.mxu0 0.0
  %302 = vmatpush1.msra.mxu0 0.0
  %303 = vmatprep.subr.mxu0 0.0
  %304 = vmatpush1.msra.mxu0 0.0
  %305 = vmatprep.subr.mxu0 0.0
  %306 = vmatpush1.msra.mxu0 0.0
  %307 = vmatprep.subr.mxu0 0.0
  %308 = vmatpush1.msra.mxu0 0.0
  %309 = vmatprep.subr.mxu0 0.0
  %310 = vmatpush1.msra.mxu0 0.0
  %311 = vmatprep.subr.mxu0 0.0
  %312 = vmatpush1.msra.mxu0 %v278
  %313 = vmatprep.subr.mxu0 0.0
  %314 = vmatpush1.msra.mxu0 %v277
  %315 = vmatprep.subr.mxu0 0.0
  %316 = vmatpush1.msra.mxu0 %v276
  %317 = vmatprep.subr.mxu0 0.0
  %318 = vmatpush1.msra.mxu0 %v275
  %319 = vmatprep.subr.mxu0 0.0
  %320 = vmatpush2.msra.mxu0 0.0
  %321 = vmatprep.subr.mxu0 0.0
  %322 = vmatpush2.msra.mxu0 0.0
  %323 = vmatprep.subr.mxu0 0.0
  %324 = vmatpush2.msra.mxu0 0.0
  %325 = vmatprep.subr.mxu0 0.0
  %326 = vmatpush2.msra.mxu0 0.0
  %327 = vmatprep.subr.mxu0 0.0
  %328 = vmatpush2.msra.mxu0 0.0
  %329 = vmatprep.subr.mxu0 0.0
  %330 = vmatpush2.msra.mxu0 0.0
  %331 = vmatprep.subr.mxu0 0.0
  %332 = vmatpush2.msra.mxu0 0.0
  %333 = vmatprep.subr.mxu0 0.0
  %334 = vmatpush2.msra.mxu0 0.0
  %335 = vmatprep.subr.mxu0 0.0
  %336 = vmatpush2.msra.mxu0 0.0
  %337 = vmatprep.subr.mxu0 0.0
  %338 = vmatpush2.msra.mxu0 0.0
  %339 = vmatprep.subr.mxu0 0.0
  %340 = vmatpush2.msra.mxu0 0.0
  %341 = vmatprep.subr.mxu0 0.0
  %342 = vmatpush2.msra.mxu0 0.0
  %343 = vmatprep.subr.mxu0 0.0
  %344 = vmatpush2.msra.mxu0 0.0
  %345 = vmatprep.subr.mxu0 0.0
  %346 = vmatpush2.msra.mxu0 0.0
  %347 = vmatprep.subr.mxu0 0.0
  %348 = vmatpush2.msra.mxu0 0.0
  %349 = vmatprep.subr.mxu0 0.0
  %350 = vmatpush2.msra.mxu0 0.0
  %351 = vmatprep.mubr.f32.mxu0 0.0
  %352 = vmatmul.mubr.f32.gmra.mxu0 %v282
  %v353 = vpop.f32.mrf.mxu0
  %v354 = vadd.f32 0.0, %v353
  %v355 = vpop.f32.mrf.mxu0
  %356 = vmatprep.mubr.f32.mxu0 0.0
  %357 = vmatmul.mubr.f32.gmra.mxu0 %v285
  %v358 = vpop.f32.mrf.mxu0
  %v359 = vadd.f32 0.0, %v358
  %v360 = vpop.f32.mrf.mxu0
  %361 = vdwg.mxu0
  %v362 = vmul.f32 %v354, %v108
  %v363 = vmul.f32 %v359, %v109
  %v364 = vadd.f32 %v279, %v362
  %v365 = vadd.f32 %v280, %v363
  %368 = vrot.lane.b32.xlu0 %v106, 32
  %v369 = vpop.permute.xlu0 %368
  %370 = vrot.lane.b32.xlu0 %v107, 32
  %v371 = vpop.permute.xlu0 %370
  %v374 = vmul.f32 %v265, %v369
  %v375 = vmul.f32 %v270, %v371
  %378 = vrot.lane.b32.xlu0 %v265, 96
  %v379 = vpop.permute.xlu0 %378
  %380 = vrot.lane.b32.xlu0 %v270, 96
  %v381 = vpop.permute.xlu0 %380
  %v382 = vsel %vm144, %v379, 0
  %v384 = vsel %vm144, %v381, 0
  %386 = vmatprep.subr.mxu0 0.0
  %387 = vmatpush1.msra.mxu0 0.0
  %388 = vmatprep.subr.mxu0 0.0
  %389 = vmatpush1.msra.mxu0 0.0
  %390 = vmatprep.subr.mxu0 0.0
  %391 = vmatpush1.msra.mxu0 0.0
  %392 = vmatprep.subr.mxu0 0.0
  %393 = vmatpush1.msra.mxu0 0.0
  %394 = vmatprep.subr.mxu0 0.0
  %395 = vmatpush1.msra.mxu0 0.0
  %396 = vmatprep.subr.mxu0 0.0
  %397 = vmatpush1.msra.mxu0 0.0
  %398 = vmatprep.subr.mxu0 0.0
  %399 = vmatpush1.msra.mxu0 0.0
  %400 = vmatprep.subr.mxu0 0.0
  %401 = vmatpush1.msra.mxu0 0.0
  %402 = vmatprep.subr.mxu0 0.0
  %403 = vmatpush1.msra.mxu0 0.0
  %404 = vmatprep.subr.mxu0 0.0
  %405 = vmatpush1.msra.mxu0 0.0
  %406 = vmatprep.subr.mxu0 0.0
  %407 = vmatpush1.msra.mxu0 0.0
  %408 = vmatprep.subr.mxu0 0.0
  %409 = vmatpush1.msra.mxu0 0.0
  %410 = vmatprep.subr.mxu0 0.0
  %411 = vmatpush1.msra.mxu0 %v278
  %412 = vmatprep.subr.mxu0 0.0
  %413 = vmatpush1.msra.mxu0 %v277
  %414 = vmatprep.subr.mxu0 0.0
  %415 = vmatpush1.msra.mxu0 %v276
  %416 = vmatprep.subr.mxu0 0.0
  %417 = vmatpush1.msra.mxu0 %v275
  %418 = vmatprep.subr.mxu0 0.0
  %419 = vmatpush2.msra.mxu0 0.0
  %420 = vmatprep.subr.mxu0 0.0
  %421 = vmatpush2.msra.mxu0 0.0
  %422 = vmatprep.subr.mxu0 0.0
  %423 = vmatpush2.msra.mxu0 0.0
  %424 = vmatprep.subr.mxu0 0.0
  %425 = vmatpush2.msra.mxu0 0.0
  %426 = vmatprep.subr.mxu0 0.0
  %427 = vmatpush2.msra.mxu0 0.0
  %428 = vmatprep.subr.mxu0 0.0
  %429 = vmatpush2.msra.mxu0 0.0
  %430 = vmatprep.subr.mxu0 0.0
  %431 = vmatpush2.msra.mxu0 0.0
  %432 = vmatprep.subr.mxu0 0.0
  %433 = vmatpush2.msra.mxu0 0.0
  %434 = vmatprep.subr.mxu0 0.0
  %435 = vmatpush2.msra.mxu0 0.0
  %436 = vmatprep.subr.mxu0 0.0
  %437 = vmatpush2.msra.mxu0 0.0
  %438 = vmatprep.subr.mxu0 0.0
  %439 = vmatpush2.msra.mxu0 0.0
  %440 = vmatprep.subr.mxu0 0.0
  %441 = vmatpush2.msra.mxu0 0.0
  %442 = vmatprep.subr.mxu0 0.0
  %443 = vmatpush2.msra.mxu0 0.0
  %444 = vmatprep.subr.mxu0 0.0
  %445 = vmatpush2.msra.mxu0 0.0
  %446 = vmatprep.subr.mxu0 0.0
  %447 = vmatpush2.msra.mxu0 0.0
  %448 = vmatprep.subr.mxu0 0.0
  %449 = vmatpush2.msra.mxu0 0.0
  %450 = vmatprep.mubr.f32.mxu0 0.0
  %451 = vmatmul.mubr.f32.gmra.mxu0 %v382
  %v452 = vpop.f32.mrf.mxu0
  %v453 = vadd.f32 0.0, %v452
  %v454 = vpop.f32.mrf.mxu0
  %455 = vmatprep.mubr.f32.mxu0 0.0
  %456 = vmatmul.mubr.f32.gmra.mxu0 %v384
  %v457 = vpop.f32.mrf.mxu0
  %v458 = vadd.f32 0.0, %v457
  %v459 = vpop.f32.mrf.mxu0
  %460 = vdwg.mxu0
  %v461 = vmul.f32 %v453, %v108
  %v462 = vmul.f32 %v458, %v109
  %465 = vrot.lane.b32.xlu0 %v461, 32
  %v466 = vpop.permute.xlu0 %465
  %467 = vrot.lane.b32.xlu0 %v462, 32
  %v468 = vpop.permute.xlu0 %467
  %v471 = vadd.f32 %v374, %v466
  %v472 = vadd.f32 %v375, %v468
  %v473 = vmul.f32 %v364, %v110
  %v474 = vmul.f32 %v365, %v111
  %v475 = vmul.f32 %v364, %v112
  %v476 = vmul.f32 %v365, %v113
  %v477 = vmul.f32 %v364, %v114
  %v478 = vmul.f32 %v365, %v115
  %v479 = vmul.f32 %v364, %v116
  %v480 = vmul.f32 %v365, %v117
  %v481 = vmul.f32 %v364, %v118
  %v482 = vmul.f32 %v365, %v119
  %v483 = vmul.f32 %v364, %v120
  %v484 = vmul.f32 %v365, %v121
  %v485 = vmul.f32 %v364, %v122
  %v486 = vmul.f32 %v365, %v123
  %v487 = vmul.f32 %v364, %v124
  %v488 = vmul.f32 %v365, %v125
  %491 = vrot.lane.b32.xlu0 %v471, 96
  %v492 = vpop.permute.xlu0 %491
  %493 = vrot.lane.b32.xlu0 %v472, 96
  %v494 = vpop.permute.xlu0 %493
  %v496 = vsel %vm144, %v473, 0
  %v499 = vsel %vm144, %v474, 0
  %v502 = vsel %vm144, %v475, 0
  %v505 = vsel %vm144, %v476, 0
  %v508 = vsel %vm144, %v477, 0
  %v511 = vsel %vm144, %v478, 0
  %v514 = vsel %vm144, %v479, 0
  %v517 = vsel %vm144, %v480, 0
  %v520 = vsel %vm144, %v481, 0
  %v523 = vsel %vm144, %v482, 0
  %v526 = vsel %vm144, %v483, 0
  %v529 = vsel %vm144, %v484, 0
  %v532 = vsel %vm144, %v485, 0
  %v535 = vsel %vm144, %v486, 0
  %v538 = vsel %vm144, %v487, 0
  %v541 = vsel %vm144, %v488, 0
  %v543 = vsel %vm144, %v492, 0
  %v545 = vsel %vm144, %v494, 0
  %547 = vmatprep.subr.mxu0 0.0
  %548 = vmatpush1.xpose.msra.mxu0 0.0
  %549 = vmatprep.subr.mxu0 0.0
  %550 = vmatpush1.xpose.msra.mxu0 0.0
  %551 = vmatprep.subr.mxu0 0.0
  %552 = vmatpush1.xpose.msra.mxu0 0.0
  %553 = vmatprep.subr.mxu0 0.0
  %554 = vmatpush1.xpose.msra.mxu0 0.0
  %555 = vmatprep.subr.mxu0 0.0
  %556 = vmatpush1.xpose.msra.mxu0 0.0
  %557 = vmatprep.subr.mxu0 0.0
  %558 = vmatpush1.xpose.msra.mxu0 0.0
  %559 = vmatprep.subr.mxu0 0.0
  %560 = vmatpush1.xpose.msra.mxu0 0.0
  %561 = vmatprep.subr.mxu0 0.0
  %562 = vmatpush1.xpose.msra.mxu0 0.0
  %563 = vmatprep.subr.mxu0 0.0
  %564 = vmatpush1.xpose.msra.mxu0 0.0
  %565 = vmatprep.subr.mxu0 0.0
  %566 = vmatpush1.xpose.msra.mxu0 0.0
  %567 = vmatprep.subr.mxu0 0.0
  %568 = vmatpush1.xpose.msra.mxu0 0.0
  %569 = vmatprep.subr.mxu0 0.0
  %570 = vmatpush1.xpose.msra.mxu0 0.0
  %571 = vmatprep.subr.mxu0 0.0
  %572 = vmatpush1.xpose.msra.mxu0 0.0
  %573 = vmatprep.subr.mxu0 0.0
  %574 = vmatpush1.xpose.msra.mxu0 0.0
  %575 = vmatprep.subr.mxu0 0.0
  %576 = vmatpush1.xpose.msra.mxu0 %v545
  %577 = vmatprep.subr.mxu0 0.0
  %578 = vmatpush1.xpose.msra.mxu0 %v543
  %579 = vmatprep.subr.mxu0 0.0
  %580 = vmatpush2.xpose.msra.mxu0 0.0
  %581 = vmatprep.subr.mxu0 0.0
  %582 = vmatpush2.xpose.msra.mxu0 0.0
  %583 = vmatprep.subr.mxu0 0.0
  %584 = vmatpush2.xpose.msra.mxu0 0.0
  %585 = vmatprep.subr.mxu0 0.0
  %586 = vmatpush2.xpose.msra.mxu0 0.0
  %587 = vmatprep.subr.mxu0 0.0
  %588 = vmatpush2.xpose.msra.mxu0 0.0
  %589 = vmatprep.subr.mxu0 0.0
  %590 = vmatpush2.xpose.msra.mxu0 0.0
  %591 = vmatprep.subr.mxu0 0.0
  %592 = vmatpush2.xpose.msra.mxu0 0.0
  %593 = vmatprep.subr.mxu0 0.0
  %594 = vmatpush2.xpose.msra.mxu0 0.0
  %595 = vmatprep.subr.mxu0 0.0
  %596 = vmatpush2.xpose.msra.mxu0 0.0
  %597 = vmatprep.subr.mxu0 0.0
  %598 = vmatpush2.xpose.msra.mxu0 0.0
  %599 = vmatprep.subr.mxu0 0.0
  %600 = vmatpush2.xpose.msra.mxu0 0.0
  %601 = vmatprep.subr.mxu0 0.0
  %602 = vmatpush2.xpose.msra.mxu0 0.0
  %603 = vmatprep.subr.mxu0 0.0
  %604 = vmatpush2.xpose.msra.mxu0 0.0
  %605 = vmatprep.subr.mxu0 0.0
  %606 = vmatpush2.xpose.msra.mxu0 0.0
  %607 = vmatprep.subr.mxu0 0.0
  %608 = vmatpush2.xpose.msra.mxu0 0.0
  %609 = vmatprep.subr.mxu0 0.0
  %610 = vmatpush2.xpose.msra.mxu0 0.0
  %611 = vmatprep.mubr.f32.mxu0 0.0
  %612 = vmatmul.mubr.f32.gmra.mxu0 %v496
  %v613 = vpop.f32.mrf.mxu0
  %v614 = vadd.f32 %v126, %v613
  %v615 = vpop.f32.mrf.mxu0
  %616 = vmatprep.mubr.f32.mxu0 0.0
  %617 = vmatmul.mubr.f32.gmra.mxu0 %v499
  %v618 = vpop.f32.mrf.mxu0
  %v619 = vadd.f32 %v127, %v618
  %v620 = vpop.f32.mrf.mxu0
  %621 = vmatprep.mubr.f32.mxu0 0.0
  %622 = vmatmul.mubr.f32.gmra.mxu0 %v502
  %v623 = vpop.f32.mrf.mxu0
  %v624 = vadd.f32 %v128, %v623
  %v625 = vpop.f32.mrf.mxu0
  %626 = vmatprep.mubr.f32.mxu0 0.0
  %627 = vmatmul.mubr.f32.gmra.mxu0 %v505
  %v628 = vpop.f32.mrf.mxu0
  %v629 = vadd.f32 %v129, %v628
  %v630 = vpop.f32.mrf.mxu0
  %631 = vmatprep.mubr.f32.mxu0 0.0
  %632 = vmatmul.mubr.f32.gmra.mxu0 %v508
  %v633 = vpop.f32.mrf.mxu0
  %v634 = vadd.f32 %v130, %v633
  %v635 = vpop.f32.mrf.mxu0
  %636 = vmatprep.mubr.f32.mxu0 0.0
  %637 = vmatmul.mubr.f32.gmra.mxu0 %v511
  %v638 = vpop.f32.mrf.mxu0
  %v639 = vadd.f32 %v131, %v638
  %v640 = vpop.f32.mrf.mxu0
  %641 = vmatprep.mubr.f32.mxu0 0.0
  %642 = vmatmul.mubr.f32.gmra.mxu0 %v514
  %v643 = vpop.f32.mrf.mxu0
  %v644 = vadd.f32 %v132, %v643
  %v645 = vpop.f32.mrf.mxu0
  %646 = vmatprep.mubr.f32.mxu0 0.0
  %647 = vmatmul.mubr.f32.gmra.mxu0 %v517
  %v648 = vpop.f32.mrf.mxu0
  %v649 = vadd.f32 %v133, %v648
  %v650 = vpop.f32.mrf.mxu0
  %651 = vmatprep.mubr.f32.mxu0 0.0
  %652 = vmatmul.mubr.f32.gmra.mxu0 %v520
  %v653 = vpop.f32.mrf.mxu0
  %v654 = vadd.f32 %v134, %v653
  %v655 = vpop.f32.mrf.mxu0
  %656 = vmatprep.mubr.f32.mxu0 0.0
  %657 = vmatmul.mubr.f32.gmra.mxu0 %v523
  %v658 = vpop.f32.mrf.mxu0
  %v659 = vadd.f32 %v135, %v658
  %v660 = vpop.f32.mrf.mxu0
  %661 = vmatprep.mubr.f32.mxu0 0.0
  %662 = vmatmul.mubr.f32.gmra.mxu0 %v526
  %v663 = vpop.f32.mrf.mxu0
  %v664 = vadd.f32 %v136, %v663
  %v665 = vpop.f32.mrf.mxu0
  %666 = vmatprep.mubr.f32.mxu0 0.0
  %667 = vmatmul.mubr.f32.gmra.mxu0 %v529
  %v668 = vpop.f32.mrf.mxu0
  %v669 = vadd.f32 %v137, %v668
  %v670 = vpop.f32.mrf.mxu0
  %671 = vmatprep.mubr.f32.mxu0 0.0
  %672 = vmatmul.mubr.f32.gmra.mxu0 %v532
  %v673 = vpop.f32.mrf.mxu0
  %v674 = vadd.f32 %v138, %v673
  %v675 = vpop.f32.mrf.mxu0
  %676 = vmatprep.mubr.f32.mxu0 0.0
  %677 = vmatmul.mubr.f32.gmra.mxu0 %v535
  %v678 = vpop.f32.mrf.mxu0
  %v679 = vadd.f32 %v139, %v678
  %v680 = vpop.f32.mrf.mxu0
  %681 = vmatprep.mubr.f32.mxu0 0.0
  %682 = vmatmul.mubr.f32.gmra.mxu0 %v538
  %v683 = vpop.f32.mrf.mxu0
  %v684 = vadd.f32 %v140, %v683
  %v685 = vpop.f32.mrf.mxu0
  %686 = vmatprep.mubr.f32.mxu0 0.0
  %687 = vmatmul.mubr.f32.gmra.mxu0 %v541
  %v688 = vpop.f32.mrf.mxu0
  %v689 = vadd.f32 %v141, %v688
  %v690 = vpop.f32.mrf.mxu0
  %691 = vdwg.mxu0
  %vm692 = vcmask 130048
  %v693 = vsel %vm692, %v614, -inf
  %694 = vmax.xlane.f32.xlu0 %v693
  %v695 = vpop.xlane.xlu0 %694
  %v696 = vsel %vm692, %v619, -inf
  %697 = vmax.xlane.f32.xlu0 %v696
  %v698 = vpop.xlane.xlu0 %697
  %v699 = vsel %vm692, %v624, -inf
  %700 = vmax.xlane.f32.xlu0 %v699
  %v701 = vpop.xlane.xlu0 %700
  %v702 = vsel %vm692, %v629, -inf
  %703 = vmax.xlane.f32.xlu0 %v702
  %v704 = vpop.xlane.xlu0 %703
  %v705 = vsel %vm692, %v634, -inf
  %706 = vmax.xlane.f32.xlu0 %v705
  %v707 = vpop.xlane.xlu0 %706
  %v708 = vsel %vm692, %v639, -inf
  %709 = vmax.xlane.f32.xlu0 %v708
  %v710 = vpop.xlane.xlu0 %709
  %v711 = vsel %vm692, %v644, -inf
  %712 = vmax.xlane.f32.xlu0 %v711
  %v713 = vpop.xlane.xlu0 %712
  %v714 = vsel %vm692, %v649, -inf
  %715 = vmax.xlane.f32.xlu0 %v714
  %v716 = vpop.xlane.xlu0 %715
  %v717 = vsel %vm692, %v654, -inf
  %718 = vmax.xlane.f32.xlu0 %v717
  %v719 = vpop.xlane.xlu0 %718
  %v720 = vsel %vm692, %v659, -inf
  %721 = vmax.xlane.f32.xlu0 %v720
  %v722 = vpop.xlane.xlu0 %721
  %v723 = vsel %vm692, %v664, -inf
  %724 = vmax.xlane.f32.xlu0 %v723
  %v725 = vpop.xlane.xlu0 %724
  %v726 = vsel %vm692, %v669, -inf
  %727 = vmax.xlane.f32.xlu0 %v726
  %v728 = vpop.xlane.xlu0 %727
  %v729 = vsel %vm692, %v674, -inf
  %730 = vmax.xlane.f32.xlu0 %v729
  %v731 = vpop.xlane.xlu0 %730
  %v732 = vsel %vm692, %v679, -inf
  %733 = vmax.xlane.f32.xlu0 %v732
  %v734 = vpop.xlane.xlu0 %733
  %v735 = vsel %vm692, %v684, -inf
  %736 = vmax.xlane.f32.xlu0 %v735
  %v737 = vpop.xlane.xlu0 %736
  %v738 = vsel %vm692, %v689, -inf
  %739 = vmax.xlane.f32.xlu0 %v738
  %v740 = vpop.xlane.xlu0 %739
  %v741 = vsub.f32 %v614, %v695
  %v742 = vsub.f32 %v619, %v698
  %v743 = vsub.f32 %v624, %v701
  %v744 = vsub.f32 %v629, %v704
  %v745 = vsub.f32 %v634, %v707
  %v746 = vsub.f32 %v639, %v710
  %v747 = vsub.f32 %v644, %v713
  %v748 = vsub.f32 %v649, %v716
  %v749 = vsub.f32 %v654, %v719
  %v750 = vsub.f32 %v659, %v722
  %v751 = vsub.f32 %v664, %v725
  %v752 = vsub.f32 %v669, %v728
  %v753 = vsub.f32 %v674, %v731
  %v754 = vsub.f32 %v679, %v734
  %v755 = vsub.f32 %v684, %v737
  %v756 = vsub.f32 %v689, %v740
  %v757 = vmul.f32 %v741, 1.442695
  %v758 = vpow.pop %v757
  %v759 = vmul.f32 %v742, 1.442695
  %v760 = vpow.pop %v759
  %v761 = vmul.f32 %v743, 1.442695
  %v762 = vpow.pop %v761
  %v763 = vmul.f32 %v744, 1.442695
  %v764 = vpow.pop %v763
  %v765 = vmul.f32 %v745, 1.442695
  %v766 = vpow.pop %v765
  %v767 = vmul.f32 %v746, 1.442695
  %v768 = vpow.pop %v767
  %v769 = vmul.f32 %v747, 1.442695
  %v770 = vpow.pop %v769
  %v771 = vmul.f32 %v748, 1.442695
  %v772 = vpow.pop %v771
  %v773 = vmul.f32 %v749, 1.442695
  %v774 = vpow.pop %v773
  %v775 = vmul.f32 %v750, 1.442695
  %v776 = vpow.pop %v775
  %v777 = vmul.f32 %v751, 1.442695
  %v778 = vpow.pop %v777
  %v779 = vmul.f32 %v752, 1.442695
  %v780 = vpow.pop %v779
  %v781 = vmul.f32 %v753, 1.442695
  %v782 = vpow.pop %v781
  %v783 = vmul.f32 %v754, 1.442695
  %v784 = vpow.pop %v783
  %v785 = vmul.f32 %v755, 1.442695
  %v786 = vpow.pop %v785
  %v787 = vmul.f32 %v756, 1.442695
  %v788 = vpow.pop %v787
  %v789 = vsel %vm692, %v758, 0.0
  %790 = vadd.xlane.f32.xlu0 %v789
  %v791 = vpop.xlane.xlu0 %790
  %v792 = vsel %vm692, %v760, 0.0
  %793 = vadd.xlane.f32.xlu0 %v792
  %v794 = vpop.xlane.xlu0 %793
  %v795 = vsel %vm692, %v762, 0.0
  %796 = vadd.xlane.f32.xlu0 %v795
  %v797 = vpop.xlane.xlu0 %796
  %v798 = vsel %vm692, %v764, 0.0
  %799 = vadd.xlane.f32.xlu0 %v798
  %v800 = vpop.xlane.xlu0 %799
  %v801 = vsel %vm692, %v766, 0.0
  %802 = vadd.xlane.f32.xlu0 %v801
  %v803 = vpop.xlane.xlu0 %802
  %v804 = vsel %vm692, %v768, 0.0
  %805 = vadd.xlane.f32.xlu0 %v804
  %v806 = vpop.xlane.xlu0 %805
  %v807 = vsel %vm692, %v770, 0.0
  %808 = vadd.xlane.f32.xlu0 %v807
  %v809 = vpop.xlane.xlu0 %808
  %v810 = vsel %vm692, %v772, 0.0
  %811 = vadd.xlane.f32.xlu0 %v810
  %v812 = vpop.xlane.xlu0 %811
  %v813 = vsel %vm692, %v774, 0.0
  %814 = vadd.xlane.f32.xlu0 %v813
  %v815 = vpop.xlane.xlu0 %814
  %v816 = vsel %vm692, %v776, 0.0
  %817 = vadd.xlane.f32.xlu0 %v816
  %v818 = vpop.xlane.xlu0 %817
  %v819 = vsel %vm692, %v778, 0.0
  %820 = vadd.xlane.f32.xlu0 %v819
  %v821 = vpop.xlane.xlu0 %820
  %v822 = vsel %vm692, %v780, 0.0
  %823 = vadd.xlane.f32.xlu0 %v822
  %v824 = vpop.xlane.xlu0 %823
  %v825 = vsel %vm692, %v782, 0.0
  %826 = vadd.xlane.f32.xlu0 %v825
  %v827 = vpop.xlane.xlu0 %826
  %v828 = vsel %vm692, %v784, 0.0
  %829 = vadd.xlane.f32.xlu0 %v828
  %v830 = vpop.xlane.xlu0 %829
  %v831 = vsel %vm692, %v786, 0.0
  %832 = vadd.xlane.f32.xlu0 %v831
  %v833 = vpop.xlane.xlu0 %832
  %v834 = vsel %vm692, %v788, 0.0
  %835 = vadd.xlane.f32.xlu0 %v834
  %v836 = vpop.xlane.xlu0 %835
  %v837 = vrcp.pop %v791
  %v838 = vrcp.pop %v794
  %v839 = vrcp.pop %v797
  %v840 = vrcp.pop %v800
  %v841 = vrcp.pop %v803
  %v842 = vrcp.pop %v806
  %v843 = vrcp.pop %v809
  %v844 = vrcp.pop %v812
  %v845 = vrcp.pop %v815
  %v846 = vrcp.pop %v818
  %v847 = vrcp.pop %v821
  %v848 = vrcp.pop %v824
  %v849 = vrcp.pop %v827
  %v850 = vrcp.pop %v830
  %v851 = vrcp.pop %v833
  %v852 = vrcp.pop %v836
  %v853 = vmul.f32 %v758, %v837
  %v854 = vmul.f32 %v760, %v838
  %v855 = vmul.f32 %v762, %v839
  %v856 = vmul.f32 %v764, %v840
  %v857 = vmul.f32 %v766, %v841
  %v858 = vmul.f32 %v768, %v842
  %v859 = vmul.f32 %v770, %v843
  %v860 = vmul.f32 %v772, %v844
  %v861 = vmul.f32 %v774, %v845
  %v862 = vmul.f32 %v776, %v846
  %v863 = vmul.f32 %v778, %v847
  %v864 = vmul.f32 %v780, %v848
  %v865 = vmul.f32 %v782, %v849
  %v866 = vmul.f32 %v784, %v850
  %v867 = vmul.f32 %v786, %v851
  %v868 = vmul.f32 %v788, %v852
  %v872 = vsel %vm692, %v853, 0
  %v875 = vsel %vm692, %v854, 0
  %v878 = vsel %vm692, %v855, 0
  %v881 = vsel %vm692, %v856, 0
  %v884 = vsel %vm692, %v857, 0
  %v887 = vsel %vm692, %v858, 0
  %v890 = vsel %vm692, %v859, 0
  %v893 = vsel %vm692, %v860, 0
  %v896 = vsel %vm692, %v861, 0
  %v899 = vsel %vm692, %v862, 0
  %v902 = vsel %vm692, %v863, 0
  %v905 = vsel %vm692, %v864, 0
  %v908 = vsel %vm692, %v865, 0
  %v911 = vsel %vm692, %v866, 0
  %v914 = vsel %vm692, %v867, 0
  %v917 = vsel %vm692, %v868, 0
  %919 = vmatprep.subr.mxu0 0.0
  %920 = vmatpush1.msra.mxu0 0.0
  %921 = vmatprep.subr.mxu0 0.0
  %922 = vmatpush1.msra.mxu0 0.0
  %923 = vmatprep.subr.mxu0 0.0
  %924 = vmatpush1.msra.mxu0 0.0
  %925 = vmatprep.subr.mxu0 0.0
  %926 = vmatpush1.msra.mxu0 0.0
  %927 = vmatprep.subr.mxu0 0.0
  %928 = vmatpush1.msra.mxu0 0.0
  %929 = vmatprep.subr.mxu0 0.0
  %930 = vmatpush1.msra.mxu0 0.0
  %931 = vmatprep.subr.mxu0 0.0
  %932 = vmatpush1.msra.mxu0 0.0
  %933 = vmatprep.subr.mxu0 0.0
  %934 = vmatpush1.msra.mxu0 0.0
  %935 = vmatprep.subr.mxu0 0.0
  %936 = vmatpush1.msra.mxu0 0.0
  %937 = vmatprep.subr.mxu0 0.0
  %938 = vmatpush1.msra.mxu0 0.0
  %939 = vmatprep.subr.mxu0 0.0
  %940 = vmatpush1.msra.mxu0 0.0
  %941 = vmatprep.subr.mxu0 0.0
  %942 = vmatpush1.msra.mxu0 0.0
  %943 = vmatprep.subr.mxu0 0.0
  %944 = vmatpush1.msra.mxu0 0.0
  %945 = vmatprep.subr.mxu0 0.0
  %946 = vmatpush1.msra.mxu0 0.0
  %947 = vmatprep.subr.mxu0 0.0
  %948 = vmatpush1.msra.mxu0 %v494
  %949 = vmatprep.subr.mxu0 0.0
  %950 = vmatpush1.msra.mxu0 %v492
  %951 = vmatprep.subr.mxu0 0.0
  %952 = vmatpush2.msra.mxu0 0.0
  %953 = vmatprep.subr.mxu0 0.0
  %954 = vmatpush2.msra.mxu0 0.0
  %955 = vmatprep.subr.mxu0 0.0
  %956 = vmatpush2.msra.mxu0 0.0
  %957 = vmatprep.subr.mxu0 0.0
  %958 = vmatpush2.msra.mxu0 0.0
  %959 = vmatprep.subr.mxu0 0.0
  %960 = vmatpush2.msra.mxu0 0.0
  %961 = vmatprep.subr.mxu0 0.0
  %962 = vmatpush2.msra.mxu0 0.0
  %963 = vmatprep.subr.mxu0 0.0
  %964 = vmatpush2.msra.mxu0 0.0
  %965 = vmatprep.subr.mxu0 0.0
  %966 = vmatpush2.msra.mxu0 0.0
  %967 = vmatprep.subr.mxu0 0.0
  %968 = vmatpush2.msra.mxu0 0.0
  %969 = vmatprep.subr.mxu0 0.0
  %970 = vmatpush2.msra.mxu0 0.0
  %971 = vmatprep.subr.mxu0 0.0
  %972 = vmatpush2.msra.mxu0 0.0
  %973 = vmatprep.subr.mxu0 0.0
  %974 = vmatpush2.msra.mxu0 0.0
  %975 = vmatprep.subr.mxu0 0.0
  %976 = vmatpush2.msra.mxu0 0.0
  %977 = vmatprep.subr.mxu0 0.0
  %978 = vmatpush2.msra.mxu0 0.0
  %979 = vmatprep.subr.mxu0 0.0
  %980 = vmatpush2.msra.mxu0 0.0
  %981 = vmatprep.subr.mxu0 0.0
  %982 = vmatpush2.msra.mxu0 0.0
  %983 = vmatprep.mubr.f32.mxu0 0.0
  %984 = vmatmul.mubr.f32.gmra.mxu0 %v872
  %v985 = vpop.f32.mrf.mxu0
  %v986 = vadd.f32 0.0, %v985
  %v987 = vpop.f32.mrf.mxu0
  %988 = vmatprep.mubr.f32.mxu0 0.0
  %989 = vmatmul.mubr.f32.gmra.mxu0 %v875
  %v990 = vpop.f32.mrf.mxu0
  %v991 = vadd.f32 0.0, %v990
  %v992 = vpop.f32.mrf.mxu0
  %993 = vmatprep.mubr.f32.mxu0 0.0
  %994 = vmatmul.mubr.f32.gmra.mxu0 %v878
  %v995 = vpop.f32.mrf.mxu0
  %v996 = vadd.f32 0.0, %v995
  %v997 = vpop.f32.mrf.mxu0
  %998 = vmatprep.mubr.f32.mxu0 0.0
  %999 = vmatmul.mubr.f32.gmra.mxu0 %v881
  %v1000 = vpop.f32.mrf.mxu0
  %v1001 = vadd.f32 0.0, %v1000
  %v1002 = vpop.f32.mrf.mxu0
  %1003 = vmatprep.mubr.f32.mxu0 0.0
  %1004 = vmatmul.mubr.f32.gmra.mxu0 %v884
  %v1005 = vpop.f32.mrf.mxu0
  %v1006 = vadd.f32 0.0, %v1005
  %v1007 = vpop.f32.mrf.mxu0
  %1008 = vmatprep.mubr.f32.mxu0 0.0
  %1009 = vmatmul.mubr.f32.gmra.mxu0 %v887
  %v1010 = vpop.f32.mrf.mxu0
  %v1011 = vadd.f32 0.0, %v1010
  %v1012 = vpop.f32.mrf.mxu0
  %1013 = vmatprep.mubr.f32.mxu0 0.0
  %1014 = vmatmul.mubr.f32.gmra.mxu0 %v890
  %v1015 = vpop.f32.mrf.mxu0
  %v1016 = vadd.f32 0.0, %v1015
  %v1017 = vpop.f32.mrf.mxu0
  %1018 = vmatprep.mubr.f32.mxu0 0.0
  %1019 = vmatmul.mubr.f32.gmra.mxu0 %v893
  %v1020 = vpop.f32.mrf.mxu0
  %v1021 = vadd.f32 0.0, %v1020
  %v1022 = vpop.f32.mrf.mxu0
  %1023 = vmatprep.mubr.f32.mxu0 0.0
  %1024 = vmatmul.mubr.f32.gmra.mxu0 %v896
  %v1025 = vpop.f32.mrf.mxu0
  %v1026 = vadd.f32 0.0, %v1025
  %v1027 = vpop.f32.mrf.mxu0
  %1028 = vmatprep.mubr.f32.mxu0 0.0
  %1029 = vmatmul.mubr.f32.gmra.mxu0 %v899
  %v1030 = vpop.f32.mrf.mxu0
  %v1031 = vadd.f32 0.0, %v1030
  %v1032 = vpop.f32.mrf.mxu0
  %1033 = vmatprep.mubr.f32.mxu0 0.0
  %1034 = vmatmul.mubr.f32.gmra.mxu0 %v902
  %v1035 = vpop.f32.mrf.mxu0
  %v1036 = vadd.f32 0.0, %v1035
  %v1037 = vpop.f32.mrf.mxu0
  %1038 = vmatprep.mubr.f32.mxu0 0.0
  %1039 = vmatmul.mubr.f32.gmra.mxu0 %v905
  %v1040 = vpop.f32.mrf.mxu0
  %v1041 = vadd.f32 0.0, %v1040
  %v1042 = vpop.f32.mrf.mxu0
  %1043 = vmatprep.mubr.f32.mxu0 0.0
  %1044 = vmatmul.mubr.f32.gmra.mxu0 %v908
  %v1045 = vpop.f32.mrf.mxu0
  %v1046 = vadd.f32 0.0, %v1045
  %v1047 = vpop.f32.mrf.mxu0
  %1048 = vmatprep.mubr.f32.mxu0 0.0
  %1049 = vmatmul.mubr.f32.gmra.mxu0 %v911
  %v1050 = vpop.f32.mrf.mxu0
  %v1051 = vadd.f32 0.0, %v1050
  %v1052 = vpop.f32.mrf.mxu0
  %1053 = vmatprep.mubr.f32.mxu0 0.0
  %1054 = vmatmul.mubr.f32.gmra.mxu0 %v914
  %v1055 = vpop.f32.mrf.mxu0
  %v1056 = vadd.f32 0.0, %v1055
  %v1057 = vpop.f32.mrf.mxu0
  %1058 = vmatprep.mubr.f32.mxu0 0.0
  %1059 = vmatmul.mubr.f32.gmra.mxu0 %v917
  %v1060 = vpop.f32.mrf.mxu0
  %v1061 = vadd.f32 0.0, %v1060
  %v1062 = vpop.f32.mrf.mxu0
  %1063 = vdwg.mxu0
  %v1064 = vmul.f32 %v986, %v110
  %v1065 = vmul.f32 %v991, %v111
  %v1066 = vmul.f32 %v996, %v112
  %v1067 = vmul.f32 %v1001, %v113
  %v1068 = vadd.f32 %v1064, %v1066
  %v1069 = vadd.f32 %v1065, %v1067
  %v1070 = vmul.f32 %v1006, %v114
  %v1071 = vmul.f32 %v1011, %v115
  %v1072 = vadd.f32 %v1068, %v1070
  %v1073 = vadd.f32 %v1069, %v1071
  %v1074 = vmul.f32 %v1016, %v116
  %v1075 = vmul.f32 %v1021, %v117
  %v1076 = vadd.f32 %v1072, %v1074
  %v1077 = vadd.f32 %v1073, %v1075
  %v1078 = vmul.f32 %v1026, %v118
  %v1079 = vmul.f32 %v1031, %v119
  %v1080 = vadd.f32 %v1076, %v1078
  %v1081 = vadd.f32 %v1077, %v1079
  %v1082 = vmul.f32 %v1036, %v120
  %v1083 = vmul.f32 %v1041, %v121
  %v1084 = vadd.f32 %v1080, %v1082
  %v1085 = vadd.f32 %v1081, %v1083
  %v1086 = vmul.f32 %v1046, %v122
  %v1087 = vmul.f32 %v1051, %v123
  %v1088 = vadd.f32 %v1084, %v1086
  %v1089 = vadd.f32 %v1085, %v1087
  %v1090 = vmul.f32 %v1056, %v124
  %v1091 = vmul.f32 %v1061, %v125
  %v1092 = vadd.f32 %v1088, %v1090
  %v1093 = vadd.f32 %v1089, %v1091
  %v1094 = vld [vmem:[%s11] sm:$0xff]
  %v1095 = vld [vmem:[%s11 + $0x8] sm:$0xff]
  %v1096 = vld [vmem:[%s11 + $0x10] sm:$0xff]
  %v1097 = vld [vmem:[%s11 + $0x18] sm:$0xff]
  %v1098 = vld [vmem:[%s12] sm:$0x1]
  %v1100 = vlaneseq
  %v1101 = vshrl.u32 %v1100, 7
  %v1102 = vsub.s32 0, %v1101
  %v1103 = vrot.slane %v1098, %v1102
  %v1106 = vsel %vm144, %v1092, 0
  %v1109 = vsel %vm144, %v1093, 0
  %1111 = vmatprep.subr.mxu0 0.0
  %1112 = vmatpush1.msra.mxu0 0.0
  %1113 = vmatprep.subr.mxu0 0.0
  %1114 = vmatpush1.msra.mxu0 0.0
  %1115 = vmatprep.subr.mxu0 0.0
  %1116 = vmatpush1.msra.mxu0 0.0
  %1117 = vmatprep.subr.mxu0 0.0
  %1118 = vmatpush1.msra.mxu0 0.0
  %1119 = vmatprep.subr.mxu0 0.0
  %1120 = vmatpush1.msra.mxu0 0.0
  %1121 = vmatprep.subr.mxu0 0.0
  %1122 = vmatpush1.msra.mxu0 0.0
  %1123 = vmatprep.subr.mxu0 0.0
  %1124 = vmatpush1.msra.mxu0 0.0
  %1125 = vmatprep.subr.mxu0 0.0
  %1126 = vmatpush1.msra.mxu0 0.0
  %1127 = vmatprep.subr.mxu0 0.0
  %1128 = vmatpush1.msra.mxu0 0.0
  %1129 = vmatprep.subr.mxu0 0.0
  %1130 = vmatpush1.msra.mxu0 0.0
  %1131 = vmatprep.subr.mxu0 0.0
  %1132 = vmatpush1.msra.mxu0 0.0
  %1133 = vmatprep.subr.mxu0 0.0
  %1134 = vmatpush1.msra.mxu0 0.0
  %1135 = vmatprep.subr.mxu0 0.0
  %1136 = vmatpush1.msra.mxu0 %v1097
  %1137 = vmatprep.subr.mxu0 0.0
  %1138 = vmatpush1.msra.mxu0 %v1096
  %1139 = vmatprep.subr.mxu0 0.0
  %1140 = vmatpush1.msra.mxu0 %v1095
  %1141 = vmatprep.subr.mxu0 0.0
  %1142 = vmatpush1.msra.mxu0 %v1094
  %1143 = vmatprep.subr.mxu0 0.0
  %1144 = vmatpush2.msra.mxu0 0.0
  %1145 = vmatprep.subr.mxu0 0.0
  %1146 = vmatpush2.msra.mxu0 0.0
  %1147 = vmatprep.subr.mxu0 0.0
  %1148 = vmatpush2.msra.mxu0 0.0
  %1149 = vmatprep.subr.mxu0 0.0
  %1150 = vmatpush2.msra.mxu0 0.0
  %1151 = vmatprep.subr.mxu0 0.0
  %1152 = vmatpush2.msra.mxu0 0.0
  %1153 = vmatprep.subr.mxu0 0.0
  %1154 = vmatpush2.msra.mxu0 0.0
  %1155 = vmatprep.subr.mxu0 0.0
  %1156 = vmatpush2.msra.mxu0 0.0
  %1157 = vmatprep.subr.mxu0 0.0
  %1158 = vmatpush2.msra.mxu0 0.0
  %1159 = vmatprep.subr.mxu0 0.0
  %1160 = vmatpush2.msra.mxu0 0.0
  %1161 = vmatprep.subr.mxu0 0.0
  %1162 = vmatpush2.msra.mxu0 0.0
  %1163 = vmatprep.subr.mxu0 0.0
  %1164 = vmatpush2.msra.mxu0 0.0
  %1165 = vmatprep.subr.mxu0 0.0
  %1166 = vmatpush2.msra.mxu0 0.0
  %1167 = vmatprep.subr.mxu0 0.0
  %1168 = vmatpush2.msra.mxu0 0.0
  %1169 = vmatprep.subr.mxu0 0.0
  %1170 = vmatpush2.msra.mxu0 0.0
  %1171 = vmatprep.subr.mxu0 0.0
  %1172 = vmatpush2.msra.mxu0 0.0
  %1173 = vmatprep.subr.mxu0 0.0
  %1174 = vmatpush2.msra.mxu0 0.0
  %1175 = vmatprep.mubr.f32.mxu0 0.0
  %1176 = vmatmul.mubr.f32.gmra.mxu0 %v1106
  %v1177 = vpop.f32.mrf.mxu0
  %v1178 = vadd.f32 %v1103, %v1177
  %v1179 = vpop.f32.mrf.mxu0
  %1180 = vmatprep.mubr.f32.mxu0 0.0
  %1181 = vmatmul.mubr.f32.gmra.mxu0 %v1109
  %v1182 = vpop.f32.mrf.mxu0
  %v1183 = vadd.f32 %v1103, %v1182
  %v1184 = vpop.f32.mrf.mxu0
  %1185 = vdwg.mxu0
  %v1186 = vadd.f32 %v1178, %v104
  %v1187 = vadd.f32 %v1183, %v105
  %v1188 = vld [vmem:[%s13] sm:$0x1]
  %v1189 = vld [vmem:[%s14] sm:$0x1]
  %v1190 = vsel %vm144, %v1186, 0.0
  %1191 = vadd.xlane.f32.xlu0 %v1190
  %v1192 = vpop.xlane.xlu0 %1191
  %v1193 = vsel %vm144, %v1187, 0.0
  %1194 = vadd.xlane.f32.xlu0 %v1193
  %v1195 = vpop.xlane.xlu0 %1194
  %v1196 = vmul.f32 %v1192, %v151
  %v1197 = vmul.f32 %v1195, %v151
  %v1198 = vsub.f32 %v1186, %v1196
  %v1199 = vsub.f32 %v1187, %v1197
  %v1200 = vmul.f32 %v1198, %v1198
  %v1201 = vmul.f32 %v1199, %v1199
  %v1202 = vsel %vm144, %v1200, 0.0
  %1203 = vadd.xlane.f32.xlu0 %v1202
  %v1204 = vpop.xlane.xlu0 %1203
  %v1205 = vsel %vm144, %v1201, 0.0
  %1206 = vadd.xlane.f32.xlu0 %v1205
  %v1207 = vpop.xlane.xlu0 %1206
  %v1208 = vmul.f32 %v1204, %v151
  %v1209 = vmul.f32 %v1207, %v151
  %v1210 = vadd.f32 %v1208, 1e-05
  %v1211 = vadd.f32 %v1209, 1e-05
  %v1212 = vrsqrt.pop %v1210
  %v1213 = vrsqrt.pop %v1211
  %v1214 = vmul.f32 %v1198, %v1212
  %v1215 = vmul.f32 %v1199, %v1213
  %v1217 = vlaneseq
  %v1218 = vshrl.u32 %v1217, 7
  %v1219 = vsub.s32 0, %v1218
  %v1220 = vrot.slane %v1188, %v1219
  %v1222 = vmul.f32 %v1214, %v1220
  %v1223 = vmul.f32 %v1215, %v1220
  %v1225 = vlaneseq
  %v1226 = vshrl.u32 %v1225, 7
  %v1227 = vsub.s32 0, %v1226
  %v1228 = vrot.slane %v1189, %v1227
  %v1230 = vadd.f32 %v1222, %v1228
  %v1231 = vadd.f32 %v1223, %v1228
  %v1232 = vld [vmem:[%s15] sm:$0xff]
  %v1233 = vld [vmem:[%s15 + $0x8] sm:$0xff]
  %v1234 = vld [vmem:[%s15 + $0x10] sm:$0xff]
  %v1235 = vld [vmem:[%s15 + $0x18] sm:$0xff]
  %v1236 = vld [vmem:[%s16] sm:$0x1]
  %v1238 = vlaneseq
  %v1239 = vshrl.u32 %v1238, 7
  %v1240 = vsub.s32 0, %v1239
  %v1241 = vrot.slane %v1236, %v1240
  %v1244 = vsel %vm144, %v1230, 0
  %v1247 = vsel %vm144, %v1231, 0
  %1249 = vmatprep.subr.mxu0 0.0
  %1250 = vmatpush1.msra.mxu0 0.0
  %1251 = vmatprep.subr.mxu0 0.0
  %1252 = vmatpush1.msra.mxu0 0.0
  %1253 = vmatprep.subr.mxu0 0.0
  %1254 = vmatpush1.msra.mxu0 0.0
  %1255 = vmatprep.subr.mxu0 0.0
  %1256 = vmatpush1.msra.mxu0 0.0
  %1257 = vmatprep.subr.mxu0 0.0
  %1258 = vmatpush1.msra.mxu0 0.0
  %1259 = vmatprep.subr.mxu0 0.0
  %1260 = vmatpush1.msra.mxu0 0.0
  %1261 = vmatprep.subr.mxu0 0.0
  %1262 = vmatpush1.msra.mxu0 0.0
  %1263 = vmatprep.subr.mxu0 0.0
  %1264 = vmatpush1.msra.mxu0 0.0
  %1265 = vmatprep.subr.mxu0 0.0
  %1266 = vmatpush1.msra.mxu0 0.0
  %1267 = vmatprep.subr.mxu0 0.0
  %1268 = vmatpush1.msra.mxu0 0.0
  %1269 = vmatprep.subr.mxu0 0.0
  %1270 = vmatpush1.msra.mxu0 0.0
  %1271 = vmatprep.subr.mxu0 0.0
  %1272 = vmatpush1.msra.mxu0 0.0
  %1273 = vmatprep.subr.mxu0 0.0
  %1274 = vmatpush1.msra.mxu0 %v1235
  %1275 = vmatprep.subr.mxu0 0.0
  %1276 = vmatpush1.msra.mxu0 %v1234
  %1277 = vmatprep.subr.mxu0 0.0
  %1278 = vmatpush1.msra.mxu0 %v1233
  %1279 = vmatprep.subr.mxu0 0.0
  %1280 = vmatpush1.msra.mxu0 %v1232
  %1281 = vmatprep.subr.mxu0 0.0
  %1282 = vmatpush2.msra.mxu0 0.0
  %1283 = vmatprep.subr.mxu0 0.0
  %1284 = vmatpush2.msra.mxu0 0.0
  %1285 = vmatprep.subr.mxu0 0.0
  %1286 = vmatpush2.msra.mxu0 0.0
  %1287 = vmatprep.subr.mxu0 0.0
  %1288 = vmatpush2.msra.mxu0 0.0
  %1289 = vmatprep.subr.mxu0 0.0
  %1290 = vmatpush2.msra.mxu0 0.0
  %1291 = vmatprep.subr.mxu0 0.0
  %1292 = vmatpush2.msra.mxu0 0.0
  %1293 = vmatprep.subr.mxu0 0.0
  %1294 = vmatpush2.msra.mxu0 0.0
  %1295 = vmatprep.subr.mxu0 0.0
  %1296 = vmatpush2.msra.mxu0 0.0
  %1297 = vmatprep.subr.mxu0 0.0
  %1298 = vmatpush2.msra.mxu0 0.0
  %1299 = vmatprep.subr.mxu0 0.0
  %1300 = vmatpush2.msra.mxu0 0.0
  %1301 = vmatprep.subr.mxu0 0.0
  %1302 = vmatpush2.msra.mxu0 0.0
  %1303 = vmatprep.subr.mxu0 0.0
  %1304 = vmatpush2.msra.mxu0 0.0
  %1305 = vmatprep.subr.mxu0 0.0
  %1306 = vmatpush2.msra.mxu0 0.0
  %1307 = vmatprep.subr.mxu0 0.0
  %1308 = vmatpush2.msra.mxu0 0.0
  %1309 = vmatprep.subr.mxu0 0.0
  %1310 = vmatpush2.msra.mxu0 0.0
  %1311 = vmatprep.subr.mxu0 0.0
  %1312 = vmatpush2.msra.mxu0 0.0
  %1313 = vmatprep.mubr.f32.mxu0 0.0
  %1314 = vmatmul.mubr.f32.gmra.mxu0 %v1244
  %v1315 = vpop.f32.mrf.mxu0
  %v1316 = vadd.f32 %v1241, %v1315
  %v1317 = vpop.f32.mrf.mxu0
  %1318 = vmatprep.mubr.f32.mxu0 0.0
  %1319 = vmatmul.mubr.f32.gmra.mxu0 %v1247
  %v1320 = vpop.f32.mrf.mxu0
  %v1321 = vadd.f32 %v1241, %v1320
  %v1322 = vpop.f32.mrf.mxu0
  %1323 = vdwg.mxu0
  %v1324 = vmul.f32 %v1316, 0.5
  %v1325 = vmul.f32 %v1321, 0.5
  %v1326 = vmul.f32 %v1316, 0.044715
  %v1327 = vmul.f32 %v1321, 0.044715
  %v1328 = vmul.f32 %v1326, %v1316
  %v1329 = vmul.f32 %v1327, %v1321
  %v1330 = vmul.f32 %v1328, %v1316
  %v1331 = vmul.f32 %v1329, %v1321
  %v1332 = vadd.f32 %v1316, %v1330
  %v1333 = vadd.f32 %v1321, %v1331
  %v1334 = vmul.f32 %v1332, 0.7978846
  %v1335 = vmul.f32 %v1333, 0.7978846
  %v1336 = vtanh.pop %v1334
  %v1337 = vtanh.pop %v1335
  %v1338 = vadd.f32 %v1336, 1.0
  %v1339 = vadd.f32 %v1337, 1.0
  %v1340 = vmul.f32 %v1324, %v1338
  %v1341 = vmul.f32 %v1325, %v1339
  %v1342 = vld [vmem:[%s17] sm:$0xff]
  %v1343 = vld [vmem:[%s17 + $0x8] sm:$0xff]
  %v1344 = vld [vmem:[%s17 + $0x10] sm:$0xff]
  %v1345 = vld [vmem:[%s17 + $0x18] sm:$0xff]
  %v1346 = vld [vmem:[%s17 + $0x20] sm:$0xff]
  %v1347 = vld [vmem:[%s17 + $0x28] sm:$0xff]
  %v1348 = vld [vmem:[%s17 + $0x30] sm:$0xff]
  %v1349 = vld [vmem:[%s17 + $0x38] sm:$0xff]
  %v1350 = vld [vmem:[%s17 + $0x40] sm:$0xff]
  %v1351 = vld [vmem:[%s17 + $0x48] sm:$0xff]
  %v1352 = vld [vmem:[%s17 + $0x50] sm:$0xff]
  %v1353 = vld [vmem:[%s17 + $0x58] sm:$0xff]
  %v1354 = vld [vmem:[%s17 + $0x60] sm:$0xff]
  %v1355 = vld [vmem:[%s17 + $0x68] sm:$0xff]
  %v1356 = vld [vmem:[%s17 + $0x70] sm:$0xff]
  %v1357 = vld [vmem:[%s17 + $0x78] sm:$0xff]
  %v1358 = vld [vmem:[%s18] sm:$0x1]
  %v1360 = vlaneseq
  %v1361 = vshrl.u32 %v1360, 7
  %v1362 = vsub.s32 0, %v1361
  %v1363 = vrot.slane %v1358, %v1362
  %1365 = vmatprep.subr.mxu0 0.0
  %1366 = vmatpush1.msra.mxu0 %v1357
  %1367 = vmatprep.subr.mxu0 0.0
  %1368 = vmatpush1.msra.mxu0 %v1356
  %1369 = vmatprep.subr.mxu0 0.0
  %1370 = vmatpush1.msra.mxu0 %v1355
  %1371 = vmatprep.subr.mxu0 0.0
  %1372 = vmatpush1.msra.mxu0 %v1354
  %1373 = vmatprep.subr.mxu0 0.0
  %1374 = vmatpush1.msra.mxu0 %v1353
  %1375 = vmatprep.subr.mxu0 0.0
  %1376 = vmatpush1.msra.mxu0 %v1352
  %1377 = vmatprep.subr.mxu0 0.0
  %1378 = vmatpush1.msra.mxu0 %v1351
  %1379 = vmatprep.subr.mxu0 0.0
  %1380 = vmatpush1.msra.mxu0 %v1350
  %1381 = vmatprep.subr.mxu0 0.0
  %1382 = vmatpush1.msra.mxu0 %v1349
  %1383 = vmatprep.subr.mxu0 0.0
  %1384 = vmatpush1.msra.mxu0 %v1348
  %1385 = vmatprep.subr.mxu0 0.0
  %1386 = vmatpush1.msra.mxu0 %v1347
  %1387 = vmatprep.subr.mxu0 0.0
  %1388 = vmatpush1.msra.mxu0 %v1346
  %1389 = vmatprep.subr.mxu0 0.0
  %1390 = vmatpush1.msra.mxu0 %v1345
  %1391 = vmatprep.subr.mxu0 0.0
  %1392 = vmatpush1.msra.mxu0 %v1344
  %1393 = vmatprep.subr.mxu0 0.0
  %1394 = vmatpush1.msra.mxu0 %v1343
  %1395 = vmatprep.subr.mxu0 0.0
  %1396 = vmatpush1.msra.mxu0 %v1342
  %1397 = vmatprep.subr.mxu0 0.0
  %1398 = vmatpush2.msra.mxu0 0.0
  %1399 = vmatprep.subr.mxu0 0.0
  %1400 = vmatpush2.msra.mxu0 0.0
  %1401 = vmatprep.subr.mxu0 0.0
  %1402 = vmatpush2.msra.mxu0 0.0
  %1403 = vmatprep.subr.mxu0 0.0
  %1404 = vmatpush2.msra.mxu0 0.0
  %1405 = vmatprep.subr.mxu0 0.0
  %1406 = vmatpush2.msra.mxu0 0.0
  %1407 = vmatprep.subr.mxu0 0.0
  %1408 = vmatpush2.msra.mxu0 0.0
  %1409 = vmatprep.subr.mxu0 0.0
  %1410 = vmatpush2.msra.mxu0 0.0
  %1411 = vmatprep.subr.mxu0 0.0
  %1412 = vmatpush2.msra.mxu0 0.0
  %1413 = vmatprep.subr.mxu0 0.0
  %1414 = vmatpush2.msra.mxu0 0.0
  %1415 = vmatprep.subr.mxu0 0.0
  %1416 = vmatpush2.msra.mxu0 0.0
  %1417 = vmatprep.subr.mxu0 0.0
  %1418 = vmatpush2.msra.mxu0 0.0
  %1419 = vmatprep.subr.mxu0 0.0
  %1420 = vmatpush2.msra.mxu0 0.0
  %1421 = vmatprep.subr.mxu0 0.0
  %1422 = vmatpush2.msra.mxu0 0.0
  %1423 = vmatprep.subr.mxu0 0.0
  %1424 = vmatpush2.msra.mxu0 0.0
  %1425 = vmatprep.subr.mxu0 0.0
  %1426 = vmatpush2.msra.mxu0 0.0
  %1427 = vmatprep.subr.mxu0 0.0
  %1428 = vmatpush2.msra.mxu0 0.0
  %1429 = vmatprep.mubr.f32.mxu0 0.0
  %1430 = vmatmul.mubr.f32.gmra.mxu0 %v1340
  %v1431 = vpop.f32.mrf.mxu0
  %v1432 = vadd.f32 %v1363, %v1431
  %v1433 = vpop.f32.mrf.mxu0
  %1434 = vmatprep.mubr.f32.mxu0 0.0
  %1435 = vmatmul.mubr.f32.gmra.mxu0 %v1341
  %v1436 = vpop.f32.mrf.mxu0
  %v1437 = vadd.f32 %v1363, %v1436
  %v1438 = vpop.f32.mrf.mxu0
  %1439 = vdwg.mxu0
  %v1440 = vadd.f32 %v1432, %v1186
  %v1441 = vadd.f32 %v1437, %v1187
  %s1442 = scalar_lea.vmem %s8, 1
  %v1443 = vld [vmem:[%s1442] sm:$0x1]
  %s1444 = scalar_lea.vmem %s9, 1
  %v1445 = vld [vmem:[%s1444] sm:$0x1]
  %v1446 = vsel %vm144, %v1440, 0.0
  %1447 = vadd.xlane.f32.xlu0 %v1446
  %v1448 = vpop.xlane.xlu0 %1447
  %v1449 = vsel %vm144, %v1441, 0.0
  %1450 = vadd.xlane.f32.xlu0 %v1449
  %v1451 = vpop.xlane.xlu0 %1450
  %v1452 = vmul.f32 %v1448, %v151
  %v1453 = vmul.f32 %v1451, %v151
  %v1454 = vsub.f32 %v1440, %v1452
  %v1455 = vsub.f32 %v1441, %v1453
  %v1456 = vmul.f32 %v1454, %v1454
  %v1457 = vmul.f32 %v1455, %v1455
  %v1458 = vsel %vm144, %v1456, 0.0
  %1459 = vadd.xlane.f32.xlu0 %v1458
  %v1460 = vpop.xlane.xlu0 %1459
  %v1461 = vsel %vm144, %v1457, 0.0
  %1462 = vadd.xlane.f32.xlu0 %v1461
  %v1463 = vpop.xlane.xlu0 %1462
  %v1464 = vmul.f32 %v1460, %v151
  %v1465 = vmul.f32 %v1463, %v151
  %v1466 = vadd.f32 %v1464, 1e-05
  %v1467 = vadd.f32 %v1465, 1e-05
  %v1468 = vrsqrt.pop %v1466
  %v1469 = vrsqrt.pop %v1467
  %v1470 = vmul.f32 %v1454, %v1468
  %v1471 = vmul.f32 %v1455, %v1469
  %v1473 = vlaneseq
  %v1474 = vshrl.u32 %v1473, 7
  %v1475 = vsub.s32 0, %v1474
  %v1476 = vrot.slane %v1443, %v1475
  %v1478 = vmul.f32 %v1470, %v1476
  %v1479 = vmul.f32 %v1471, %v1476
  %v1481 = vlaneseq
  %v1482 = vshrl.u32 %v1481, 7
  %v1483 = vsub.s32 0, %v1482
  %v1484 = vrot.slane %v1445, %v1483
  %v1486 = vadd.f32 %v1478, %v1484
  %v1487 = vadd.f32 %v1479, %v1484
  %s1488 = scalar_lea.vmem %s10, 32
  %v1489 = vld [vmem:[%s1488] sm:$0xff]
  %v1490 = vld [vmem:[%s1488 + $0x8] sm:$0xff]
  %v1491 = vld [vmem:[%s1488 + $0x10] sm:$0xff]
  %v1492 = vld [vmem:[%s1488 + $0x18] sm:$0xff]
  %v1494 = vsel %vm144, %v1486, 0
  %v1497 = vsel %vm144, %v1487, 0
  %1499 = vmatprep.subr.mxu0 0.0
  %1500 = vmatpush1.msra.mxu0 0.0
  %1501 = vmatprep.subr.mxu0 0.0
  %1502 = vmatpush1.msra.mxu0 0.0
  %1503 = vmatprep.subr.mxu0 0.0
  %1504 = vmatpush1.msra.mxu0 0.0
  %1505 = vmatprep.subr.mxu0 0.0
  %1506 = vmatpush1.msra.mxu0 0.0
  %1507 = vmatprep.subr.mxu0 0.0
  %1508 = vmatpush1.msra.mxu0 0.0
  %1509 = vmatprep.subr.mxu0 0.0
  %1510 = vmatpush1.msra.mxu0 0.0
  %1511 = vmatprep.subr.mxu0 0.0
  %1512 = vmatpush1.msra.mxu0 0.0
  %1513 = vmatprep.subr.mxu0 0.0
  %1514 = vmatpush1.msra.mxu0 0.0
  %1515 = vmatprep.subr.mxu0 0.0
  %1516 = vmatpush1.msra.mxu0 0.0
  %1517 = vmatprep.subr.mxu0 0.0
  %1518 = vmatpush1.msra.mxu0 0.0
  %1519 = vmatprep.subr.mxu0 0.0
  %1520 = vmatpush1.msra.mxu0 0.0
  %1521 = vmatprep.subr.mxu0 0.0
  %1522 = vmatpush1.msra.mxu0 0.0
  %1523 = vmatprep.subr.mxu0 0.0
  %1524 = vmatpush1.msra.mxu0 %v1492
  %1525 = vmatprep.subr.mxu0 0.0
  %1526 = vmatpush1.msra.mxu0 %v1491
  %1527 = vmatprep.subr.mxu0 0.0
  %1528 = vmatpush1.msra.mxu0 %v1490
  %1529 = vmatprep.subr.mxu0 0.0
  %1530 = vmatpush1.msra.mxu0 %v1489
  %1531 = vmatprep.subr.mxu0 0.0
  %1532 = vmatpush2.msra.mxu0 0.0
  %1533 = vmatprep.subr.mxu0 0.0
  %1534 = vmatpush2.msra.mxu0 0.0
  %1535 = vmatprep.subr.mxu0 0.0
  %1536 = vmatpush2.msra.mxu0 0.0
  %1537 = vmatprep.subr.mxu0 0.0
  %1538 = vmatpush2.msra.mxu0 0.0
  %1539 = vmatprep.subr.mxu0 0.0
  %1540 = vmatpush2.msra.mxu0 0.0
  %1541 = vmatprep.subr.mxu0 0.0
  %1542 = vmatpush2.msra.mxu0 0.0
  %1543 = vmatprep.subr.mxu0 0.0
  %1544 = vmatpush2.msra.mxu0 0.0
  %1545 = vmatprep.subr.mxu0 0.0
  %1546 = vmatpush2.msra.mxu0 0.0
  %1547 = vmatprep.subr.mxu0 0.0
  %1548 = vmatpush2.msra.mxu0 0.0
  %1549 = vmatprep.subr.mxu0 0.0
  %1550 = vmatpush2.msra.mxu0 0.0
  %1551 = vmatprep.subr.mxu0 0.0
  %1552 = vmatpush2.msra.mxu0 0.0
  %1553 = vmatprep.subr.mxu0 0.0
  %1554 = vmatpush2.msra.mxu0 0.0
  %1555 = vmatprep.subr.mxu0 0.0
  %1556 = vmatpush2.msra.mxu0 0.0
  %1557 = vmatprep.subr.mxu0 0.0
  %1558 = vmatpush2.msra.mxu0 0.0
  %1559 = vmatprep.subr.mxu0 0.0
  %1560 = vmatpush2.msra.mxu0 0.0
  %1561 = vmatprep.subr.mxu0 0.0
  %1562 = vmatpush2.msra.mxu0 0.0
  %1563 = vmatprep.mubr.f32.mxu0 0.0
  %1564 = vmatmul.mubr.f32.gmra.mxu0 %v1494
  %v1565 = vpop.f32.mrf.mxu0
  %v1566 = vadd.f32 0.0, %v1565
  %v1567 = vpop.f32.mrf.mxu0
  %1568 = vmatprep.mubr.f32.mxu0 0.0
  %1569 = vmatmul.mubr.f32.gmra.mxu0 %v1497
  %v1570 = vpop.f32.mrf.mxu0
  %v1571 = vadd.f32 0.0, %v1570
  %v1572 = vpop.f32.mrf.mxu0
  %1573 = vdwg.mxu0
  %v1574 = vmul.f32 %v1566, 0.5
  %v1575 = vmul.f32 %v1571, 0.5
  %v1576 = vmul.f32 %v1574, %v110
  %v1577 = vmul.f32 %v1575, %v111
  %v1578 = vmul.f32 %v1574, %v112
  %v1579 = vmul.f32 %v1575, %v113
  %v1580 = vmul.f32 %v1574, %v114
  %v1581 = vmul.f32 %v1575, %v115
  %v1582 = vmul.f32 %v1574, %v116
  %v1583 = vmul.f32 %v1575, %v117
  %v1584 = vmul.f32 %v1574, %v118
  %v1585 = vmul.f32 %v1575, %v119
  %v1586 = vmul.f32 %v1574, %v120
  %v1587 = vmul.f32 %v1575, %v121
  %v1588 = vmul.f32 %v1574, %v122
  %v1589 = vmul.f32 %v1575, %v123
  %v1590 = vmul.f32 %v1574, %v124
  %v1591 = vmul.f32 %v1575, %v125
  %1594 = vrot.lane.b32.xlu0 %v1566, 96
  %v1595 = vpop.permute.xlu0 %1594
  %1596 = vrot.lane.b32.xlu0 %v1571, 96
  %v1597 = vpop.permute.xlu0 %1596
  %v1599 = vsel %vm144, %v1576, 0
  %v1602 = vsel %vm144, %v1577, 0
  %v1605 = vsel %vm144, %v1578, 0
  %v1608 = vsel %vm144, %v1579, 0
  %v1611 = vsel %vm144, %v1580, 0
  %v1614 = vsel %vm144, %v1581, 0
  %v1617 = vsel %vm144, %v1582, 0
  %v1620 = vsel %vm144, %v1583, 0
  %v1623 = vsel %vm144, %v1584, 0
  %v1626 = vsel %vm144, %v1585, 0
  %v1629 = vsel %vm144, %v1586, 0
  %v1632 = vsel %vm144, %v1587, 0
  %v1635 = vsel %vm144, %v1588, 0
  %v1638 = vsel %vm144, %v1589, 0
  %v1641 = vsel %vm144, %v1590, 0
  %v1644 = vsel %vm144, %v1591, 0
  %v1646 = vsel %vm144, %v1595, 0
  %v1648 = vsel %vm144, %v1597, 0
  %1650 = vmatprep.subr.mxu0 0.0
  %1651 = vmatpush1.xpose.msra.mxu0 0.0
  %1652 = vmatprep.subr.mxu0 0.0
  %1653 = vmatpush1.xpose.msra.mxu0 0.0
  %1654 = vmatprep.subr.mxu0 0.0
  %1655 = vmatpush1.xpose.msra.mxu0 0.0
  %1656 = vmatprep.subr.mxu0 0.0
  %1657 = vmatpush1.xpose.msra.mxu0 0.0
  %1658 = vmatprep.subr.mxu0 0.0
  %1659 = vmatpush1.xpose.msra.mxu0 0.0
  %1660 = vmatprep.subr.mxu0 0.0
  %1661 = vmatpush1.xpose.msra.mxu0 0.0
  %1662 = vmatprep.subr.mxu0 0.0
  %1663 = vmatpush1.xpose.msra.mxu0 0.0
  %1664 = vmatprep.subr.mxu0 0.0
  %1665 = vmatpush1.xpose.msra.mxu0 0.0
  %1666 = vmatprep.subr.mxu0 0.0
  %1667 = vmatpush1.xpose.msra.mxu0 0.0
  %1668 = vmatprep.subr.mxu0 0.0
  %1669 = vmatpush1.xpose.msra.mxu0 0.0
  %1670 = vmatprep.subr.mxu0 0.0
  %1671 = vmatpush1.xpose.msra.mxu0 0.0
  %1672 = vmatprep.subr.mxu0 0.0
  %1673 = vmatpush1.xpose.msra.mxu0 0.0
  %1674 = vmatprep.subr.mxu0 0.0
  %1675 = vmatpush1.xpose.msra.mxu0 0.0
  %1676 = vmatprep.subr.mxu0 0.0
  %1677 = vmatpush1.xpose.msra.mxu0 0.0
  %1678 = vmatprep.subr.mxu0 0.0
  %1679 = vmatpush1.xpose.msra.mxu0 %v1648
  %1680 = vmatprep.subr.mxu0 0.0
  %1681 = vmatpush1.xpose.msra.mxu0 %v1646
  %1682 = vmatprep.subr.mxu0 0.0
  %1683 = vmatpush2.xpose.msra.mxu0 0.0
  %1684 = vmatprep.subr.mxu0 0.0
  %1685 = vmatpush2.xpose.msra.mxu0 0.0
  %1686 = vmatprep.subr.mxu0 0.0
  %1687 = vmatpush2.xpose.msra.mxu0 0.0
  %1688 = vmatprep.subr.mxu0 0.0
  %1689 = vmatpush2.xpose.msra.mxu0 0.0
  %1690 = vmatprep.subr.mxu0 0.0
  %1691 = vmatpush2.xpose.msra.mxu0 0.0
  %1692 = vmatprep.subr.mxu0 0.0
  %1693 = vmatpush2.xpose.msra.mxu0 0.0
  %1694 = vmatprep.subr.mxu0 0.0
  %1695 = vmatpush2.xpose.msra.mxu0 0.0
  %1696 = vmatprep.subr.mxu0 0.0
  %1697 = vmatpush2.xpose.msra.mxu0 0.0
  %1698 = vmatprep.subr.mxu0 0.0
  %1699 = vmatpush2.xpose.msra.mxu0 0.0
  %1700 = vmatprep.subr.mxu0 0.0
  %1701 = vmatpush2.xpose.msra.mxu0 0.0
  %1702 = vmatprep.subr.mxu0 0.0
  %1703 = vmatpush2.xpose.msra.mxu0 0.0
  %1704 = vmatprep.subr.mxu0 0.0
  %1705 = vmatpush2.xpose.msra.mxu0 0.0
  %1706 = vmatprep.subr.mxu0 0.0
  %1707 = vmatpush2.xpose.msra.mxu0 0.0
  %1708 = vmatprep.subr.mxu0 0.0
  %1709 = vmatpush2.xpose.msra.mxu0 0.0
  %1710 = vmatprep.subr.mxu0 0.0
  %1711 = vmatpush2.xpose.msra.mxu0 0.0
  %1712 = vmatprep.subr.mxu0 0.0
  %1713 = vmatpush2.xpose.msra.mxu0 0.0
  %1714 = vmatprep.mubr.f32.mxu0 0.0
  %1715 = vmatmul.mubr.f32.gmra.mxu0 %v1599
  %v1716 = vpop.f32.mrf.mxu0
  %v1717 = vadd.f32 %v126, %v1716
  %v1718 = vpop.f32.mrf.mxu0
  %1719 = vmatprep.mubr.f32.mxu0 0.0
  %1720 = vmatmul.mubr.f32.gmra.mxu0 %v1602
  %v1721 = vpop.f32.mrf.mxu0
  %v1722 = vadd.f32 %v127, %v1721
  %v1723 = vpop.f32.mrf.mxu0
  %1724 = vmatprep.mubr.f32.mxu0 0.0
  %1725 = vmatmul.mubr.f32.gmra.mxu0 %v1605
  %v1726 = vpop.f32.mrf.mxu0
  %v1727 = vadd.f32 %v128, %v1726
  %v1728 = vpop.f32.mrf.mxu0
  %1729 = vmatprep.mubr.f32.mxu0 0.0
  %1730 = vmatmul.mubr.f32.gmra.mxu0 %v1608
  %v1731 = vpop.f32.mrf.mxu0
  %v1732 = vadd.f32 %v129, %v1731
  %v1733 = vpop.f32.mrf.mxu0
  %1734 = vmatprep.mubr.f32.mxu0 0.0
  %1735 = vmatmul.mubr.f32.gmra.mxu0 %v1611
  %v1736 = vpop.f32.mrf.mxu0
  %v1737 = vadd.f32 %v130, %v1736
  %v1738 = vpop.f32.mrf.mxu0
  %1739 = vmatprep.mubr.f32.mxu0 0.0
  %1740 = vmatmul.mubr.f32.gmra.mxu0 %v1614
  %v1741 = vpop.f32.mrf.mxu0
  %v1742 = vadd.f32 %v131, %v1741
  %v1743 = vpop.f32.mrf.mxu0
  %1744 = vmatprep.mubr.f32.mxu0 0.0
  %1745 = vmatmul.mubr.f32.gmra.mxu0 %v1617
  %v1746 = vpop.f32.mrf.mxu0
  %v1747 = vadd.f32 %v132, %v1746
  %v1748 = vpop.f32.mrf.mxu0
  %1749 = vmatprep.mubr.f32.mxu0 0.0
  %1750 = vmatmul.mubr.f32.gmra.mxu0 %v1620
  %v1751 = vpop.f32.mrf.mxu0
  %v1752 = vadd.f32 %v133, %v1751
  %v1753 = vpop.f32.mrf.mxu0
  %1754 = vmatprep.mubr.f32.mxu0 0.0
  %1755 = vmatmul.mubr.f32.gmra.mxu0 %v1623
  %v1756 = vpop.f32.mrf.mxu0
  %v1757 = vadd.f32 %v134, %v1756
  %v1758 = vpop.f32.mrf.mxu0
  %1759 = vmatprep.mubr.f32.mxu0 0.0
  %1760 = vmatmul.mubr.f32.gmra.mxu0 %v1626
  %v1761 = vpop.f32.mrf.mxu0
  %v1762 = vadd.f32 %v135, %v1761
  %v1763 = vpop.f32.mrf.mxu0
  %1764 = vmatprep.mubr.f32.mxu0 0.0
  %1765 = vmatmul.mubr.f32.gmra.mxu0 %v1629
  %v1766 = vpop.f32.mrf.mxu0
  %v1767 = vadd.f32 %v136, %v1766
  %v1768 = vpop.f32.mrf.mxu0
  %1769 = vmatprep.mubr.f32.mxu0 0.0
  %1770 = vmatmul.mubr.f32.gmra.mxu0 %v1632
  %v1771 = vpop.f32.mrf.mxu0
  %v1772 = vadd.f32 %v137, %v1771
  %v1773 = vpop.f32.mrf.mxu0
  %1774 = vmatprep.mubr.f32.mxu0 0.0
  %1775 = vmatmul.mubr.f32.gmra.mxu0 %v1635
  %v1776 = vpop.f32.mrf.mxu0
  %v1777 = vadd.f32 %v138, %v1776
  %v1778 = vpop.f32.mrf.mxu0
  %1779 = vmatprep.mubr.f32.mxu0 0.0
  %1780 = vmatmul.mubr.f32.gmra.mxu0 %v1638
  %v1781 = vpop.f32.mrf.mxu0
  %v1782 = vadd.f32 %v139, %v1781
  %v1783 = vpop.f32.mrf.mxu0
  %1784 = vmatprep.mubr.f32.mxu0 0.0
  %1785 = vmatmul.mubr.f32.gmra.mxu0 %v1641
  %v1786 = vpop.f32.mrf.mxu0
  %v1787 = vadd.f32 %v140, %v1786
  %v1788 = vpop.f32.mrf.mxu0
  %1789 = vmatprep.mubr.f32.mxu0 0.0
  %1790 = vmatmul.mubr.f32.gmra.mxu0 %v1644
  %v1791 = vpop.f32.mrf.mxu0
  %v1792 = vadd.f32 %v141, %v1791
  %v1793 = vpop.f32.mrf.mxu0
  %1794 = vdwg.mxu0
  %v1795 = vsel %vm692, %v1717, -inf
  %1796 = vmax.xlane.f32.xlu0 %v1795
  %v1797 = vpop.xlane.xlu0 %1796
  %v1798 = vsel %vm692, %v1722, -inf
  %1799 = vmax.xlane.f32.xlu0 %v1798
  %v1800 = vpop.xlane.xlu0 %1799
  %v1801 = vsel %vm692, %v1727, -inf
  %1802 = vmax.xlane.f32.xlu0 %v1801
  %v1803 = vpop.xlane.xlu0 %1802
  %v1804 = vsel %vm692, %v1732, -inf
  %1805 = vmax.xlane.f32.xlu0 %v1804
  %v1806 = vpop.xlane.xlu0 %1805
  %v1807 = vsel %vm692, %v1737, -inf
  %1808 = vmax.xlane.f32.xlu0 %v1807
  %v1809 = vpop.xlane.xlu0 %1808
  %v1810 = vsel %vm692, %v1742, -inf
  %1811 = vmax.xlane.f32.xlu0 %v1810
  %v1812 = vpop.xlane.xlu0 %1811
  %v1813 = vsel %vm692, %v1747, -inf
  %1814 = vmax.xlane.f32.xlu0 %v1813
  %v1815 = vpop.xlane.xlu0 %1814
  %v1816 = vsel %vm692, %v1752, -inf
  %1817 = vmax.xlane.f32.xlu0 %v1816
  %v1818 = vpop.xlane.xlu0 %1817
  %v1819 = vsel %vm692, %v1757, -inf
  %1820 = vmax.xlane.f32.xlu0 %v1819
  %v1821 = vpop.xlane.xlu0 %1820
  %v1822 = vsel %vm692, %v1762, -inf
  %1823 = vmax.xlane.f32.xlu0 %v1822
  %v1824 = vpop.xlane.xlu0 %1823
  %v1825 = vsel %vm692, %v1767, -inf
  %1826 = vmax.xlane.f32.xlu0 %v1825
  %v1827 = vpop.xlane.xlu0 %1826
  %v1828 = vsel %vm692, %v1772, -inf
  %1829 = vmax.xlane.f32.xlu0 %v1828
  %v1830 = vpop.xlane.xlu0 %1829
  %v1831 = vsel %vm692, %v1777, -inf
  %1832 = vmax.xlane.f32.xlu0 %v1831
  %v1833 = vpop.xlane.xlu0 %1832
  %v1834 = vsel %vm692, %v1782, -inf
  %1835 = vmax.xlane.f32.xlu0 %v1834
  %v1836 = vpop.xlane.xlu0 %1835
  %v1837 = vsel %vm692, %v1787, -inf
  %1838 = vmax.xlane.f32.xlu0 %v1837
  %v1839 = vpop.xlane.xlu0 %1838
  %v1840 = vsel %vm692, %v1792, -inf
  %1841 = vmax.xlane.f32.xlu0 %v1840
  %v1842 = vpop.xlane.xlu0 %1841
  %v1843 = vsub.f32 %v1717, %v1797
  %v1844 = vsub.f32 %v1722, %v1800
  %v1845 = vsub.f32 %v1727, %v1803
  %v1846 = vsub.f32 %v1732, %v1806
  %v1847 = vsub.f32 %v1737, %v1809
  %v1848 = vsub.f32 %v1742, %v1812
  %v1849 = vsub.f32 %v1747, %v1815
  %v1850 = vsub.f32 %v1752, %v1818
  %v1851 = vsub.f32 %v1757, %v1821
  %v1852 = vsub.f32 %v1762, %v1824
  %v1853 = vsub.f32 %v1767, %v1827
  %v1854 = vsub.f32 %v1772, %v1830
  %v1855 = vsub.f32 %v1777, %v1833
  %v1856 = vsub.f32 %v1782, %v1836
  %v1857 = vsub.f32 %v1787, %v1839
  %v1858 = vsub.f32 %v1792, %v1842
  %v1859 = vmul.f32 %v1843, 1.442695
  %v1860 = vpow.pop %v1859
  %v1861 = vmul.f32 %v1844, 1.442695
  %v1862 = vpow.pop %v1861
  %v1863 = vmul.f32 %v1845, 1.442695
  %v1864 = vpow.pop %v1863
  %v1865 = vmul.f32 %v1846, 1.442695
  %v1866 = vpow.pop %v1865
  %v1867 = vmul.f32 %v1847, 1.442695
  %v1868 = vpow.pop %v1867
  %v1869 = vmul.f32 %v1848, 1.442695
  %v1870 = vpow.pop %v1869
  %v1871 = vmul.f32 %v1849, 1.442695
  %v1872 = vpow.pop %v1871
  %v1873 = vmul.f32 %v1850, 1.442695
  %v1874 = vpow.pop %v1873
  %v1875 = vmul.f32 %v1851, 1.442695
  %v1876 = vpow.pop %v1875
  %v1877 = vmul.f32 %v1852, 1.442695
  %v1878 = vpow.pop %v1877
  %v1879 = vmul.f32 %v1853, 1.442695
  %v1880 = vpow.pop %v1879
  %v1881 = vmul.f32 %v1854, 1.442695
  %v1882 = vpow.pop %v1881
  %v1883 = vmul.f32 %v1855, 1.442695
  %v1884 = vpow.pop %v1883
  %v1885 = vmul.f32 %v1856, 1.442695
  %v1886 = vpow.pop %v1885
  %v1887 = vmul.f32 %v1857, 1.442695
  %v1888 = vpow.pop %v1887
  %v1889 = vmul.f32 %v1858, 1.442695
  %v1890 = vpow.pop %v1889
  %v1891 = vsel %vm692, %v1860, 0.0
  %1892 = vadd.xlane.f32.xlu0 %v1891
  %v1893 = vpop.xlane.xlu0 %1892
  %v1894 = vsel %vm692, %v1862, 0.0
  %1895 = vadd.xlane.f32.xlu0 %v1894
  %v1896 = vpop.xlane.xlu0 %1895
  %v1897 = vsel %vm692, %v1864, 0.0
  %1898 = vadd.xlane.f32.xlu0 %v1897
  %v1899 = vpop.xlane.xlu0 %1898
  %v1900 = vsel %vm692, %v1866, 0.0
  %1901 = vadd.xlane.f32.xlu0 %v1900
  %v1902 = vpop.xlane.xlu0 %1901
  %v1903 = vsel %vm692, %v1868, 0.0
  %1904 = vadd.xlane.f32.xlu0 %v1903
  %v1905 = vpop.xlane.xlu0 %1904
  %v1906 = vsel %vm692, %v1870, 0.0
  %1907 = vadd.xlane.f32.xlu0 %v1906
  %v1908 = vpop.xlane.xlu0 %1907
  %v1909 = vsel %vm692, %v1872, 0.0
  %1910 = vadd.xlane.f32.xlu0 %v1909
  %v1911 = vpop.xlane.xlu0 %1910
  %v1912 = vsel %vm692, %v1874, 0.0
  %1913 = vadd.xlane.f32.xlu0 %v1912
  %v1914 = vpop.xlane.xlu0 %1913
  %v1915 = vsel %vm692, %v1876, 0.0
  %1916 = vadd.xlane.f32.xlu0 %v1915
  %v1917 = vpop.xlane.xlu0 %1916
  %v1918 = vsel %vm692, %v1878, 0.0
  %1919 = vadd.xlane.f32.xlu0 %v1918
  %v1920 = vpop.xlane.xlu0 %1919
  %v1921 = vsel %vm692, %v1880, 0.0
  %1922 = vadd.xlane.f32.xlu0 %v1921
  %v1923 = vpop.xlane.xlu0 %1922
  %v1924 = vsel %vm692, %v1882, 0.0
  %1925 = vadd.xlane.f32.xlu0 %v1924
  %v1926 = vpop.xlane.xlu0 %1925
  %v1927 = vsel %vm692, %v1884, 0.0
  %1928 = vadd.xlane.f32.xlu0 %v1927
  %v1929 = vpop.xlane.xlu0 %1928
  %v1930 = vsel %vm692, %v1886, 0.0
  %1931 = vadd.xlane.f32.xlu0 %v1930
  %v1932 = vpop.xlane.xlu0 %1931
  %v1933 = vsel %vm692, %v1888, 0.0
  %1934 = vadd.xlane.f32.xlu0 %v1933
  %v1935 = vpop.xlane.xlu0 %1934
  %v1936 = vsel %vm692, %v1890, 0.0
  %1937 = vadd.xlane.f32.xlu0 %v1936
  %v1938 = vpop.xlane.xlu0 %1937
  %v1939 = vrcp.pop %v1893
  %v1940 = vrcp.pop %v1896
  %v1941 = vrcp.pop %v1899
  %v1942 = vrcp.pop %v1902
  %v1943 = vrcp.pop %v1905
  %v1944 = vrcp.pop %v1908
  %v1945 = vrcp.pop %v1911
  %v1946 = vrcp.pop %v1914
  %v1947 = vrcp.pop %v1917
  %v1948 = vrcp.pop %v1920
  %v1949 = vrcp.pop %v1923
  %v1950 = vrcp.pop %v1926
  %v1951 = vrcp.pop %v1929
  %v1952 = vrcp.pop %v1932
  %v1953 = vrcp.pop %v1935
  %v1954 = vrcp.pop %v1938
  %v1955 = vmul.f32 %v1860, %v1939
  %v1956 = vmul.f32 %v1862, %v1940
  %v1957 = vmul.f32 %v1864, %v1941
  %v1958 = vmul.f32 %v1866, %v1942
  %v1959 = vmul.f32 %v1868, %v1943
  %v1960 = vmul.f32 %v1870, %v1944
  %v1961 = vmul.f32 %v1872, %v1945
  %v1962 = vmul.f32 %v1874, %v1946
  %v1963 = vmul.f32 %v1876, %v1947
  %v1964 = vmul.f32 %v1878, %v1948
  %v1965 = vmul.f32 %v1880, %v1949
  %v1966 = vmul.f32 %v1882, %v1950
  %v1967 = vmul.f32 %v1884, %v1951
  %v1968 = vmul.f32 %v1886, %v1952
  %v1969 = vmul.f32 %v1888, %v1953
  %v1970 = vmul.f32 %v1890, %v1954
  %v1974 = vsel %vm692, %v1955, 0
  %v1977 = vsel %vm692, %v1956, 0
  %v1980 = vsel %vm692, %v1957, 0
  %v1983 = vsel %vm692, %v1958, 0
  %v1986 = vsel %vm692, %v1959, 0
  %v1989 = vsel %vm692, %v1960, 0
  %v1992 = vsel %vm692, %v1961, 0
  %v1995 = vsel %vm692, %v1962, 0
  %v1998 = vsel %vm692, %v1963, 0
  %v2001 = vsel %vm692, %v1964, 0
  %v2004 = vsel %vm692, %v1965, 0
  %v2007 = vsel %vm692, %v1966, 0
  %v2010 = vsel %vm692, %v1967, 0
  %v2013 = vsel %vm692, %v1968, 0
  %v2016 = vsel %vm692, %v1969, 0
  %v2019 = vsel %vm692, %v1970, 0
  %2021 = vmatprep.subr.mxu0 0.0
  %2022 = vmatpush1.msra.mxu0 0.0
  %2023 = vmatprep.subr.mxu0 0.0
  %2024 = vmatpush1.msra.mxu0 0.0
  %2025 = vmatprep.subr.mxu0 0.0
  %2026 = vmatpush1.msra.mxu0 0.0
  %2027 = vmatprep.subr.mxu0 0.0
  %2028 = vmatpush1.msra.mxu0 0.0
  %2029 = vmatprep.subr.mxu0 0.0
  %2030 = vmatpush1.msra.mxu0 0.0
  %2031 = vmatprep.subr.mxu0 0.0
  %2032 = vmatpush1.msra.mxu0 0.0
  %2033 = vmatprep.subr.mxu0 0.0
  %2034 = vmatpush1.msra.mxu0 0.0
  %2035 = vmatprep.subr.mxu0 0.0
  %2036 = vmatpush1.msra.mxu0 0.0
  %2037 = vmatprep.subr.mxu0 0.0
  %2038 = vmatpush1.msra.mxu0 0.0
  %2039 = vmatprep.subr.mxu0 0.0
  %2040 = vmatpush1.msra.mxu0 0.0
  %2041 = vmatprep.subr.mxu0 0.0
  %2042 = vmatpush1.msra.mxu0 0.0
  %2043 = vmatprep.subr.mxu0 0.0
  %2044 = vmatpush1.msra.mxu0 0.0
  %2045 = vmatprep.subr.mxu0 0.0
  %2046 = vmatpush1.msra.mxu0 0.0
  %2047 = vmatprep.subr.mxu0 0.0
  %2048 = vmatpush1.msra.mxu0 0.0
  %2049 = vmatprep.subr.mxu0 0.0
  %2050 = vmatpush1.msra.mxu0 %v1597
  %2051 = vmatprep.subr.mxu0 0.0
  %2052 = vmatpush1.msra.mxu0 %v1595
  %2053 = vmatprep.subr.mxu0 0.0
  %2054 = vmatpush2.msra.mxu0 0.0
  %2055 = vmatprep.subr.mxu0 0.0
  %2056 = vmatpush2.msra.mxu0 0.0
  %2057 = vmatprep.subr.mxu0 0.0
  %2058 = vmatpush2.msra.mxu0 0.0
  %2059 = vmatprep.subr.mxu0 0.0
  %2060 = vmatpush2.msra.mxu0 0.0
  %2061 = vmatprep.subr.mxu0 0.0
  %2062 = vmatpush2.msra.mxu0 0.0
  %2063 = vmatprep.subr.mxu0 0.0
  %2064 = vmatpush2.msra.mxu0 0.0
  %2065 = vmatprep.subr.mxu0 0.0
  %2066 = vmatpush2.msra.mxu0 0.0
  %2067 = vmatprep.subr.mxu0 0.0
  %2068 = vmatpush2.msra.mxu0 0.0
  %2069 = vmatprep.subr.mxu0 0.0
  %2070 = vmatpush2.msra.mxu0 0.0
  %2071 = vmatprep.subr.mxu0 0.0
  %2072 = vmatpush2.msra.mxu0 0.0
  %2073 = vmatprep.subr.mxu0 0.0
  %2074 = vmatpush2.msra.mxu0 0.0
  %2075 = vmatprep.subr.mxu0 0.0
  %2076 = vmatpush2.msra.mxu0 0.0
  %2077 = vmatprep.subr.mxu0 0.0
  %2078 = vmatpush2.msra.mxu0 0.0
  %2079 = vmatprep.subr.mxu0 0.0
  %2080 = vmatpush2.msra.mxu0 0.0
  %2081 = vmatprep.subr.mxu0 0.0
  %2082 = vmatpush2.msra.mxu0 0.0
  %2083 = vmatprep.subr.mxu0 0.0
  %2084 = vmatpush2.msra.mxu0 0.0
  %2085 = vmatprep.mubr.f32.mxu0 0.0
  %2086 = vmatmul.mubr.f32.gmra.mxu0 %v1974
  %v2087 = vpop.f32.mrf.mxu0
  %v2088 = vadd.f32 0.0, %v2087
  %v2089 = vpop.f32.mrf.mxu0
  %2090 = vmatprep.mubr.f32.mxu0 0.0
  %2091 = vmatmul.mubr.f32.gmra.mxu0 %v1977
  %v2092 = vpop.f32.mrf.mxu0
  %v2093 = vadd.f32 0.0, %v2092
  %v2094 = vpop.f32.mrf.mxu0
  %2095 = vmatprep.mubr.f32.mxu0 0.0
  %2096 = vmatmul.mubr.f32.gmra.mxu0 %v1980
  %v2097 = vpop.f32.mrf.mxu0
  %v2098 = vadd.f32 0.0, %v2097
  %v2099 = vpop.f32.mrf.mxu0
  %2100 = vmatprep.mubr.f32.mxu0 0.0
  %2101 = vmatmul.mubr.f32.gmra.mxu0 %v1983
  %v2102 = vpop.f32.mrf.mxu0
  %v2103 = vadd.f32 0.0, %v2102
  %v2104 = vpop.f32.mrf.mxu0
  %2105 = vmatprep.mubr.f32.mxu0 0.0
  %2106 = vmatmul.mubr.f32.gmra.mxu0 %v1986
  %v2107 = vpop.f32.mrf.mxu0
  %v2108 = vadd.f32 0.0, %v2107
  %v2109 = vpop.f32.mrf.mxu0
  %2110 = vmatprep.mubr.f32.mxu0 0.0
  %2111 = vmatmul.mubr.f32.gmra.mxu0 %v1989
  %v2112 = vpop.f32.mrf.mxu0
  %v2113 = vadd.f32 0.0, %v2112
  %v2114 = vpop.f32.mrf.mxu0
  %2115 = vmatprep.mubr.f32.mxu0 0.0
  %2116 = vmatmul.mubr.f32.gmra.mxu0 %v1992
  %v2117 = vpop.f32.mrf.mxu0
  %v2118 = vadd.f32 0.0, %v2117
  %v2119 = vpop.f32.mrf.mxu0
  %2120 = vmatprep.mubr.f32.mxu0 0.0
  %2121 = vmatmul.mubr.f32.gmra.mxu0 %v1995
  %v2122 = vpop.f32.mrf.mxu0
  %v2123 = vadd.f32 0.0, %v2122
  %v2124 = vpop.f32.mrf.mxu0
  %2125 = vmatprep.mubr.f32.mxu0 0.0
  %2126 = vmatmul.mubr.f32.gmra.mxu0 %v1998
  %v2127 = vpop.f32.mrf.mxu0
  %v2128 = vadd.f32 0.0, %v2127
  %v2129 = vpop.f32.mrf.mxu0
  %2130 = vmatprep.mubr.f32.mxu0 0.0
  %2131 = vmatmul.mubr.f32.gmra.mxu0 %v2001
  %v2132 = vpop.f32.mrf.mxu0
  %v2133 = vadd.f32 0.0, %v2132
  %v2134 = vpop.f32.mrf.mxu0
  %2135 = vmatprep.mubr.f32.mxu0 0.0
  %2136 = vmatmul.mubr.f32.gmra.mxu0 %v2004
  %v2137 = vpop.f32.mrf.mxu0
  %v2138 = vadd.f32 0.0, %v2137
  %v2139 = vpop.f32.mrf.mxu0
  %2140 = vmatprep.mubr.f32.mxu0 0.0
  %2141 = vmatmul.mubr.f32.gmra.mxu0 %v2007
  %v2142 = vpop.f32.mrf.mxu0
  %v2143 = vadd.f32 0.0, %v2142
  %v2144 = vpop.f32.mrf.mxu0
  %2145 = vmatprep.mubr.f32.mxu0 0.0
  %2146 = vmatmul.mubr.f32.gmra.mxu0 %v2010
  %v2147 = vpop.f32.mrf.mxu0
  %v2148 = vadd.f32 0.0, %v2147
  %v2149 = vpop.f32.mrf.mxu0
  %2150 = vmatprep.mubr.f32.mxu0 0.0
  %2151 = vmatmul.mubr.f32.gmra.mxu0 %v2013
  %v2152 = vpop.f32.mrf.mxu0
  %v2153 = vadd.f32 0.0, %v2152
  %v2154 = vpop.f32.mrf.mxu0
  %2155 = vmatprep.mubr.f32.mxu0 0.0
  %2156 = vmatmul.mubr.f32.gmra.mxu0 %v2016
  %v2157 = vpop.f32.mrf.mxu0
  %v2158 = vadd.f32 0.0, %v2157
  %v2159 = vpop.f32.mrf.mxu0
  %2160 = vmatprep.mubr.f32.mxu0 0.0
  %2161 = vmatmul.mubr.f32.gmra.mxu0 %v2019
  %v2162 = vpop.f32.mrf.mxu0
  %v2163 = vadd.f32 0.0, %v2162
  %v2164 = vpop.f32.mrf.mxu0
  %2165 = vdwg.mxu0
  %v2166 = vmul.f32 %v2088, %v110
  %v2167 = vmul.f32 %v2093, %v111
  %v2168 = vmul.f32 %v2098, %v112
  %v2169 = vmul.f32 %v2103, %v113
  %v2170 = vadd.f32 %v2166, %v2168
  %v2171 = vadd.f32 %v2167, %v2169
  %v2172 = vmul.f32 %v2108, %v114
  %v2173 = vmul.f32 %v2113, %v115
  %v2174 = vadd.f32 %v2170, %v2172
  %v2175 = vadd.f32 %v2171, %v2173
  %v2176 = vmul.f32 %v2118, %v116
  %v2177 = vmul.f32 %v2123, %v117
  %v2178 = vadd.f32 %v2174, %v2176
  %v2179 = vadd.f32 %v2175, %v2177
  %v2180 = vmul.f32 %v2128, %v118
  %v2181 = vmul.f32 %v2133, %v119
  %v2182 = vadd.f32 %v2178, %v2180
  %v2183 = vadd.f32 %v2179, %v2181
  %v2184 = vmul.f32 %v2138, %v120
  %v2185 = vmul.f32 %v2143, %v121
  %v2186 = vadd.f32 %v2182, %v2184
  %v2187 = vadd.f32 %v2183, %v2185
  %v2188 = vmul.f32 %v2148, %v122
  %v2189 = vmul.f32 %v2153, %v123
  %v2190 = vadd.f32 %v2186, %v2188
  %v2191 = vadd.f32 %v2187, %v2189
  %v2192 = vmul.f32 %v2158, %v124
  %v2193 = vmul.f32 %v2163, %v125
  %v2194 = vadd.f32 %v2190, %v2192
  %v2195 = vadd.f32 %v2191, %v2193
  %s2196 = scalar_lea.vmem %s11, 32
  %v2197 = vld [vmem:[%s2196] sm:$0xff]
  %v2198 = vld [vmem:[%s2196 + $0x8] sm:$0xff]
  %v2199 = vld [vmem:[%s2196 + $0x10] sm:$0xff]
  %v2200 = vld [vmem:[%s2196 + $0x18] sm:$0xff]
  %s2201 = scalar_lea.vmem %s12, 1
  %v2202 = vld [vmem:[%s2201] sm:$0x1]
  %v2204 = vlaneseq
  %v2205 = vshrl.u32 %v2204, 7
  %v2206 = vsub.s32 0, %v2205
  %v2207 = vrot.slane %v2202, %v2206
  %v2210 = vsel %vm144, %v2194, 0
  %v2213 = vsel %vm144, %v2195, 0
  %2215 = vmatprep.subr.mxu0 0.0
  %2216 = vmatpush1.msra.mxu0 0.0
  %2217 = vmatprep.subr.mxu0 0.0
  %2218 = vmatpush1.msra.mxu0 0.0
  %2219 = vmatprep.subr.mxu0 0.0
  %2220 = vmatpush1.msra.mxu0 0.0
  %2221 = vmatprep.subr.mxu0 0.0
  %2222 = vmatpush1.msra.mxu0 0.0
  %2223 = vmatprep.subr.mxu0 0.0
  %2224 = vmatpush1.msra.mxu0 0.0
  %2225 = vmatprep.subr.mxu0 0.0
  %2226 = vmatpush1.msra.mxu0 0.0
  %2227 = vmatprep.subr.mxu0 0.0
  %2228 = vmatpush1.msra.mxu0 0.0
  %2229 = vmatprep.subr.mxu0 0.0
  %2230 = vmatpush1.msra.mxu0 0.0
  %2231 = vmatprep.subr.mxu0 0.0
  %2232 = vmatpush1.msra.mxu0 0.0
  %2233 = vmatprep.subr.mxu0 0.0
  %2234 = vmatpush1.msra.mxu0 0.0
  %2235 = vmatprep.subr.mxu0 0.0
  %2236 = vmatpush1.msra.mxu0 0.0
  %2237 = vmatprep.subr.mxu0 0.0
  %2238 = vmatpush1.msra.mxu0 0.0
  %2239 = vmatprep.subr.mxu0 0.0
  %2240 = vmatpush1.msra.mxu0 %v2200
  %2241 = vmatprep.subr.mxu0 0.0
  %2242 = vmatpush1.msra.mxu0 %v2199
  %2243 = vmatprep.subr.mxu0 0.0
  %2244 = vmatpush1.msra.mxu0 %v2198
  %2245 = vmatprep.subr.mxu0 0.0
  %2246 = vmatpush1.msra.mxu0 %v2197
  %2247 = vmatprep.subr.mxu0 0.0
  %2248 = vmatpush2.msra.mxu0 0.0
  %2249 = vmatprep.subr.mxu0 0.0
  %2250 = vmatpush2.msra.mxu0 0.0
  %2251 = vmatprep.subr.mxu0 0.0
  %2252 = vmatpush2.msra.mxu0 0.0
  %2253 = vmatprep.subr.mxu0 0.0
  %2254 = vmatpush2.msra.mxu0 0.0
  %2255 = vmatprep.subr.mxu0 0.0
  %2256 = vmatpush2.msra.mxu0 0.0
  %2257 = vmatprep.subr.mxu0 0.0
  %2258 = vmatpush2.msra.mxu0 0.0
  %2259 = vmatprep.subr.mxu0 0.0
  %2260 = vmatpush2.msra.mxu0 0.0
  %2261 = vmatprep.subr.mxu0 0.0
  %2262 = vmatpush2.msra.mxu0 0.0
  %2263 = vmatprep.subr.mxu0 0.0
  %2264 = vmatpush2.msra.mxu0 0.0
  %2265 = vmatprep.subr.mxu0 0.0
  %2266 = vmatpush2.msra.mxu0 0.0
  %2267 = vmatprep.subr.mxu0 0.0
  %2268 = vmatpush2.msra.mxu0 0.0
  %2269 = vmatprep.subr.mxu0 0.0
  %2270 = vmatpush2.msra.mxu0 0.0
  %2271 = vmatprep.subr.mxu0 0.0
  %2272 = vmatpush2.msra.mxu0 0.0
  %2273 = vmatprep.subr.mxu0 0.0
  %2274 = vmatpush2.msra.mxu0 0.0
  %2275 = vmatprep.subr.mxu0 0.0
  %2276 = vmatpush2.msra.mxu0 0.0
  %2277 = vmatprep.subr.mxu0 0.0
  %2278 = vmatpush2.msra.mxu0 0.0
  %2279 = vmatprep.mubr.f32.mxu0 0.0
  %2280 = vmatmul.mubr.f32.gmra.mxu0 %v2210
  %v2281 = vpop.f32.mrf.mxu0
  %v2282 = vadd.f32 %v2207, %v2281
  %v2283 = vpop.f32.mrf.mxu0
  %2284 = vmatprep.mubr.f32.mxu0 0.0
  %2285 = vmatmul.mubr.f32.gmra.mxu0 %v2213
  %v2286 = vpop.f32.mrf.mxu0
  %v2287 = vadd.f32 %v2207, %v2286
  %v2288 = vpop.f32.mrf.mxu0
  %2289 = vdwg.mxu0
  %v2290 = vadd.f32 %v2282, %v1440
  %v2291 = vadd.f32 %v2287, %v1441
  %s2292 = scalar_lea.vmem %s13, 1
  %v2293 = vld [vmem:[%s2292] sm:$0x1]
  %s2294 = scalar_lea.vmem %s14, 1
  %v2295 = vld [vmem:[%s2294] sm:$0x1]
  %v2296 = vsel %vm144, %v2290, 0.0
  %2297 = vadd.xlane.f32.xlu0 %v2296
  %v2298 = vpop.xlane.xlu0 %2297
  %v2299 = vsel %vm144, %v2291, 0.0
  %2300 = vadd.xlane.f32.xlu0 %v2299
  %v2301 = vpop.xlane.xlu0 %2300
  %v2302 = vmul.f32 %v2298, %v151
  %v2303 = vmul.f32 %v2301, %v151
  %v2304 = vsub.f32 %v2290, %v2302
  %v2305 = vsub.f32 %v2291, %v2303
  %v2306 = vmul.f32 %v2304, %v2304
  %v2307 = vmul.f32 %v2305, %v2305
  %v2308 = vsel %vm144, %v2306, 0.0
  %2309 = vadd.xlane.f32.xlu0 %v2308
  %v2310 = vpop.xlane.xlu0 %2309
  %v2311 = vsel %vm144, %v2307, 0.0
  %2312 = vadd.xlane.f32.xlu0 %v2311
  %v2313 = vpop.xlane.xlu0 %2312
  %v2314 = vmul.f32 %v2310, %v151
  %v2315 = vmul.f32 %v2313, %v151
  %v2316 = vadd.f32 %v2314, 1e-05
  %v2317 = vadd.f32 %v2315, 1e-05
  %v2318 = vrsqrt.pop %v2316
  %v2319 = vrsqrt.pop %v2317
  %v2320 = vmul.f32 %v2304, %v2318
  %v2321 = vmul.f32 %v2305, %v2319
  %v2323 = vlaneseq
  %v2324 = vshrl.u32 %v2323, 7
  %v2325 = vsub.s32 0, %v2324
  %v2326 = vrot.slane %v2293, %v2325
  %v2328 = vmul.f32 %v2320, %v2326
  %v2329 = vmul.f32 %v2321, %v2326
  %v2331 = vlaneseq
  %v2332 = vshrl.u32 %v2331, 7
  %v2333 = vsub.s32 0, %v2332
  %v2334 = vrot.slane %v2295, %v2333
  %v2336 = vadd.f32 %v2328, %v2334
  %v2337 = vadd.f32 %v2329, %v2334
  %s2338 = scalar_lea.vmem %s15, 32
  %v2339 = vld [vmem:[%s2338] sm:$0xff]
  %v2340 = vld [vmem:[%s2338 + $0x8] sm:$0xff]
  %v2341 = vld [vmem:[%s2338 + $0x10] sm:$0xff]
  %v2342 = vld [vmem:[%s2338 + $0x18] sm:$0xff]
  %s2343 = scalar_lea.vmem %s16, 1
  %v2344 = vld [vmem:[%s2343] sm:$0x1]
  %v2346 = vlaneseq
  %v2347 = vshrl.u32 %v2346, 7
  %v2348 = vsub.s32 0, %v2347
  %v2349 = vrot.slane %v2344, %v2348
  %v2352 = vsel %vm144, %v2336, 0
  %v2355 = vsel %vm144, %v2337, 0
  %2357 = vmatprep.subr.mxu0 0.0
  %2358 = vmatpush1.msra.mxu0 0.0
  %2359 = vmatprep.subr.mxu0 0.0
  %2360 = vmatpush1.msra.mxu0 0.0
  %2361 = vmatprep.subr.mxu0 0.0
  %2362 = vmatpush1.msra.mxu0 0.0
  %2363 = vmatprep.subr.mxu0 0.0
  %2364 = vmatpush1.msra.mxu0 0.0
  %2365 = vmatprep.subr.mxu0 0.0
  %2366 = vmatpush1.msra.mxu0 0.0
  %2367 = vmatprep.subr.mxu0 0.0
  %2368 = vmatpush1.msra.mxu0 0.0
  %2369 = vmatprep.subr.mxu0 0.0
  %2370 = vmatpush1.msra.mxu0 0.0
  %2371 = vmatprep.subr.mxu0 0.0
  %2372 = vmatpush1.msra.mxu0 0.0
  %2373 = vmatprep.subr.mxu0 0.0
  %2374 = vmatpush1.msra.mxu0 0.0
  %2375 = vmatprep.subr.mxu0 0.0
  %2376 = vmatpush1.msra.mxu0 0.0
  %2377 = vmatprep.subr.mxu0 0.0
  %2378 = vmatpush1.msra.mxu0 0.0
  %2379 = vmatprep.subr.mxu0 0.0
  %2380 = vmatpush1.msra.mxu0 0.0
  %2381 = vmatprep.subr.mxu0 0.0
  %2382 = vmatpush1.msra.mxu0 %v2342
  %2383 = vmatprep.subr.mxu0 0.0
  %2384 = vmatpush1.msra.mxu0 %v2341
  %2385 = vmatprep.subr.mxu0 0.0
  %2386 = vmatpush1.msra.mxu0 %v2340
  %2387 = vmatprep.subr.mxu0 0.0
  %2388 = vmatpush1.msra.mxu0 %v2339
  %2389 = vmatprep.subr.mxu0 0.0
  %2390 = vmatpush2.msra.mxu0 0.0
  %2391 = vmatprep.subr.mxu0 0.0
  %2392 = vmatpush2.msra.mxu0 0.0
  %2393 = vmatprep.subr.mxu0 0.0
  %2394 = vmatpush2.msra.mxu0 0.0
  %2395 = vmatprep.subr.mxu0 0.0
  %2396 = vmatpush2.msra.mxu0 0.0
  %2397 = vmatprep.subr.mxu0 0.0
  %2398 = vmatpush2.msra.mxu0 0.0
  %2399 = vmatprep.subr.mxu0 0.0
  %2400 = vmatpush2.msra.mxu0 0.0
  %2401 = vmatprep.subr.mxu0 0.0
  %2402 = vmatpush2.msra.mxu0 0.0
  %2403 = vmatprep.subr.mxu0 0.0
  %2404 = vmatpush2.msra.mxu0 0.0
  %2405 = vmatprep.subr.mxu0 0.0
  %2406 = vmatpush2.msra.mxu0 0.0
  %2407 = vmatprep.subr.mxu0 0.0
  %2408 = vmatpush2.msra.mxu0 0.0
  %2409 = vmatprep.subr.mxu0 0.0
  %2410 = vmatpush2.msra.mxu0 0.0
  %2411 = vmatprep.subr.mxu0 0.0
  %2412 = vmatpush2.msra.mxu0 0.0
  %2413 = vmatprep.subr.mxu0 0.0
  %2414 = vmatpush2.msra.mxu0 0.0
  %2415 = vmatprep.subr.mxu0 0.0
  %2416 = vmatpush2.msra.mxu0 0.0
  %2417 = vmatprep.subr.mxu0 0.0
  %2418 = vmatpush2.msra.mxu0 0.0
  %2419 = vmatprep.subr.mxu0 0.0
  %2420 = vmatpush2.msra.mxu0 0.0
  %2421 = vmatprep.mubr.f32.mxu0 0.0
  %2422 = vmatmul.mubr.f32.gmra.mxu0 %v2352
  %v2423 = vpop.f32.mrf.mxu0
  %v2424 = vadd.f32 %v2349, %v2423
  %v2425 = vpop.f32.mrf.mxu0
  %2426 = vmatprep.mubr.f32.mxu0 0.0
  %2427 = vmatmul.mubr.f32.gmra.mxu0 %v2355
  %v2428 = vpop.f32.mrf.mxu0
  %v2429 = vadd.f32 %v2349, %v2428
  %v2430 = vpop.f32.mrf.mxu0
  %2431 = vdwg.mxu0
  %v2432 = vmul.f32 %v2424, 0.5
  %v2433 = vmul.f32 %v2429, 0.5
  %v2434 = vmul.f32 %v2424, 0.044715
  %v2435 = vmul.f32 %v2429, 0.044715
  %v2436 = vmul.f32 %v2434, %v2424
  %v2437 = vmul.f32 %v2435, %v2429
  %v2438 = vmul.f32 %v2436, %v2424
  %v2439 = vmul.f32 %v2437, %v2429
  %v2440 = vadd.f32 %v2424, %v2438
  %v2441 = vadd.f32 %v2429, %v2439
  %v2442 = vmul.f32 %v2440, 0.7978846
  %v2443 = vmul.f32 %v2441, 0.7978846
  %v2444 = vtanh.pop %v2442
  %v2445 = vtanh.pop %v2443
  %v2446 = vadd.f32 %v2444, 1.0
  %v2447 = vadd.f32 %v2445, 1.0
  %v2448 = vmul.f32 %v2432, %v2446
  %v2449 = vmul.f32 %v2433, %v2447
  %s2450 = scalar_lea.vmem %s17, 128
  %v2451 = vld [vmem:[%s2450] sm:$0xff]
  %v2452 = vld [vmem:[%s2450 + $0x8] sm:$0xff]
  %v2453 = vld [vmem:[%s2450 + $0x10] sm:$0xff]
  %v2454 = vld [vmem:[%s2450 + $0x18] sm:$0xff]
  %v2455 = vld [vmem:[%s2450 + $0x20] sm:$0xff]
  %v2456 = vld [vmem:[%s2450 + $0x28] sm:$0xff]
  %v2457 = vld [vmem:[%s2450 + $0x30] sm:$0xff]
  %v2458 = vld [vmem:[%s2450 + $0x38] sm:$0xff]
  %v2459 = vld [vmem:[%s2450 + $0x40] sm:$0xff]
  %v2460 = vld [vmem:[%s2450 + $0x48] sm:$0xff]
  %v2461 = vld [vmem:[%s2450 + $0x50] sm:$0xff]
  %v2462 = vld [vmem:[%s2450 + $0x58] sm:$0xff]
  %v2463 = vld [vmem:[%s2450 + $0x60] sm:$0xff]
  %v2464 = vld [vmem:[%s2450 + $0x68] sm:$0xff]
  %v2465 = vld [vmem:[%s2450 + $0x70] sm:$0xff]
  %v2466 = vld [vmem:[%s2450 + $0x78] sm:$0xff]
  %s2467 = scalar_lea.vmem %s18, 1
  %v2468 = vld [vmem:[%s2467] sm:$0x1]
  %v2470 = vlaneseq
  %v2471 = vshrl.u32 %v2470, 7
  %v2472 = vsub.s32 0, %v2471
  %v2473 = vrot.slane %v2468, %v2472
  %2475 = vmatprep.subr.mxu0 0.0
  %2476 = vmatpush1.msra.mxu0 %v2466
  %2477 = vmatprep.subr.mxu0 0.0
  %2478 = vmatpush1.msra.mxu0 %v2465
  %2479 = vmatprep.subr.mxu0 0.0
  %2480 = vmatpush1.msra.mxu0 %v2464
  %2481 = vmatprep.subr.mxu0 0.0
  %2482 = vmatpush1.msra.mxu0 %v2463
  %2483 = vmatprep.subr.mxu0 0.0
  %2484 = vmatpush1.msra.mxu0 %v2462
  %2485 = vmatprep.subr.mxu0 0.0
  %2486 = vmatpush1.msra.mxu0 %v2461
  %2487 = vmatprep.subr.mxu0 0.0
  %2488 = vmatpush1.msra.mxu0 %v2460
  %2489 = vmatprep.subr.mxu0 0.0
  %2490 = vmatpush1.msra.mxu0 %v2459
  %2491 = vmatprep.subr.mxu0 0.0
  %2492 = vmatpush1.msra.mxu0 %v2458
  %2493 = vmatprep.subr.mxu0 0.0
  %2494 = vmatpush1.msra.mxu0 %v2457
  %2495 = vmatprep.subr.mxu0 0.0
  %2496 = vmatpush1.msra.mxu0 %v2456
  %2497 = vmatprep.subr.mxu0 0.0
  %2498 = vmatpush1.msra.mxu0 %v2455
  %2499 = vmatprep.subr.mxu0 0.0
  %2500 = vmatpush1.msra.mxu0 %v2454
  %2501 = vmatprep.subr.mxu0 0.0
  %2502 = vmatpush1.msra.mxu0 %v2453
  %2503 = vmatprep.subr.mxu0 0.0
  %2504 = vmatpush1.msra.mxu0 %v2452
  %2505 = vmatprep.subr.mxu0 0.0
  %2506 = vmatpush1.msra.mxu0 %v2451
  %2507 = vmatprep.subr.mxu0 0.0
  %2508 = vmatpush2.msra.mxu0 0.0
  %2509 = vmatprep.subr.mxu0 0.0
  %2510 = vmatpush2.msra.mxu0 0.0
  %2511 = vmatprep.subr.mxu0 0.0
  %2512 = vmatpush2.msra.mxu0 0.0
  %2513 = vmatprep.subr.mxu0 0.0
  %2514 = vmatpush2.msra.mxu0 0.0
  %2515 = vmatprep.subr.mxu0 0.0
  %2516 = vmatpush2.msra.mxu0 0.0
  %2517 = vmatprep.subr.mxu0 0.0
  %2518 = vmatpush2.msra.mxu0 0.0
  %2519 = vmatprep.subr.mxu0 0.0
  %2520 = vmatpush2.msra.mxu0 0.0
  %2521 = vmatprep.subr.mxu0 0.0
  %2522 = vmatpush2.msra.mxu0 0.0
  %2523 = vmatprep.subr.mxu0 0.0
  %2524 = vmatpush2.msra.mxu0 0.0
  %2525 = vmatprep.subr.mxu0 0.0
  %2526 = vmatpush2.msra.mxu0 0.0
  %2527 = vmatprep.subr.mxu0 0.0
  %2528 = vmatpush2.msra.mxu0 0.0
  %2529 = vmatprep.subr.mxu0 0.0
  %2530 = vmatpush2.msra.mxu0 0.0
  %2531 = vmatprep.subr.mxu0 0.0
  %2532 = vmatpush2.msra.mxu0 0.0
  %2533 = vmatprep.subr.mxu0 0.0
  %2534 = vmatpush2.msra.mxu0 0.0
  %2535 = vmatprep.subr.mxu0 0.0
  %2536 = vmatpush2.msra.mxu0 0.0
  %2537 = vmatprep.subr.mxu0 0.0
  %2538 = vmatpush2.msra.mxu0 0.0
  %2539 = vmatprep.mubr.f32.mxu0 0.0
  %2540 = vmatmul.mubr.f32.gmra.mxu0 %v2448
  %v2541 = vpop.f32.mrf.mxu0
  %v2542 = vadd.f32 %v2473, %v2541
  %v2543 = vpop.f32.mrf.mxu0
  %2544 = vmatprep.mubr.f32.mxu0 0.0
  %2545 = vmatmul.mubr.f32.gmra.mxu0 %v2449
  %v2546 = vpop.f32.mrf.mxu0
  %v2547 = vadd.f32 %v2473, %v2546
  %v2548 = vpop.f32.mrf.mxu0
  %2549 = vdwg.mxu0
  %v2550 = vadd.f32 %v2542, %v2290
  %v2551 = vadd.f32 %v2547, %v2291
  %v2552 = vld [vmem:[%s19] sm:$0x1]
  %v2553 = vld [vmem:[%s20] sm:$0x1]
  %v2554 = vsel %vm144, %v2550, 0.0
  %2555 = vadd.xlane.f32.xlu0 %v2554
  %v2556 = vpop.xlane.xlu0 %2555
  %v2557 = vsel %vm144, %v2551, 0.0
  %2558 = vadd.xlane.f32.xlu0 %v2557
  %v2559 = vpop.xlane.xlu0 %2558
  %v2560 = vmul.f32 %v2556, %v151
  %v2561 = vmul.f32 %v2559, %v151
  %v2562 = vsub.f32 %v2550, %v2560
  %v2563 = vsub.f32 %v2551, %v2561
  %v2564 = vmul.f32 %v2562, %v2562
  %v2565 = vmul.f32 %v2563, %v2563
  %v2566 = vsel %vm144, %v2564, 0.0
  %2567 = vadd.xlane.f32.xlu0 %v2566
  %v2568 = vpop.xlane.xlu0 %2567
  %v2569 = vsel %vm144, %v2565, 0.0
  %2570 = vadd.xlane.f32.xlu0 %v2569
  %v2571 = vpop.xlane.xlu0 %2570
  %v2572 = vmul.f32 %v2568, %v151
  %v2573 = vmul.f32 %v2571, %v151
  %v2574 = vadd.f32 %v2572, 1e-05
  %v2575 = vadd.f32 %v2573, 1e-05
  %v2576 = vrsqrt.pop %v2574
  %v2577 = vrsqrt.pop %v2575
  %v2578 = vmul.f32 %v2562, %v2576
  %v2579 = vmul.f32 %v2563, %v2577
  %v2581 = vlaneseq
  %v2582 = vshrl.u32 %v2581, 7
  %v2583 = vsub.s32 0, %v2582
  %v2584 = vrot.slane %v2552, %v2583
  %v2586 = vmul.f32 %v2578, %v2584
  %v2587 = vmul.f32 %v2579, %v2584
  %v2589 = vlaneseq
  %v2590 = vshrl.u32 %v2589, 7
  %v2591 = vsub.s32 0, %v2590
  %v2592 = vrot.slane %v2553, %v2591
  %v2594 = vadd.f32 %v2586, %v2592
  %v2595 = vadd.f32 %v2587, %v2592
  %v2596 = vld [vmem:[%s21] sm:$0xff]
  %v2597 = vld [vmem:[%s21 + $0x8] sm:$0xff]
  %v2598 = vld [vmem:[%s21 + $0x10] sm:$0xff]
  %v2599 = vld [vmem:[%s21 + $0x18] sm:$0xff]
  %v2600 = vld [vmem:[%s22] sm:$0x1]
  %v2602 = vlaneseq
  %v2603 = vshrl.u32 %v2602, 7
  %v2604 = vsub.s32 0, %v2603
  %v2605 = vrot.slane %v2600, %v2604
  %v2608 = vsel %vm144, %v2594, 0
  %v2611 = vsel %vm144, %v2595, 0
  %2613 = vmatprep.subr.mxu0 0.0
  %2614 = vmatpush1.msra.mxu0 0.0
  %2615 = vmatprep.subr.mxu0 0.0
  %2616 = vmatpush1.msra.mxu0 0.0
  %2617 = vmatprep.subr.mxu0 0.0
  %2618 = vmatpush1.msra.mxu0 0.0
  %2619 = vmatprep.subr.mxu0 0.0
  %2620 = vmatpush1.msra.mxu0 0.0
  %2621 = vmatprep.subr.mxu0 0.0
  %2622 = vmatpush1.msra.mxu0 0.0
  %2623 = vmatprep.subr.mxu0 0.0
  %2624 = vmatpush1.msra.mxu0 0.0
  %2625 = vmatprep.subr.mxu0 0.0
  %2626 = vmatpush1.msra.mxu0 0.0
  %2627 = vmatprep.subr.mxu0 0.0
  %2628 = vmatpush1.msra.mxu0 0.0
  %2629 = vmatprep.subr.mxu0 0.0
  %2630 = vmatpush1.msra.mxu0 0.0
  %2631 = vmatprep.subr.mxu0 0.0
  %2632 = vmatpush1.msra.mxu0 0.0
  %2633 = vmatprep.subr.mxu0 0.0
  %2634 = vmatpush1.msra.mxu0 0.0
  %2635 = vmatprep.subr.mxu0 0.0
  %2636 = vmatpush1.msra.mxu0 0.0
  %2637 = vmatprep.subr.mxu0 0.0
  %2638 = vmatpush1.msra.mxu0 %v2599
  %2639 = vmatprep.subr.mxu0 0.0
  %2640 = vmatpush1.msra.mxu0 %v2598
  %2641 = vmatprep.subr.mxu0 0.0
  %2642 = vmatpush1.msra.mxu0 %v2597
  %2643 = vmatprep.subr.mxu0 0.0
  %2644 = vmatpush1.msra.mxu0 %v2596
  %2645 = vmatprep.subr.mxu0 0.0
  %2646 = vmatpush2.msra.mxu0 0.0
  %2647 = vmatprep.subr.mxu0 0.0
  %2648 = vmatpush2.msra.mxu0 0.0
  %2649 = vmatprep.subr.mxu0 0.0
  %2650 = vmatpush2.msra.mxu0 0.0
  %2651 = vmatprep.subr.mxu0 0.0
  %2652 = vmatpush2.msra.mxu0 0.0
  %2653 = vmatprep.subr.mxu0 0.0
  %2654 = vmatpush2.msra.mxu0 0.0
  %2655 = vmatprep.subr.mxu0 0.0
  %2656 = vmatpush2.msra.mxu0 0.0
  %2657 = vmatprep.subr.mxu0 0.0
  %2658 = vmatpush2.msra.mxu0 0.0
  %2659 = vmatprep.subr.mxu0 0.0
  %2660 = vmatpush2.msra.mxu0 0.0
  %2661 = vmatprep.subr.mxu0 0.0
  %2662 = vmatpush2.msra.mxu0 0.0
  %2663 = vmatprep.subr.mxu0 0.0
  %2664 = vmatpush2.msra.mxu0 0.0
  %2665 = vmatprep.subr.mxu0 0.0
  %2666 = vmatpush2.msra.mxu0 0.0
  %2667 = vmatprep.subr.mxu0 0.0
  %2668 = vmatpush2.msra.mxu0 0.0
  %2669 = vmatprep.subr.mxu0 0.0
  %2670 = vmatpush2.msra.mxu0 0.0
  %2671 = vmatprep.subr.mxu0 0.0
  %2672 = vmatpush2.msra.mxu0 0.0
  %2673 = vmatprep.subr.mxu0 0.0
  %2674 = vmatpush2.msra.mxu0 0.0
  %2675 = vmatprep.subr.mxu0 0.0
  %2676 = vmatpush2.msra.mxu0 0.0
  %2677 = vmatprep.mubr.f32.mxu0 0.0
  %2678 = vmatmul.mubr.f32.gmra.mxu0 %v2608
  %v2679 = vpop.f32.mrf.mxu0
  %v2680 = vadd.f32 %v2605, %v2679
  %v2681 = vpop.f32.mrf.mxu0
  %2682 = vmatprep.mubr.f32.mxu0 0.0
  %2683 = vmatmul.mubr.f32.gmra.mxu0 %v2611
  %v2684 = vpop.f32.mrf.mxu0
  %v2685 = vadd.f32 %v2605, %v2684
  %v2686 = vpop.f32.mrf.mxu0
  %2687 = vdwg.mxu0
  %2688 = vst [vmem:[%s23] sm:$0xff] %v2680
  %2689 = vst [vmem:[%s23 + $0x8] sm:$0xff] %v2685
  %2690 = vmax.xlane.f32.xlu0 %v2680
  %v2691 = vpop.xlane.xlu0 %2690
  %2692 = vmax.xlane.f32.xlu0 %v2685
  %v2693 = vpop.xlane.xlu0 %2692
  %v2694 = vsub.f32 %v2680, %v2691
  %v2695 = vsub.f32 %v2685, %v2693
  %v2696 = vmul.f32 %v2694, 1.442695
  %v2697 = vpow.pop %v2696
  %v2698 = vmul.f32 %v2695, 1.442695
  %v2699 = vpow.pop %v2698
  %2700 = vadd.xlane.f32.xlu0 %v2697
  %v2701 = vpop.xlane.xlu0 %2700
  %2702 = vadd.xlane.f32.xlu0 %v2699
  %v2703 = vpop.xlane.xlu0 %2702
  %v2704 = vrcp.pop %v2701
  %v2705 = vmul.f32 %v2697, %v2704
  %v2706 = vrcp.pop %v2703
  %v2707 = vmul.f32 %v2699, %v2706
  %2708 = vst [vmem:[%s24] sm:$0xff] %v2705
  %2709 = vst [vmem:[%s24 + $0x8] sm:$0xff] %v2707
  // Predicated region
  $region94: #{simple_transformer_forward.1} parent=0 // pred_check
    _
  $region95: #{simple_transformer_forward.1} parent=0 // pred_check_branch
    %2711 = sbr.rel (0) target = $region97
  $region96: #{simple_transformer_forward.1} parent=0 // pred_region
    _
  $region97: #{simple_transformer_forward.1} parent=0 // pred_fallthru
    _
  // Predicated region
  $region98: #{simple_transformer_forward.1} parent=0 // pred_check
    _
  $region99: #{simple_transformer_forward.1} parent=0 // pred_check_branch
    %2713 = sbr.rel (0) target = $region101
  $region100: #{simple_transformer_forward.1} parent=0 // pred_region
    _
  $region101: #{simple_transformer_forward.1} parent=0 // pred_fallthru
    _
  // Predicated region
  $region102: #{simple_transformer_forward.1} parent=0 // pred_check
    _
  $region103: #{simple_transformer_forward.1} parent=0 // pred_check_branch
    %2715 = sbr.rel (0) target = $region105
  $region104: #{simple_transformer_forward.1} parent=0 // pred_region
    _
  $region105: #{simple_transformer_forward.1} parent=0 // pred_fallthru
    _
  // Predicated region
  $region106: #{simple_transformer_forward.1} parent=0 // pred_check
    _
  $region107: #{simple_transformer_forward.1} parent=0 // pred_check_branch
    %2717 = sbr.rel (0) target = $region109
  $region108: #{simple_transformer_forward.1} parent=0 // pred_region
    _
  $region109: #{simple_transformer_forward.1} parent=0 // pred_fallthru
    _

</llo_original>
